<compile_context>
chip_gen: v7x
topology: tpu7x:2x2x1
jax: 0.10.0
libtpu: 0.0.40
codegen_flags: <defaults>
</compile_context>

<pallas_src>
import functools

import jax
import jax.numpy as jnp
from jax.experimental import pallas as pl
from jax.experimental.pallas import tpu as pltpu

DIM_X = 3
FILTER = 128
LAYER_SIZE = 8  # -> 1 input linear, (LAYER_SIZE-1) hidden linears, 1 output linear


def _round_up(x, m):
    return -(-x // m) * m


def mlp_kernel(x_ref, w0_ref, b0_ref, wh_ref, bh_ref, wl_ref, bl_ref, o_ref):
    """One row-tile of the MLP in transposed (feature-major) layout.

    x_ref : (DIM_X, TM)           f32   rows on lanes, features on sublanes
    w0_ref: (FILTER, DIM_X)       f32   b0_ref: (FILTER, 1)      f32
    wh_ref: (NH, FILTER, FILTER)  bf16  (each layer weight transposed: (out,in))
    bh_ref: (NH, FILTER, 1)       f32
    wl_ref: (FILTER, DIM_X)       f32   bl_ref: (DIM_X, 1)       f32
    o_ref : (DIM_X, TM)
    """
    xT = x_ref[...]  # (3, TM) f32

    # Input layer: Linear(dim_x, filter) + ReLU, done on the VPU (K=3 would
    # waste an MXU pass).  h[f, t] = sum_j w0[j, f] * x[t, j] + b0[f]
    h = (w0_ref[:, 0:1] * xT[0:1, :]
         + w0_ref[:, 1:2] * xT[1:2, :]
         + w0_ref[:, 2:3] * xT[2:3, :]
         + b0_ref[...])
    h = jnp.maximum(h, 0.0)  # (FILTER, TM) f32

    # Hidden layers: (layer_size-1) x (Linear(filter, filter) + ReLU).
    # bf16 MXU operands, f32 accumulation; bias/ReLU in f32.
    n_hidden = wh_ref.shape[0]
    for i in range(n_hidden):  # small static trip count -> unrolled
        h = jnp.dot(wh_ref[i], h.astype(jnp.bfloat16),
                    preferred_element_type=jnp.float32) + bh_ref[i]
        h = jnp.maximum(h, 0.0)

    # Output layer: Linear(filter, dim_x), no activation — kept off the MXU.
    # out[j, t] = sum_f wl[f, j] * h[f, t] + bl[j]   (3 VPU mults + sublane sums)
    rows = []
    for j in range(DIM_X):
        col = wl_ref[:, j:j + 1]                                   # (FILTER, 1)
        rows.append(jnp.sum(col * h, axis=0, keepdims=True))       # (1, TM)
    out = jnp.concatenate(rows, axis=0) + bl_ref[...]              # (DIM_X, TM)
    o_ref[...] = out.astype(o_ref.dtype)


@functools.partial(jax.jit, static_argnames=("tile_m",))
def mlp_forward(x, params, *, tile_m=1024):
    """x: [B, N, DIM_X] -> [B, N, DIM_X]."""
    w0, b0, wh, bh, wl, bl = params
    B, N, D = x.shape
    assert D == DIM_X
    M = B * N
    n_hidden = wh.shape[0]

    # ---- tile selection (all shape-derived Python ints; static under jit) ----
    tile = _round_up(max(int(tile_m), 256), 256)
    tile = min(tile, max(256, _round_up(M, 256)))    # don't pad tiny M to a huge tile
    steps = pl.cdiv(M, tile)
    if steps == 1 and M > 256:
        # v7x dual TensorCore: prefer >= 2 parallel grid steps when there is work.
        tile = _round_up(pl.cdiv(M, 2), 256)
        steps = pl.cdiv(M, tile)
    M_pad = steps * tile

    # ---- host-side layout plumbing (lane-dense slabs, transposed weights) ----
    xT = x.reshape(M, D).T.astype(jnp.float32)                 # (DIM_X, M)
    if M_pad != M:
        xT = jnp.pad(xT, ((0, 0), (0, M_pad - M)))             # zero pad -> finite garbage rows

    w0T = w0.astype(jnp.float32).T                             # (FILTER, DIM_X)
    b0c = b0.astype(jnp.float32).reshape(FILTER, 1)            # (FILTER, 1)
    whT = jnp.transpose(wh, (0, 2, 1)).astype(jnp.bfloat16)    # (NH, FILTER, FILTER), (out,in)
    bhc = bh.astype(jnp.float32).reshape(n_hidden, FILTER, 1)  # (NH, FILTER, 1)
    wlf = wl.astype(jnp.float32)                               # (FILTER, DIM_X)
    blc = bl.astype(jnp.float32).reshape(DIM_X, 1)             # (DIM_X, 1)

    flops = 2 * M_pad * (DIM_X * FILTER + n_hidden * FILTER * FILTER + FILTER * DIM_X)
    bytes_accessed = (
        M_pad * DIM_X * 4 * 2                        # x in + out
        + FILTER * DIM_X * 4 + FILTER * 4            # w0, b0
        + n_hidden * FILTER * FILTER * 2             # wh (bf16)
        + n_hidden * FILTER * 4                      # bh
        + FILTER * DIM_X * 4 + DIM_X * 4             # wl, bl
    )

    outT = pl.pallas_call(
        mlp_kernel,
        out_shape=jax.ShapeDtypeStruct((DIM_X, M_pad), x.dtype),
        grid_spec=pltpu.PrefetchScalarGridSpec(
            num_scalar_prefetch=0,
            grid=(steps,),
            in_specs=[
                # activations: lane-dense, tiled over rows (lane axis)
                pl.BlockSpec((DIM_X, tile), lambda i: (0, i)),
                # weights/biases: full arrays, same block every grid step
                pl.BlockSpec((FILTER, DIM_X), lambda i: (0, 0)),
                pl.BlockSpec((FILTER, 1), lambda i: (0, 0)),
                pl.BlockSpec((n_hidden, FILTER, FILTER), lambda i: (0, 0, 0)),
                pl.BlockSpec((n_hidden, FILTER, 1), lambda i: (0, 0, 0)),
                pl.BlockSpec((FILTER, DIM_X), lambda i: (0, 0)),
                pl.BlockSpec((DIM_X, 1), lambda i: (0, 0)),
            ],
            out_specs=pl.BlockSpec((DIM_X, tile), lambda i: (0, i)),
        ),
        compiler_params=pltpu.CompilerParams(
            dimension_semantics=("parallel",),
            vmem_limit_bytes=32 * 1024 * 1024,
        ),
        cost_estimate=pl.CostEstimate(
            flops=flops, transcendentals=0, bytes_accessed=bytes_accessed),
    )(xT, w0T, b0c, whT, bhc, wlf, blc)

    return outT[:, :M].T.reshape(B, N, DIM_X)


def init_params(key):
    """Deterministic synthetic parameters matching the module's shapes (math layout: (in, out))."""
    ks = jax.random.split(key, 6)
    scale = 0.1
    w0 = scale * jax.random.normal(ks[0], (DIM_X, FILTER), jnp.float32)
    b0 = scale * jax.random.normal(ks[1], (FILTER,), jnp.float32)
    n_hidden = LAYER_SIZE - 1
    wh = scale * jax.random.normal(ks[2], (n_hidden, FILTER, FILTER), jnp.float32)
    bh = scale * jax.random.normal(ks[3], (n_hidden, FILTER), jnp.float32)
    wl = scale * jax.random.normal(ks[4], (FILTER, DIM_X), jnp.float32)
    bl = scale * jax.random.normal(ks[5], (DIM_X,), jnp.float32)
    return (w0, b0, wh, bh, wl, bl)


def mlp_reference(x, params):
    """Pure-JAX f32 reference matching the PyTorch forward."""
    w0, b0, wh, bh, wl, bl = params
    h = jax.nn.relu(x @ w0 + b0)
    for i in range(wh.shape[0]):
        h = jax.nn.relu(h @ wh[i] + bh[i])
    return h @ wl + bl


if __name__ == "__main__":
    key = jax.random.PRNGKey(0)
    k_x, k_p = jax.random.split(key)

    # M = B*N = 1024 -> tile 512, grid of 2 parallel steps (keeps both v7x TCs busy).
    B, N = 2, 512
    x = jax.random.normal(k_x, (B, N, DIM_X), jnp.float32)
    params = init_params(k_p)

    out = mlp_forward(x, params, tile_m=1024)
    out = jax.block_until_ready(out)

    ref = mlp_reference(x, params)
    assert out.shape == (B, N, DIM_X)
    # bf16 matmul operands (f32 accumulate) through 7 hidden layers -> loose tolerance.
    assert jnp.allclose(out, ref, atol=3e-2, rtol=3e-2), "mismatch vs reference"

    print("KERNEL_OK")
</pallas_src>

<mosaic_0001>
module attributes {stable_mosaic.version = 11 : i64} {
  func.func @mlp_kernel(%arg0: i32, %arg1: memref<3x512xf32, #tpu.memory_space<vmem>>, %arg2: memref<128x3xf32, #tpu.memory_space<vmem>>, %arg3: memref<128x1xf32, #tpu.memory_space<vmem>>, %arg4: memref<7x128x128xbf16, #tpu.memory_space<vmem>>, %arg5: memref<7x128x1xf32, #tpu.memory_space<vmem>>, %arg6: memref<128x3xf32, #tpu.memory_space<vmem>>, %arg7: memref<3x1xf32, #tpu.memory_space<vmem>>, %arg8: memref<3x512xf32, #tpu.memory_space<vmem>>) attributes {dimension_semantics = [#tpu.dimension_semantics<parallel>], iteration_bounds = array<i64: 2>, scalar_prefetch = 0 : i64, scratch_operands = 0 : i64, tpu.core_type = #tpu.core_type<tc>, window_params = [{transform_indices = @transform_0, window_bounds = array<i64: 3, 512>}, {pipeline_mode = #tpu.pipeline_mode<synchronous>, transform_indices = @transform_1, window_bounds = array<i64: 128, 3>}, {pipeline_mode = #tpu.pipeline_mode<synchronous>, transform_indices = @transform_2, window_bounds = array<i64: 128, 1>}, {pipeline_mode = #tpu.pipeline_mode<synchronous>, transform_indices = @transform_3, window_bounds = array<i64: 7, 128, 128>}, {pipeline_mode = #tpu.pipeline_mode<synchronous>, transform_indices = @transform_4, window_bounds = array<i64: 7, 128, 1>}, {pipeline_mode = #tpu.pipeline_mode<synchronous>, transform_indices = @transform_5, window_bounds = array<i64: 128, 3>}, {pipeline_mode = #tpu.pipeline_mode<synchronous>, transform_indices = @transform_6, window_bounds = array<i64: 3, 1>}, {transform_indices = @transform_7, window_bounds = array<i64: 3, 512>}]} {
    %c0 = arith.constant 0 : index
    %c0_0 = arith.constant 0 : index
    %0 = vector.load %arg1[%c0, %c0_0] : memref<3x512xf32, #tpu.memory_space<vmem>>, vector<3x512xf32>
    %c0_1 = arith.constant 0 : index
    %c0_2 = arith.constant 0 : index
    %1 = vector.load %arg2[%c0_1, %c0_2] : memref<128x3xf32, #tpu.memory_space<vmem>>, vector<128x1xf32>
    %2 = vector.extract_strided_slice %0 {offsets = [0, 0], sizes = [1, 512], strides = [1, 1]} : vector<3x512xf32> to vector<1x512xf32>
    %3 = vector.broadcast %1 : vector<128x1xf32> to vector<128x512xf32>
    %4 = vector.broadcast %2 : vector<1x512xf32> to vector<128x512xf32>
    %5 = arith.mulf %3, %4 : vector<128x512xf32>
    %c0_3 = arith.constant 0 : index
    %c1 = arith.constant 1 : index
    %6 = vector.load %arg2[%c0_3, %c1] : memref<128x3xf32, #tpu.memory_space<vmem>>, vector<128x1xf32>
    %7 = vector.extract_strided_slice %0 {offsets = [1, 0], sizes = [1, 512], strides = [1, 1]} : vector<3x512xf32> to vector<1x512xf32>
    %8 = vector.broadcast %6 : vector<128x1xf32> to vector<128x512xf32>
    %9 = vector.broadcast %7 : vector<1x512xf32> to vector<128x512xf32>
    %10 = arith.mulf %8, %9 : vector<128x512xf32>
    %11 = arith.addf %5, %10 : vector<128x512xf32>
    %c0_4 = arith.constant 0 : index
    %c2 = arith.constant 2 : index
    %12 = vector.load %arg2[%c0_4, %c2] : memref<128x3xf32, #tpu.memory_space<vmem>>, vector<128x1xf32>
    %13 = vector.extract_strided_slice %0 {offsets = [2, 0], sizes = [1, 512], strides = [1, 1]} : vector<3x512xf32> to vector<1x512xf32>
    %14 = vector.broadcast %12 : vector<128x1xf32> to vector<128x512xf32>
    %15 = vector.broadcast %13 : vector<1x512xf32> to vector<128x512xf32>
    %16 = arith.mulf %14, %15 : vector<128x512xf32>
    %17 = arith.addf %11, %16 : vector<128x512xf32>
    %c0_5 = arith.constant 0 : index
    %c0_6 = arith.constant 0 : index
    %18 = vector.load %arg3[%c0_5, %c0_6] : memref<128x1xf32, #tpu.memory_space<vmem>>, vector<128x1xf32>
    %19 = vector.broadcast %18 : vector<128x1xf32> to vector<128x512xf32>
    %20 = arith.addf %17, %19 : vector<128x512xf32>
    %cst = arith.constant 0.000000e+00 : f32
    %21 = vector.broadcast %cst : f32 to vector<128x512xf32>
    %22 = arith.maximumf %20, %21 : vector<128x512xf32>
    %c0_7 = arith.constant 0 : index
    %c0_8 = arith.constant 0 : index
    %c0_9 = arith.constant 0 : index
    %23 = vector.load %arg4[%c0_7, %c0_8, %c0_9] : memref<7x128x128xbf16, #tpu.memory_space<vmem>>, vector<1x128x128xbf16>
    %24 = vector.shape_cast %23 : vector<1x128x128xbf16> to vector<128x128xbf16>
    %25 = arith.truncf %22 : vector<128x512xf32> to vector<128x512xbf16>
    %cst_10 = arith.constant dense<0.000000e+00> : vector<128x512xf32>
    %26 = tpu.matmul %24, %25, %cst_10 {dimension_numbers = #tpu.dot_dimension_numbers<[1], [0], [0], [1], [0, 0, 1, 1], [], []>} : vector<128x128xbf16>, vector<128x512xbf16>, vector<128x512xf32> -> vector<128x512xf32>
    %c0_11 = arith.constant 0 : index
    %c0_12 = arith.constant 0 : index
    %c0_13 = arith.constant 0 : index
    %27 = vector.load %arg5[%c0_11, %c0_12, %c0_13] : memref<7x128x1xf32, #tpu.memory_space<vmem>>, vector<1x128x1xf32>
    %28 = vector.shape_cast %27 : vector<1x128x1xf32> to vector<128x1xf32>
    %29 = vector.broadcast %28 : vector<128x1xf32> to vector<128x512xf32>
    %30 = arith.addf %26, %29 : vector<128x512xf32>
    %cst_14 = arith.constant 0.000000e+00 : f32
    %31 = vector.broadcast %cst_14 : f32 to vector<128x512xf32>
    %32 = arith.maximumf %30, %31 : vector<128x512xf32>
    %c1_15 = arith.constant 1 : index
    %c0_16 = arith.constant 0 : index
    %c0_17 = arith.constant 0 : index
    %33 = vector.load %arg4[%c1_15, %c0_16, %c0_17] : memref<7x128x128xbf16, #tpu.memory_space<vmem>>, vector<1x128x128xbf16>
    %34 = vector.shape_cast %33 : vector<1x128x128xbf16> to vector<128x128xbf16>
    %35 = arith.truncf %32 : vector<128x512xf32> to vector<128x512xbf16>
    %cst_18 = arith.constant dense<0.000000e+00> : vector<128x512xf32>
    %36 = tpu.matmul %34, %35, %cst_18 {dimension_numbers = #tpu.dot_dimension_numbers<[1], [0], [0], [1], [0, 0, 1, 1], [], []>} : vector<128x128xbf16>, vector<128x512xbf16>, vector<128x512xf32> -> vector<128x512xf32>
    %c1_19 = arith.constant 1 : index
    %c0_20 = arith.constant 0 : index
    %c0_21 = arith.constant 0 : index
    %37 = vector.load %arg5[%c1_19, %c0_20, %c0_21] : memref<7x128x1xf32, #tpu.memory_space<vmem>>, vector<1x128x1xf32>
    %38 = vector.shape_cast %37 : vector<1x128x1xf32> to vector<128x1xf32>
    %39 = vector.broadcast %38 : vector<128x1xf32> to vector<128x512xf32>
    %40 = arith.addf %36, %39 : vector<128x512xf32>
    %cst_22 = arith.constant 0.000000e+00 : f32
    %41 = vector.broadcast %cst_22 : f32 to vector<128x512xf32>
    %42 = arith.maximumf %40, %41 : vector<128x512xf32>
    %c2_23 = arith.constant 2 : index
    %c0_24 = arith.constant 0 : index
    %c0_25 = arith.constant 0 : index
    %43 = vector.load %arg4[%c2_23, %c0_24, %c0_25] : memref<7x128x128xbf16, #tpu.memory_space<vmem>>, vector<1x128x128xbf16>
    %44 = vector.shape_cast %43 : vector<1x128x128xbf16> to vector<128x128xbf16>
    %45 = arith.truncf %42 : vector<128x512xf32> to vector<128x512xbf16>
    %cst_26 = arith.constant dense<0.000000e+00> : vector<128x512xf32>
    %46 = tpu.matmul %44, %45, %cst_26 {dimension_numbers = #tpu.dot_dimension_numbers<[1], [0], [0], [1], [0, 0, 1, 1], [], []>} : vector<128x128xbf16>, vector<128x512xbf16>, vector<128x512xf32> -> vector<128x512xf32>
    %c2_27 = arith.constant 2 : index
    %c0_28 = arith.constant 0 : index
    %c0_29 = arith.constant 0 : index
    %47 = vector.load %arg5[%c2_27, %c0_28, %c0_29] : memref<7x128x1xf32, #tpu.memory_space<vmem>>, vector<1x128x1xf32>
    %48 = vector.shape_cast %47 : vector<1x128x1xf32> to vector<128x1xf32>
    %49 = vector.broadcast %48 : vector<128x1xf32> to vector<128x512xf32>
    %50 = arith.addf %46, %49 : vector<128x512xf32>
    %cst_30 = arith.constant 0.000000e+00 : f32
    %51 = vector.broadcast %cst_30 : f32 to vector<128x512xf32>
    %52 = arith.maximumf %50, %51 : vector<128x512xf32>
    %c3 = arith.constant 3 : index
    %c0_31 = arith.constant 0 : index
    %c0_32 = arith.constant 0 : index
    %53 = vector.load %arg4[%c3, %c0_31, %c0_32] : memref<7x128x128xbf16, #tpu.memory_space<vmem>>, vector<1x128x128xbf16>
    %54 = vector.shape_cast %53 : vector<1x128x128xbf16> to vector<128x128xbf16>
    %55 = arith.truncf %52 : vector<128x512xf32> to vector<128x512xbf16>
    %cst_33 = arith.constant dense<0.000000e+00> : vector<128x512xf32>
    %56 = tpu.matmul %54, %55, %cst_33 {dimension_numbers = #tpu.dot_dimension_numbers<[1], [0], [0], [1], [0, 0, 1, 1], [], []>} : vector<128x128xbf16>, vector<128x512xbf16>, vector<128x512xf32> -> vector<128x512xf32>
    %c3_34 = arith.constant 3 : index
    %c0_35 = arith.constant 0 : index
    %c0_36 = arith.constant 0 : index
    %57 = vector.load %arg5[%c3_34, %c0_35, %c0_36] : memref<7x128x1xf32, #tpu.memory_space<vmem>>, vector<1x128x1xf32>
    %58 = vector.shape_cast %57 : vector<1x128x1xf32> to vector<128x1xf32>
    %59 = vector.broadcast %58 : vector<128x1xf32> to vector<128x512xf32>
    %60 = arith.addf %56, %59 : vector<128x512xf32>
    %cst_37 = arith.constant 0.000000e+00 : f32
    %61 = vector.broadcast %cst_37 : f32 to vector<128x512xf32>
    %62 = arith.maximumf %60, %61 : vector<128x512xf32>
    %c4 = arith.constant 4 : index
    %c0_38 = arith.constant 0 : index
    %c0_39 = arith.constant 0 : index
    %63 = vector.load %arg4[%c4, %c0_38, %c0_39] : memref<7x128x128xbf16, #tpu.memory_space<vmem>>, vector<1x128x128xbf16>
    %64 = vector.shape_cast %63 : vector<1x128x128xbf16> to vector<128x128xbf16>
    %65 = arith.truncf %62 : vector<128x512xf32> to vector<128x512xbf16>
    %cst_40 = arith.constant dense<0.000000e+00> : vector<128x512xf32>
    %66 = tpu.matmul %64, %65, %cst_40 {dimension_numbers = #tpu.dot_dimension_numbers<[1], [0], [0], [1], [0, 0, 1, 1], [], []>} : vector<128x128xbf16>, vector<128x512xbf16>, vector<128x512xf32> -> vector<128x512xf32>
    %c4_41 = arith.constant 4 : index
    %c0_42 = arith.constant 0 : index
    %c0_43 = arith.constant 0 : index
    %67 = vector.load %arg5[%c4_41, %c0_42, %c0_43] : memref<7x128x1xf32, #tpu.memory_space<vmem>>, vector<1x128x1xf32>
    %68 = vector.shape_cast %67 : vector<1x128x1xf32> to vector<128x1xf32>
    %69 = vector.broadcast %68 : vector<128x1xf32> to vector<128x512xf32>
    %70 = arith.addf %66, %69 : vector<128x512xf32>
    %cst_44 = arith.constant 0.000000e+00 : f32
    %71 = vector.broadcast %cst_44 : f32 to vector<128x512xf32>
    %72 = arith.maximumf %70, %71 : vector<128x512xf32>
    %c5 = arith.constant 5 : index
    %c0_45 = arith.constant 0 : index
    %c0_46 = arith.constant 0 : index
    %73 = vector.load %arg4[%c5, %c0_45, %c0_46] : memref<7x128x128xbf16, #tpu.memory_space<vmem>>, vector<1x128x128xbf16>
    %74 = vector.shape_cast %73 : vector<1x128x128xbf16> to vector<128x128xbf16>
    %75 = arith.truncf %72 : vector<128x512xf32> to vector<128x512xbf16>
    %cst_47 = arith.constant dense<0.000000e+00> : vector<128x512xf32>
    %76 = tpu.matmul %74, %75, %cst_47 {dimension_numbers = #tpu.dot_dimension_numbers<[1], [0], [0], [1], [0, 0, 1, 1], [], []>} : vector<128x128xbf16>, vector<128x512xbf16>, vector<128x512xf32> -> vector<128x512xf32>
    %c5_48 = arith.constant 5 : index
    %c0_49 = arith.constant 0 : index
    %c0_50 = arith.constant 0 : index
    %77 = vector.load %arg5[%c5_48, %c0_49, %c0_50] : memref<7x128x1xf32, #tpu.memory_space<vmem>>, vector<1x128x1xf32>
    %78 = vector.shape_cast %77 : vector<1x128x1xf32> to vector<128x1xf32>
    %79 = vector.broadcast %78 : vector<128x1xf32> to vector<128x512xf32>
    %80 = arith.addf %76, %79 : vector<128x512xf32>
    %cst_51 = arith.constant 0.000000e+00 : f32
    %81 = vector.broadcast %cst_51 : f32 to vector<128x512xf32>
    %82 = arith.maximumf %80, %81 : vector<128x512xf32>
    %c6 = arith.constant 6 : index
    %c0_52 = arith.constant 0 : index
    %c0_53 = arith.constant 0 : index
    %83 = vector.load %arg4[%c6, %c0_52, %c0_53] : memref<7x128x128xbf16, #tpu.memory_space<vmem>>, vector<1x128x128xbf16>
    %84 = vector.shape_cast %83 : vector<1x128x128xbf16> to vector<128x128xbf16>
    %85 = arith.truncf %82 : vector<128x512xf32> to vector<128x512xbf16>
    %cst_54 = arith.constant dense<0.000000e+00> : vector<128x512xf32>
    %86 = tpu.matmul %84, %85, %cst_54 {dimension_numbers = #tpu.dot_dimension_numbers<[1], [0], [0], [1], [0, 0, 1, 1], [], []>} : vector<128x128xbf16>, vector<128x512xbf16>, vector<128x512xf32> -> vector<128x512xf32>
    %c6_55 = arith.constant 6 : index
    %c0_56 = arith.constant 0 : index
    %c0_57 = arith.constant 0 : index
    %87 = vector.load %arg5[%c6_55, %c0_56, %c0_57] : memref<7x128x1xf32, #tpu.memory_space<vmem>>, vector<1x128x1xf32>
    %88 = vector.shape_cast %87 : vector<1x128x1xf32> to vector<128x1xf32>
    %89 = vector.broadcast %88 : vector<128x1xf32> to vector<128x512xf32>
    %90 = arith.addf %86, %89 : vector<128x512xf32>
    %cst_58 = arith.constant 0.000000e+00 : f32
    %91 = vector.broadcast %cst_58 : f32 to vector<128x512xf32>
    %92 = arith.maximumf %90, %91 : vector<128x512xf32>
    %c0_59 = arith.constant 0 : index
    %c0_60 = arith.constant 0 : index
    %93 = vector.load %arg6[%c0_59, %c0_60] : memref<128x3xf32, #tpu.memory_space<vmem>>, vector<128x1xf32>
    %94 = vector.broadcast %93 : vector<128x1xf32> to vector<128x512xf32>
    %95 = arith.mulf %94, %92 : vector<128x512xf32>
    %cst_61 = arith.constant dense<0.000000e+00> : vector<512xf32>
    %96 = vector.multi_reduction <add>, %95, %cst_61 [0] : vector<128x512xf32> to vector<512xf32>
    %97 = vector.shape_cast %96 : vector<512xf32> to vector<1x512xf32>
    %c0_62 = arith.constant 0 : index
    %c1_63 = arith.constant 1 : index
    %98 = vector.load %arg6[%c0_62, %c1_63] : memref<128x3xf32, #tpu.memory_space<vmem>>, vector<128x1xf32>
    %99 = vector.broadcast %98 : vector<128x1xf32> to vector<128x512xf32>
    %100 = arith.mulf %99, %92 : vector<128x512xf32>
    %cst_64 = arith.constant dense<0.000000e+00> : vector<512xf32>
    %101 = vector.multi_reduction <add>, %100, %cst_64 [0] : vector<128x512xf32> to vector<512xf32>
    %102 = vector.shape_cast %101 : vector<512xf32> to vector<1x512xf32>
    %c0_65 = arith.constant 0 : index
    %c2_66 = arith.constant 2 : index
    %103 = vector.load %arg6[%c0_65, %c2_66] : memref<128x3xf32, #tpu.memory_space<vmem>>, vector<128x1xf32>
    %104 = vector.broadcast %103 : vector<128x1xf32> to vector<128x512xf32>
    %105 = arith.mulf %104, %92 : vector<128x512xf32>
    %cst_67 = arith.constant dense<0.000000e+00> : vector<512xf32>
    %106 = vector.multi_reduction <add>, %105, %cst_67 [0] : vector<128x512xf32> to vector<512xf32>
    %107 = vector.shape_cast %106 : vector<512xf32> to vector<1x512xf32>
    %108 = tpu.concatenate %97, %102, %107 in 0 : vector<1x512xf32>, vector<1x512xf32>, vector<1x512xf32> -> vector<3x512xf32>
    %c0_68 = arith.constant 0 : index
    %c0_69 = arith.constant 0 : index
    %109 = vector.load %arg7[%c0_68, %c0_69] : memref<3x1xf32, #tpu.memory_space<vmem>>, vector<3x1xf32>
    %110 = vector.broadcast %109 : vector<3x1xf32> to vector<3x512xf32>
    %111 = arith.addf %108, %110 : vector<3x512xf32>
    %c0_70 = arith.constant 0 : index
    %c0_71 = arith.constant 0 : index
    %112 = vector.load %arg8[%c0_70, %c0_71] : memref<3x512xf32, #tpu.memory_space<vmem>>, vector<3x512xf32>
    tpu.vector_store %arg8[%c0_70, %c0_71], %111 {strides = array<i32>} : memref<3x512xf32, #tpu.memory_space<vmem>>, vector<3x512xf32>,
    return
  }
  func.func @transform_0(%arg0: i32) -> (i32, i32) {
    %c0_i32 = arith.constant 0 : i32
    %c0_i32_0 = arith.constant 0 : i32
    return %c0_i32, %arg0 : i32, i32
  }
  func.func @transform_1(%arg0: i32) -> (i32, i32) {
    %c0_i32 = arith.constant 0 : i32
    %c0_i32_0 = arith.constant 0 : i32
    %c0_i32_1 = arith.constant 0 : i32
    return %c0_i32, %c0_i32_0 : i32, i32
  }
  func.func @transform_2(%arg0: i32) -> (i32, i32) {
    %c0_i32 = arith.constant 0 : i32
    %c0_i32_0 = arith.constant 0 : i32
    %c0_i32_1 = arith.constant 0 : i32
    return %c0_i32, %c0_i32_0 : i32, i32
  }
  func.func @transform_3(%arg0: i32) -> (i32, i32, i32) {
    %c0_i32 = arith.constant 0 : i32
    %c0_i32_0 = arith.constant 0 : i32
    %c0_i32_1 = arith.constant 0 : i32
    %c0_i32_2 = arith.constant 0 : i32
    return %c0_i32, %c0_i32_0, %c0_i32_1 : i32, i32, i32
  }
  func.func @transform_4(%arg0: i32) -> (i32, i32, i32) {
    %c0_i32 = arith.constant 0 : i32
    %c0_i32_0 = arith.constant 0 : i32
    %c0_i32_1 = arith.constant 0 : i32
    %c0_i32_2 = arith.constant 0 : i32
    return %c0_i32, %c0_i32_0, %c0_i32_1 : i32, i32, i32
  }
  func.func @transform_5(%arg0: i32) -> (i32, i32) {
    %c0_i32 = arith.constant 0 : i32
    %c0_i32_0 = arith.constant 0 : i32
    %c0_i32_1 = arith.constant 0 : i32
    return %c0_i32, %c0_i32_0 : i32, i32
  }
  func.func @transform_6(%arg0: i32) -> (i32, i32) {
    %c0_i32 = arith.constant 0 : i32
    %c0_i32_0 = arith.constant 0 : i32
    %c0_i32_1 = arith.constant 0 : i32
    return %c0_i32, %c0_i32_0 : i32, i32
  }
  func.func @transform_7(%arg0: i32) -> (i32, i32) {
    %c0_i32 = arith.constant 0 : i32
    %c0_i32_0 = arith.constant 0 : i32
    return %c0_i32, %arg0 : i32, i32
  }
}

</mosaic_0001>

<llo_original>
// kernel: mlp_forward.1
$region0: #{mlp_forward.1}
  #allocation0 [shape = 'u32[]', space=smem, size = 0x4, offset = 0x4, fixed_abs, tag = 'smem constant byte address 0x4 - core index']
  #allocation1 [shape = 'u32[144,128]{1,0:T(1,128)}', space=vmem, size = 0x12000, scoped, tag = 'internal scratch']
  %s0 = inlined_call_operand.vmem [shape: f32[3,1024], index: 0, kind: input, shape index: {}]
  %s1 = inlined_call_operand.vmem [shape: f32[128,3], index: 1, kind: input, shape index: {}]
  %s2 = inlined_call_operand.vmem [shape: f32[128,1], index: 2, kind: input, shape index: {}]
  %s3 = inlined_call_operand.vmem [shape: bf16[7,128,128], index: 3, kind: input, shape index: {}]
  %s4 = inlined_call_operand.vmem [shape: f32[7,128,1], index: 4, kind: input, shape index: {}]
  %s5 = inlined_call_operand.vmem [shape: f32[128,3], index: 5, kind: input, shape index: {}]
  %s6 = inlined_call_operand.vmem [shape: f32[3,1], index: 6, kind: input, shape index: {}]
  %s7 = inlined_call_operand.vmem [shape: f32[3,1024], index: 7, kind: output, shape index: {}]
  %s8 = sld [smem:[#allocation0]]
  $region61: #{mlp_forward.1} parent=0
    _
  %s10 = ssub.s32 1, %s8
  %s11 = scalar_select 0, %s10, %s8
  loop: start=0, step=1, limit=4
  $region2: #{mlp_forward.1} parent=0 // loop_pre_header
    _
  $region3: #{mlp_forward.1} parent=0 // loop_header
    %s13 = sphi 0, %s17
    %p14 = scmp.ge.s32.totalorder %s13, 4
    %s23 = sphi 0, %s25
    %s26 = sphi 0, %s23
    %s27 = sphi 0, %s26
    %s43 = sphi 0, %s27
    %s47 = sphi 0, %s47
    %s49 = sphi 0, %s47
    %s50 = sphi 0, %s49
    %s64 = sphi 0, %s50
    %s68 = sphi 0, %s68
    %s70 = sphi 0, %s68
    %s71 = sphi 0, %s70
    %s85 = sphi 0, %s71
    %s89 = sphi 0, %s89
    %s91 = sphi 0, %s89
    %s92 = sphi 0, %s91
    %s106 = sphi 0, %s92
    %s110 = sphi 0, %s110
    %s112 = sphi 0, %s110
    %s113 = sphi 0, %s112
    %s127 = sphi 0, %s113
    %s131 = sphi 0, %s131
    %s133 = sphi 0, %s131
    %s134 = sphi 0, %s133
    %s148 = sphi 0, %s134
    %s152 = sphi 0, %s152
    %s154 = sphi 0, %s152
    %s155 = sphi 0, %s154
    %s169 = sphi 0, %s155
    %s175 = sphi 0, %s177
    %s178 = sphi 0, %s175
    %s179 = sphi 0, %s178
    %s195 = sphi 0, %s179
  $region4: #{mlp_forward.1} parent=0 // loop_header_branch
    %16 = sbr.rel (%p14) target = $region8
  $region5: #{mlp_forward.1} parent=0 // loop_body
    %s18 = ssub.s32 %s13, 1
    %s19 = ssub.s32 %s13, 2
    %s20 = sadd.s32 %s13, 1
    %s21 = ssub.s32 %s13, %s20
    %p22 = scmp.eq.s32.totalorder %s21, 0
    %s24 = sadd.s32 %s23, 1
    %s25 = scalar_select %p22, %s23, %s24
    %p28 = pneg %p22
    %p29 = scmp.eq.s32.totalorder %s13, 1
    %p30 = por %p28, %p29
    %p31 = scmp.ne.s32.totalorder %s23, %s26
    %p32 = scmp.eq.s32.totalorder %s13, 0
    %p33 = por %p31, %p32
    %p34 = scmp.ne.s32.totalorder %s23, %s26
    %p35 = scmp.eq.s32.totalorder %s18, 1
    %p36 = por %p34, %p35
    %p37 = scmp.ne.s32.totalorder %s26, %s27
    %p38 = scmp.eq.s32.totalorder %s18, 0
    %p39 = por %p37, %p38
    %p40 = scmp.ne.s32.totalorder %s26, %s27
    %p41 = scmp.eq.s32.totalorder %s19, 1
    %p42 = por %p40, %p41
    %p44 = scmp.ne.s32.totalorder %s27, %s43
    %p45 = scmp.eq.s32.totalorder %s19, 0
    %p46 = por %p44, %p45
    %s48 = sadd.s32 %s47, 1
    %p51 = scmp.eq.s32.totalorder %s13, 1
    %p52 = scmp.ne.s32.totalorder %s47, %s49
    %p53 = scmp.eq.s32.totalorder %s13, 0
    %p54 = por %p52, %p53
    %p55 = scmp.ne.s32.totalorder %s47, %s49
    %p56 = scmp.eq.s32.totalorder %s18, 1
    %p57 = por %p55, %p56
    %p58 = scmp.ne.s32.totalorder %s49, %s50
    %p59 = scmp.eq.s32.totalorder %s18, 0
    %p60 = por %p58, %p59
    %p61 = scmp.ne.s32.totalorder %s49, %s50
    %p62 = scmp.eq.s32.totalorder %s19, 1
    %p63 = por %p61, %p62
    %p65 = scmp.ne.s32.totalorder %s50, %s64
    %p66 = scmp.eq.s32.totalorder %s19, 0
    %p67 = por %p65, %p66
    %s69 = sadd.s32 %s68, 1
    %p72 = scmp.eq.s32.totalorder %s13, 1
    %p73 = scmp.ne.s32.totalorder %s68, %s70
    %p74 = scmp.eq.s32.totalorder %s13, 0
    %p75 = por %p73, %p74
    %p76 = scmp.ne.s32.totalorder %s68, %s70
    %p77 = scmp.eq.s32.totalorder %s18, 1
    %p78 = por %p76, %p77
    %p79 = scmp.ne.s32.totalorder %s70, %s71
    %p80 = scmp.eq.s32.totalorder %s18, 0
    %p81 = por %p79, %p80
    %p82 = scmp.ne.s32.totalorder %s70, %s71
    %p83 = scmp.eq.s32.totalorder %s19, 1
    %p84 = por %p82, %p83
    %p86 = scmp.ne.s32.totalorder %s71, %s85
    %p87 = scmp.eq.s32.totalorder %s19, 0
    %p88 = por %p86, %p87
    %s90 = sadd.s32 %s89, 1
    %p93 = scmp.eq.s32.totalorder %s13, 1
    %p94 = scmp.ne.s32.totalorder %s89, %s91
    %p95 = scmp.eq.s32.totalorder %s13, 0
    %p96 = por %p94, %p95
    %p97 = scmp.ne.s32.totalorder %s89, %s91
    %p98 = scmp.eq.s32.totalorder %s18, 1
    %p99 = por %p97, %p98
    %p100 = scmp.ne.s32.totalorder %s91, %s92
    %p101 = scmp.eq.s32.totalorder %s18, 0
    %p102 = por %p100, %p101
    %p103 = scmp.ne.s32.totalorder %s91, %s92
    %p104 = scmp.eq.s32.totalorder %s19, 1
    %p105 = por %p103, %p104
    %p107 = scmp.ne.s32.totalorder %s92, %s106
    %p108 = scmp.eq.s32.totalorder %s19, 0
    %p109 = por %p107, %p108
    %s111 = sadd.s32 %s110, 1
    %p114 = scmp.eq.s32.totalorder %s13, 1
    %p115 = scmp.ne.s32.totalorder %s110, %s112
    %p116 = scmp.eq.s32.totalorder %s13, 0
    %p117 = por %p115, %p116
    %p118 = scmp.ne.s32.totalorder %s110, %s112
    %p119 = scmp.eq.s32.totalorder %s18, 1
    %p120 = por %p118, %p119
    %p121 = scmp.ne.s32.totalorder %s112, %s113
    %p122 = scmp.eq.s32.totalorder %s18, 0
    %p123 = por %p121, %p122
    %p124 = scmp.ne.s32.totalorder %s112, %s113
    %p125 = scmp.eq.s32.totalorder %s19, 1
    %p126 = por %p124, %p125
    %p128 = scmp.ne.s32.totalorder %s113, %s127
    %p129 = scmp.eq.s32.totalorder %s19, 0
    %p130 = por %p128, %p129
    %s132 = sadd.s32 %s131, 1
    %p135 = scmp.eq.s32.totalorder %s13, 1
    %p136 = scmp.ne.s32.totalorder %s131, %s133
    %p137 = scmp.eq.s32.totalorder %s13, 0
    %p138 = por %p136, %p137
    %p139 = scmp.ne.s32.totalorder %s131, %s133
    %p140 = scmp.eq.s32.totalorder %s18, 1
    %p141 = por %p139, %p140
    %p142 = scmp.ne.s32.totalorder %s133, %s134
    %p143 = scmp.eq.s32.totalorder %s18, 0
    %p144 = por %p142, %p143
    %p145 = scmp.ne.s32.totalorder %s133, %s134
    %p146 = scmp.eq.s32.totalorder %s19, 1
    %p147 = por %p145, %p146
    %p149 = scmp.ne.s32.totalorder %s134, %s148
    %p150 = scmp.eq.s32.totalorder %s19, 0
    %p151 = por %p149, %p150
    %s153 = sadd.s32 %s152, 1
    %p156 = scmp.eq.s32.totalorder %s13, 1
    %p157 = scmp.ne.s32.totalorder %s152, %s154
    %p158 = scmp.eq.s32.totalorder %s13, 0
    %p159 = por %p157, %p158
    %p160 = scmp.ne.s32.totalorder %s152, %s154
    %p161 = scmp.eq.s32.totalorder %s18, 1
    %p162 = por %p160, %p161
    %p163 = scmp.ne.s32.totalorder %s154, %s155
    %p164 = scmp.eq.s32.totalorder %s18, 0
    %p165 = por %p163, %p164
    %p166 = scmp.ne.s32.totalorder %s154, %s155
    %p167 = scmp.eq.s32.totalorder %s19, 1
    %p168 = por %p166, %p167
    %p170 = scmp.ne.s32.totalorder %s155, %s169
    %p171 = scmp.eq.s32.totalorder %s19, 0
    %p172 = por %p170, %p171
    %s173 = ssub.s32 %s13, %s20
    %p174 = scmp.eq.s32.totalorder %s173, 0
    %s176 = sadd.s32 %s175, 1
    %s177 = scalar_select %p174, %s175, %s176
    %p180 = pneg %p174
    %p181 = scmp.eq.s32.totalorder %s13, 1
    %p182 = por %p180, %p181
    %p183 = scmp.ne.s32.totalorder %s175, %s178
    %p184 = scmp.eq.s32.totalorder %s13, 0
    %p185 = por %p183, %p184
    %p186 = scmp.ne.s32.totalorder %s175, %s178
    %p187 = scmp.eq.s32.totalorder %s18, 1
    %p188 = por %p186, %p187
    %p189 = scmp.ne.s32.totalorder %s178, %s179
    %p190 = scmp.eq.s32.totalorder %s18, 0
    %p191 = por %p189, %p190
    %p192 = scmp.ne.s32.totalorder %s178, %s179
    %p193 = scmp.eq.s32.totalorder %s19, 1
    %p194 = por %p192, %p193
    %p196 = scmp.ne.s32.totalorder %s179, %s195
    %p197 = scmp.eq.s32.totalorder %s19, 0
    %p198 = por %p196, %p197
    %p199 = scmp.le.s32.totalorder 1, %s13
    %p200 = scmp.lt.s32.totalorder %s13, 3
    %p201 = pnand %p199, %p200
    %p202 = pneg %p201
    // Predicated region
    $region9: #{mlp_forward.1} parent=5 // pred_check
      _
    $region10: #{mlp_forward.1} parent=5 // pred_check_branch
      %204 = sbr.rel (%p201) target = $region12
    $region11: #{mlp_forward.1} parent=5 // pred_region
      %s205 = ssub.s32 %s13, 1
      // Predicated region
      $region13: #{mlp_forward.1} parent=11 // pred_check
        %p206 = pneg %p60
      $region14: #{mlp_forward.1} parent=11 // pred_check_branch
        %208 = sbr.rel (%p206) target = $region16
      $region15: #{mlp_forward.1} parent=11 // pred_region
        _
      $region16: #{mlp_forward.1} parent=11 // pred_fallthru
        _
      // Predicated region
      $region17: #{mlp_forward.1} parent=11 // pred_check
        %p209 = pneg %p81
      $region18: #{mlp_forward.1} parent=11 // pred_check_branch
        %211 = sbr.rel (%p209) target = $region20
      $region19: #{mlp_forward.1} parent=11 // pred_region
        _
      $region20: #{mlp_forward.1} parent=11 // pred_fallthru
        _
      // Predicated region
      $region21: #{mlp_forward.1} parent=11 // pred_check
        %p212 = pneg %p102
      $region22: #{mlp_forward.1} parent=11 // pred_check_branch
        %214 = sbr.rel (%p212) target = $region24
      $region23: #{mlp_forward.1} parent=11 // pred_region
        _
      $region24: #{mlp_forward.1} parent=11 // pred_fallthru
        _
      // Predicated region
      $region25: #{mlp_forward.1} parent=11 // pred_check
        %p215 = pneg %p123
      $region26: #{mlp_forward.1} parent=11 // pred_check_branch
        %217 = sbr.rel (%p215) target = $region28
      $region27: #{mlp_forward.1} parent=11 // pred_region
        _
      $region28: #{mlp_forward.1} parent=11 // pred_fallthru
        _
      // Predicated region
      $region29: #{mlp_forward.1} parent=11 // pred_check
        %p218 = pneg %p144
      $region30: #{mlp_forward.1} parent=11 // pred_check_branch
        %220 = sbr.rel (%p218) target = $region32
      $region31: #{mlp_forward.1} parent=11 // pred_region
        _
      $region32: #{mlp_forward.1} parent=11 // pred_fallthru
        _
      // Predicated region
      $region33: #{mlp_forward.1} parent=11 // pred_check
        %p221 = pneg %p165
      $region34: #{mlp_forward.1} parent=11 // pred_check_branch
        %223 = sbr.rel (%p221) target = $region36
      $region35: #{mlp_forward.1} parent=11 // pred_region
        _
      $region36: #{mlp_forward.1} parent=11 // pred_fallthru
        _
    $region12: #{mlp_forward.1} parent=5 // pred_fallthru
      _
    %p224 = scmp.lt.s32.totalorder %s13, 2
    // Predicated region
    $region37: #{mlp_forward.1} parent=5 // pred_check
      %p225 = pneg %p224
    $region38: #{mlp_forward.1} parent=5 // pred_check_branch
      %227 = sbr.rel (%p225) target = $region40
    $region39: #{mlp_forward.1} parent=5 // pred_region
      // Predicated region
      $region41: #{mlp_forward.1} parent=39 // pred_check
        %p228 = pneg %p33
      $region42: #{mlp_forward.1} parent=39 // pred_check_branch
        %230 = sbr.rel (%p228) target = $region44
      $region43: #{mlp_forward.1} parent=39 // pred_region
        %s231 = smul.u32 4, %s13
        %p232 = scmp.lt.s32.totalorder %s231, 7
        %s233 = scalar_select %p232, %s231, 7
        %s234 = smul.addr %s233, 4
        %s235 = scalar_lea.vmem %s0, %s234
        %s236 = smul.u32 4, %s13
      $region44: #{mlp_forward.1} parent=39 // pred_fallthru
        _
    $region40: #{mlp_forward.1} parent=5 // pred_fallthru
      _
    %p237 = scmp.le.s32.totalorder 1, %s13
    %p238 = scmp.lt.s32.totalorder %s13, 3
    %p239 = pnand %p237, %p238
    %p240 = pneg %p239
    // Predicated region
    $region45: #{mlp_forward.1} parent=5 // pred_check
      _
    $region46: #{mlp_forward.1} parent=5 // pred_check_branch
      %242 = sbr.rel (%p239) target = $region48
    $region47: #{mlp_forward.1} parent=5 // pred_region
      %s243 = ssub.s32 %s13, 1
      %s244 = smul.u32 4, %s18
      %p245 = scmp.lt.s32.totalorder %s244, 7
      %s246 = scalar_select %p245, %s244, 7
      %s247 = smul.addr %s246, 4
      %s248 = scalar_lea.vmem %s0, %s247
      %p249 = pneg %p39
      %p250 = pneg %p36
      %p251 = pneg %p60
      %p252 = pneg %p57
      %p253 = pneg %p81
      %p254 = pneg %p78
      %p255 = pneg %p102
      %p256 = pneg %p99
      %p257 = pneg %p123
      %p258 = pneg %p120
      %p259 = pneg %p144
      %p260 = pneg %p141
      %p261 = pneg %p165
      %p262 = pneg %p162
      %p263 = pneg %p191
      %p264 = pneg %p188
      %s265 = smul.u32 4, %s18
      %p266 = scmp.lt.s32.totalorder %s265, 7
      %s267 = scalar_select %p266, %s265, 7
      %s268 = smul.addr %s267, 4
      %s269 = scalar_lea.vmem %s7, %s268
      %s270 = smul.u32 4, %s18
      %p271 = scmp.lt.s32.totalorder %s270, 7
      %s272 = scalar_select %p271, %s270, 7
      %s273 = smul.addr %s272, 4
      %s274 = scalar_lea.vmem %s0, %s273
      %s275 = smul.u32 4, %s18
      %s276 = smul.u32 4, %s18
      %p277 = scmp.lt.s32.totalorder %s276, 7
      %s278 = scalar_select %p277, %s276, 7
      %s279 = smul.addr %s278, 4
      %s280 = scalar_lea.vmem %s7, %s279
      %s281 = smul.u32 4, %s18
      %v283 = vld [vmem:[%s274] sm:$0x77]
      %v284 = vld [vmem:[%s274 + $0x8] sm:$0x77]
      %v285 = vld [vmem:[%s1] sm:$0xff]
      %v286 = vld [vmem:[%s1 + $0x8] sm:$0xff]
      %v287 = vld [vmem:[%s1 + $0x10] sm:$0xff]
      %v288 = vld [vmem:[%s1 + $0x18] sm:$0xff]
      %v289 = vld [vmem:[%s1 + $0x20] sm:$0xff]
      %v290 = vld [vmem:[%s1 + $0x28] sm:$0xff]
      %v291 = vld [vmem:[%s1 + $0x30] sm:$0xff]
      %v292 = vld [vmem:[%s1 + $0x38] sm:$0xff]
      %v293 = vld [vmem:[%s1 + $0x40] sm:$0xff]
      %v294 = vld [vmem:[%s1 + $0x48] sm:$0xff]
      %v295 = vld [vmem:[%s1 + $0x50] sm:$0xff]
      %v296 = vld [vmem:[%s1 + $0x58] sm:$0xff]
      %v297 = vld [vmem:[%s1 + $0x60] sm:$0xff]
      %v298 = vld [vmem:[%s1 + $0x68] sm:$0xff]
      %v299 = vld [vmem:[%s1 + $0x70] sm:$0xff]
      %v300 = vld [vmem:[%s1 + $0x78] sm:$0xff]
      %302 = vset.pattern.permute.xlu0 0
      %303 = vperm.xlu0 %302, %v285
      %v304 = vpop.permute.xlu0 %303
      %307 = vset.pattern.permute.xlu0 0
      %308 = vperm.xlu0 %307, %v286
      %v309 = vpop.permute.xlu0 %308
      %312 = vset.pattern.permute.xlu0 0
      %313 = vperm.xlu0 %312, %v287
      %v314 = vpop.permute.xlu0 %313
      %317 = vset.pattern.permute.xlu0 0
      %318 = vperm.xlu0 %317, %v288
      %v319 = vpop.permute.xlu0 %318
      %322 = vset.pattern.permute.xlu0 0
      %323 = vperm.xlu0 %322, %v289
      %v324 = vpop.permute.xlu0 %323
      %327 = vset.pattern.permute.xlu0 0
      %328 = vperm.xlu0 %327, %v290
      %v329 = vpop.permute.xlu0 %328
      %332 = vset.pattern.permute.xlu0 0
      %333 = vperm.xlu0 %332, %v291
      %v334 = vpop.permute.xlu0 %333
      %337 = vset.pattern.permute.xlu0 0
      %338 = vperm.xlu0 %337, %v292
      %v339 = vpop.permute.xlu0 %338
      %342 = vset.pattern.permute.xlu0 0
      %343 = vperm.xlu0 %342, %v293
      %v344 = vpop.permute.xlu0 %343
      %347 = vset.pattern.permute.xlu0 0
      %348 = vperm.xlu0 %347, %v294
      %v349 = vpop.permute.xlu0 %348
      %352 = vset.pattern.permute.xlu0 0
      %353 = vperm.xlu0 %352, %v295
      %v354 = vpop.permute.xlu0 %353
      %357 = vset.pattern.permute.xlu0 0
      %358 = vperm.xlu0 %357, %v296
      %v359 = vpop.permute.xlu0 %358
      %362 = vset.pattern.permute.xlu0 0
      %363 = vperm.xlu0 %362, %v297
      %v364 = vpop.permute.xlu0 %363
      %367 = vset.pattern.permute.xlu0 0
      %368 = vperm.xlu0 %367, %v298
      %v369 = vpop.permute.xlu0 %368
      %372 = vset.pattern.permute.xlu0 0
      %373 = vperm.xlu0 %372, %v299
      %v374 = vpop.permute.xlu0 %373
      %377 = vset.pattern.permute.xlu0 0
      %378 = vperm.xlu0 %377, %v300
      %v379 = vpop.permute.xlu0 %378
      %v383 = vlaneseq
      %v384 = vshrl.u32 %v383, 7
      %v385 = vsub.s32 0, %v384
      %v386 = vrot.slane %v283, %v385
      %v387 = vlaneseq
      %v388 = vshrl.u32 %v387, 7
      %v389 = vsub.s32 4, %v388
      %v390 = vrot.slane %v283, %v389
      %v391 = vlaneseq
      %v392 = vshrl.u32 %v391, 7
      %v393 = vsub.s32 0, %v392
      %v394 = vrot.slane %v284, %v393
      %v395 = vlaneseq
      %v396 = vshrl.u32 %v395, 7
      %v397 = vsub.s32 4, %v396
      %v398 = vrot.slane %v284, %v397
      %v403 = vlaneseq
      %v404 = vshrl.u32 %v403, 7
      %v405 = vsub.s32 0, %v404
      %v406 = vrot.slane %v386, %v405
      %v407 = vlaneseq
      %v408 = vshrl.u32 %v407, 7
      %v409 = vsub.s32 0, %v408
      %v410 = vrot.slane %v390, %v409
      %v411 = vlaneseq
      %v412 = vshrl.u32 %v411, 7
      %v413 = vsub.s32 0, %v412
      %v414 = vrot.slane %v394, %v413
      %v415 = vlaneseq
      %v416 = vshrl.u32 %v415, 7
      %v417 = vsub.s32 0, %v416
      %v418 = vrot.slane %v398, %v417
      %v419 = vmul.f32 %v304, %v406
      %v420 = vmul.f32 %v304, %v410
      %v421 = vmul.f32 %v304, %v414
      %v422 = vmul.f32 %v304, %v418
      %v423 = vmul.f32 %v309, %v406
      %v424 = vmul.f32 %v309, %v410
      %v425 = vmul.f32 %v309, %v414
      %v426 = vmul.f32 %v309, %v418
      %v427 = vmul.f32 %v314, %v406
      %v428 = vmul.f32 %v314, %v410
      %v429 = vmul.f32 %v314, %v414
      %v430 = vmul.f32 %v314, %v418
      %v431 = vmul.f32 %v319, %v406
      %v432 = vmul.f32 %v319, %v410
      %v433 = vmul.f32 %v319, %v414
      %v434 = vmul.f32 %v319, %v418
      %v435 = vmul.f32 %v324, %v406
      %v436 = vmul.f32 %v324, %v410
      %v437 = vmul.f32 %v324, %v414
      %v438 = vmul.f32 %v324, %v418
      %v439 = vmul.f32 %v329, %v406
      %v440 = vmul.f32 %v329, %v410
      %v441 = vmul.f32 %v329, %v414
      %v442 = vmul.f32 %v329, %v418
      %v443 = vmul.f32 %v334, %v406
      %v444 = vmul.f32 %v334, %v410
      %v445 = vmul.f32 %v334, %v414
      %v446 = vmul.f32 %v334, %v418
      %v447 = vmul.f32 %v339, %v406
      %v448 = vmul.f32 %v339, %v410
      %v449 = vmul.f32 %v339, %v414
      %v450 = vmul.f32 %v339, %v418
      %v451 = vmul.f32 %v344, %v406
      %v452 = vmul.f32 %v344, %v410
      %v453 = vmul.f32 %v344, %v414
      %v454 = vmul.f32 %v344, %v418
      %v455 = vmul.f32 %v349, %v406
      %v456 = vmul.f32 %v349, %v410
      %v457 = vmul.f32 %v349, %v414
      %v458 = vmul.f32 %v349, %v418
      %v459 = vmul.f32 %v354, %v406
      %v460 = vmul.f32 %v354, %v410
      %v461 = vmul.f32 %v354, %v414
      %v462 = vmul.f32 %v354, %v418
      %v463 = vmul.f32 %v359, %v406
      %v464 = vmul.f32 %v359, %v410
      %v465 = vmul.f32 %v359, %v414
      %v466 = vmul.f32 %v359, %v418
      %v467 = vmul.f32 %v364, %v406
      %v468 = vmul.f32 %v364, %v410
      %v469 = vmul.f32 %v364, %v414
      %v470 = vmul.f32 %v364, %v418
      %v471 = vmul.f32 %v369, %v406
      %v472 = vmul.f32 %v369, %v410
      %v473 = vmul.f32 %v369, %v414
      %v474 = vmul.f32 %v369, %v418
      %v475 = vmul.f32 %v374, %v406
      %v476 = vmul.f32 %v374, %v410
      %v477 = vmul.f32 %v374, %v414
      %v478 = vmul.f32 %v374, %v418
      %v479 = vmul.f32 %v379, %v406
      %v480 = vmul.f32 %v379, %v410
      %v481 = vmul.f32 %v379, %v414
      %v482 = vmul.f32 %v379, %v418
      %483 = vset.pattern.permute.xlu0 1
      %484 = vperm.xlu0 %483, %v285
      %v485 = vpop.permute.xlu0 %484
      %487 = vset.pattern.permute.xlu0 1
      %488 = vperm.xlu0 %487, %v286
      %v489 = vpop.permute.xlu0 %488
      %491 = vset.pattern.permute.xlu0 1
      %492 = vperm.xlu0 %491, %v287
      %v493 = vpop.permute.xlu0 %492
      %495 = vset.pattern.permute.xlu0 1
      %496 = vperm.xlu0 %495, %v288
      %v497 = vpop.permute.xlu0 %496
      %499 = vset.pattern.permute.xlu0 1
      %500 = vperm.xlu0 %499, %v289
      %v501 = vpop.permute.xlu0 %500
      %503 = vset.pattern.permute.xlu0 1
      %504 = vperm.xlu0 %503, %v290
      %v505 = vpop.permute.xlu0 %504
      %507 = vset.pattern.permute.xlu0 1
      %508 = vperm.xlu0 %507, %v291
      %v509 = vpop.permute.xlu0 %508
      %511 = vset.pattern.permute.xlu0 1
      %512 = vperm.xlu0 %511, %v292
      %v513 = vpop.permute.xlu0 %512
      %515 = vset.pattern.permute.xlu0 1
      %516 = vperm.xlu0 %515, %v293
      %v517 = vpop.permute.xlu0 %516
      %519 = vset.pattern.permute.xlu0 1
      %520 = vperm.xlu0 %519, %v294
      %v521 = vpop.permute.xlu0 %520
      %523 = vset.pattern.permute.xlu0 1
      %524 = vperm.xlu0 %523, %v295
      %v525 = vpop.permute.xlu0 %524
      %527 = vset.pattern.permute.xlu0 1
      %528 = vperm.xlu0 %527, %v296
      %v529 = vpop.permute.xlu0 %528
      %531 = vset.pattern.permute.xlu0 1
      %532 = vperm.xlu0 %531, %v297
      %v533 = vpop.permute.xlu0 %532
      %535 = vset.pattern.permute.xlu0 1
      %536 = vperm.xlu0 %535, %v298
      %v537 = vpop.permute.xlu0 %536
      %539 = vset.pattern.permute.xlu0 1
      %540 = vperm.xlu0 %539, %v299
      %v541 = vpop.permute.xlu0 %540
      %543 = vset.pattern.permute.xlu0 1
      %544 = vperm.xlu0 %543, %v300
      %v545 = vpop.permute.xlu0 %544
      %v547 = vlaneseq
      %v548 = vshrl.u32 %v547, 7
      %v549 = vsub.s32 1, %v548
      %v550 = vrot.slane %v283, %v549
      %v551 = vlaneseq
      %v552 = vshrl.u32 %v551, 7
      %v553 = vsub.s32 5, %v552
      %v554 = vrot.slane %v283, %v553
      %v555 = vlaneseq
      %v556 = vshrl.u32 %v555, 7
      %v557 = vsub.s32 1, %v556
      %v558 = vrot.slane %v284, %v557
      %v559 = vlaneseq
      %v560 = vshrl.u32 %v559, 7
      %v561 = vsub.s32 5, %v560
      %v562 = vrot.slane %v284, %v561
      %v567 = vlaneseq
      %v568 = vshrl.u32 %v567, 7
      %v569 = vsub.s32 1, %v568
      %v570 = vrot.slane %v550, %v569
      %v571 = vlaneseq
      %v572 = vshrl.u32 %v571, 7
      %v573 = vsub.s32 1, %v572
      %v574 = vrot.slane %v554, %v573
      %v575 = vlaneseq
      %v576 = vshrl.u32 %v575, 7
      %v577 = vsub.s32 1, %v576
      %v578 = vrot.slane %v558, %v577
      %v579 = vlaneseq
      %v580 = vshrl.u32 %v579, 7
      %v581 = vsub.s32 1, %v580
      %v582 = vrot.slane %v562, %v581
      %v583 = vmul.f32 %v485, %v570
      %v584 = vmul.f32 %v485, %v574
      %v585 = vmul.f32 %v485, %v578
      %v586 = vmul.f32 %v485, %v582
      %v587 = vmul.f32 %v489, %v570
      %v588 = vmul.f32 %v489, %v574
      %v589 = vmul.f32 %v489, %v578
      %v590 = vmul.f32 %v489, %v582
      %v591 = vmul.f32 %v493, %v570
      %v592 = vmul.f32 %v493, %v574
      %v593 = vmul.f32 %v493, %v578
      %v594 = vmul.f32 %v493, %v582
      %v595 = vmul.f32 %v497, %v570
      %v596 = vmul.f32 %v497, %v574
      %v597 = vmul.f32 %v497, %v578
      %v598 = vmul.f32 %v497, %v582
      %v599 = vmul.f32 %v501, %v570
      %v600 = vmul.f32 %v501, %v574
      %v601 = vmul.f32 %v501, %v578
      %v602 = vmul.f32 %v501, %v582
      %v603 = vmul.f32 %v505, %v570
      %v604 = vmul.f32 %v505, %v574
      %v605 = vmul.f32 %v505, %v578
      %v606 = vmul.f32 %v505, %v582
      %v607 = vmul.f32 %v509, %v570
      %v608 = vmul.f32 %v509, %v574
      %v609 = vmul.f32 %v509, %v578
      %v610 = vmul.f32 %v509, %v582
      %v611 = vmul.f32 %v513, %v570
      %v612 = vmul.f32 %v513, %v574
      %v613 = vmul.f32 %v513, %v578
      %v614 = vmul.f32 %v513, %v582
      %v615 = vmul.f32 %v517, %v570
      %v616 = vmul.f32 %v517, %v574
      %v617 = vmul.f32 %v517, %v578
      %v618 = vmul.f32 %v517, %v582
      %v619 = vmul.f32 %v521, %v570
      %v620 = vmul.f32 %v521, %v574
      %v621 = vmul.f32 %v521, %v578
      %v622 = vmul.f32 %v521, %v582
      %v623 = vmul.f32 %v525, %v570
      %v624 = vmul.f32 %v525, %v574
      %v625 = vmul.f32 %v525, %v578
      %v626 = vmul.f32 %v525, %v582
      %v627 = vmul.f32 %v529, %v570
      %v628 = vmul.f32 %v529, %v574
      %v629 = vmul.f32 %v529, %v578
      %v630 = vmul.f32 %v529, %v582
      %v631 = vmul.f32 %v533, %v570
      %v632 = vmul.f32 %v533, %v574
      %v633 = vmul.f32 %v533, %v578
      %v634 = vmul.f32 %v533, %v582
      %v635 = vmul.f32 %v537, %v570
      %v636 = vmul.f32 %v537, %v574
      %v637 = vmul.f32 %v537, %v578
      %v638 = vmul.f32 %v537, %v582
      %v639 = vmul.f32 %v541, %v570
      %v640 = vmul.f32 %v541, %v574
      %v641 = vmul.f32 %v541, %v578
      %v642 = vmul.f32 %v541, %v582
      %v643 = vmul.f32 %v545, %v570
      %v644 = vmul.f32 %v545, %v574
      %v645 = vmul.f32 %v545, %v578
      %v646 = vmul.f32 %v545, %v582
      %v647 = vadd.f32 %v419, %v583
      %v648 = vadd.f32 %v420, %v584
      %v649 = vadd.f32 %v421, %v585
      %v650 = vadd.f32 %v422, %v586
      %v651 = vadd.f32 %v423, %v587
      %v652 = vadd.f32 %v424, %v588
      %v653 = vadd.f32 %v425, %v589
      %v654 = vadd.f32 %v426, %v590
      %v655 = vadd.f32 %v427, %v591
      %v656 = vadd.f32 %v428, %v592
      %v657 = vadd.f32 %v429, %v593
      %v658 = vadd.f32 %v430, %v594
      %v659 = vadd.f32 %v431, %v595
      %v660 = vadd.f32 %v432, %v596
      %v661 = vadd.f32 %v433, %v597
      %v662 = vadd.f32 %v434, %v598
      %v663 = vadd.f32 %v435, %v599
      %v664 = vadd.f32 %v436, %v600
      %v665 = vadd.f32 %v437, %v601
      %v666 = vadd.f32 %v438, %v602
      %v667 = vadd.f32 %v439, %v603
      %v668 = vadd.f32 %v440, %v604
      %v669 = vadd.f32 %v441, %v605
      %v670 = vadd.f32 %v442, %v606
      %v671 = vadd.f32 %v443, %v607
      %v672 = vadd.f32 %v444, %v608
      %v673 = vadd.f32 %v445, %v609
      %v674 = vadd.f32 %v446, %v610
      %v675 = vadd.f32 %v447, %v611
      %v676 = vadd.f32 %v448, %v612
      %v677 = vadd.f32 %v449, %v613
      %v678 = vadd.f32 %v450, %v614
      %v679 = vadd.f32 %v451, %v615
      %v680 = vadd.f32 %v452, %v616
      %v681 = vadd.f32 %v453, %v617
      %v682 = vadd.f32 %v454, %v618
      %v683 = vadd.f32 %v455, %v619
      %v684 = vadd.f32 %v456, %v620
      %v685 = vadd.f32 %v457, %v621
      %v686 = vadd.f32 %v458, %v622
      %v687 = vadd.f32 %v459, %v623
      %v688 = vadd.f32 %v460, %v624
      %v689 = vadd.f32 %v461, %v625
      %v690 = vadd.f32 %v462, %v626
      %v691 = vadd.f32 %v463, %v627
      %v692 = vadd.f32 %v464, %v628
      %v693 = vadd.f32 %v465, %v629
      %v694 = vadd.f32 %v466, %v630
      %v695 = vadd.f32 %v467, %v631
      %v696 = vadd.f32 %v468, %v632
      %v697 = vadd.f32 %v469, %v633
      %v698 = vadd.f32 %v470, %v634
      %v699 = vadd.f32 %v471, %v635
      %v700 = vadd.f32 %v472, %v636
      %v701 = vadd.f32 %v473, %v637
      %v702 = vadd.f32 %v474, %v638
      %v703 = vadd.f32 %v475, %v639
      %v704 = vadd.f32 %v476, %v640
      %v705 = vadd.f32 %v477, %v641
      %v706 = vadd.f32 %v478, %v642
      %v707 = vadd.f32 %v479, %v643
      %v708 = vadd.f32 %v480, %v644
      %v709 = vadd.f32 %v481, %v645
      %v710 = vadd.f32 %v482, %v646
      %711 = vset.pattern.permute.xlu0 2
      %712 = vperm.xlu0 %711, %v285
      %v713 = vpop.permute.xlu0 %712
      %715 = vset.pattern.permute.xlu0 2
      %716 = vperm.xlu0 %715, %v286
      %v717 = vpop.permute.xlu0 %716
      %719 = vset.pattern.permute.xlu0 2
      %720 = vperm.xlu0 %719, %v287
      %v721 = vpop.permute.xlu0 %720
      %723 = vset.pattern.permute.xlu0 2
      %724 = vperm.xlu0 %723, %v288
      %v725 = vpop.permute.xlu0 %724
      %727 = vset.pattern.permute.xlu0 2
      %728 = vperm.xlu0 %727, %v289
      %v729 = vpop.permute.xlu0 %728
      %731 = vset.pattern.permute.xlu0 2
      %732 = vperm.xlu0 %731, %v290
      %v733 = vpop.permute.xlu0 %732
      %735 = vset.pattern.permute.xlu0 2
      %736 = vperm.xlu0 %735, %v291
      %v737 = vpop.permute.xlu0 %736
      %739 = vset.pattern.permute.xlu0 2
      %740 = vperm.xlu0 %739, %v292
      %v741 = vpop.permute.xlu0 %740
      %743 = vset.pattern.permute.xlu0 2
      %744 = vperm.xlu0 %743, %v293
      %v745 = vpop.permute.xlu0 %744
      %747 = vset.pattern.permute.xlu0 2
      %748 = vperm.xlu0 %747, %v294
      %v749 = vpop.permute.xlu0 %748
      %751 = vset.pattern.permute.xlu0 2
      %752 = vperm.xlu0 %751, %v295
      %v753 = vpop.permute.xlu0 %752
      %755 = vset.pattern.permute.xlu0 2
      %756 = vperm.xlu0 %755, %v296
      %v757 = vpop.permute.xlu0 %756
      %759 = vset.pattern.permute.xlu0 2
      %760 = vperm.xlu0 %759, %v297
      %v761 = vpop.permute.xlu0 %760
      %763 = vset.pattern.permute.xlu0 2
      %764 = vperm.xlu0 %763, %v298
      %v765 = vpop.permute.xlu0 %764
      %767 = vset.pattern.permute.xlu0 2
      %768 = vperm.xlu0 %767, %v299
      %v769 = vpop.permute.xlu0 %768
      %771 = vset.pattern.permute.xlu0 2
      %772 = vperm.xlu0 %771, %v300
      %v773 = vpop.permute.xlu0 %772
      %v775 = vlaneseq
      %v776 = vshrl.u32 %v775, 7
      %v777 = vsub.s32 2, %v776
      %v778 = vrot.slane %v283, %v777
      %v779 = vlaneseq
      %v780 = vshrl.u32 %v779, 7
      %v781 = vsub.s32 6, %v780
      %v782 = vrot.slane %v283, %v781
      %v783 = vlaneseq
      %v784 = vshrl.u32 %v783, 7
      %v785 = vsub.s32 2, %v784
      %v786 = vrot.slane %v284, %v785
      %v787 = vlaneseq
      %v788 = vshrl.u32 %v787, 7
      %v789 = vsub.s32 6, %v788
      %v790 = vrot.slane %v284, %v789
      %v795 = vlaneseq
      %v796 = vshrl.u32 %v795, 7
      %v797 = vsub.s32 2, %v796
      %v798 = vrot.slane %v778, %v797
      %v799 = vlaneseq
      %v800 = vshrl.u32 %v799, 7
      %v801 = vsub.s32 2, %v800
      %v802 = vrot.slane %v782, %v801
      %v803 = vlaneseq
      %v804 = vshrl.u32 %v803, 7
      %v805 = vsub.s32 2, %v804
      %v806 = vrot.slane %v786, %v805
      %v807 = vlaneseq
      %v808 = vshrl.u32 %v807, 7
      %v809 = vsub.s32 2, %v808
      %v810 = vrot.slane %v790, %v809
      %v811 = vmul.f32 %v713, %v798
      %v812 = vmul.f32 %v713, %v802
      %v813 = vmul.f32 %v713, %v806
      %v814 = vmul.f32 %v713, %v810
      %v815 = vmul.f32 %v717, %v798
      %v816 = vmul.f32 %v717, %v802
      %v817 = vmul.f32 %v717, %v806
      %v818 = vmul.f32 %v717, %v810
      %v819 = vmul.f32 %v721, %v798
      %v820 = vmul.f32 %v721, %v802
      %v821 = vmul.f32 %v721, %v806
      %v822 = vmul.f32 %v721, %v810
      %v823 = vmul.f32 %v725, %v798
      %v824 = vmul.f32 %v725, %v802
      %v825 = vmul.f32 %v725, %v806
      %v826 = vmul.f32 %v725, %v810
      %v827 = vmul.f32 %v729, %v798
      %v828 = vmul.f32 %v729, %v802
      %v829 = vmul.f32 %v729, %v806
      %v830 = vmul.f32 %v729, %v810
      %v831 = vmul.f32 %v733, %v798
      %v832 = vmul.f32 %v733, %v802
      %v833 = vmul.f32 %v733, %v806
      %v834 = vmul.f32 %v733, %v810
      %v835 = vmul.f32 %v737, %v798
      %v836 = vmul.f32 %v737, %v802
      %v837 = vmul.f32 %v737, %v806
      %v838 = vmul.f32 %v737, %v810
      %v839 = vmul.f32 %v741, %v798
      %v840 = vmul.f32 %v741, %v802
      %v841 = vmul.f32 %v741, %v806
      %v842 = vmul.f32 %v741, %v810
      %v843 = vmul.f32 %v745, %v798
      %v844 = vmul.f32 %v745, %v802
      %v845 = vmul.f32 %v745, %v806
      %v846 = vmul.f32 %v745, %v810
      %v847 = vmul.f32 %v749, %v798
      %v848 = vmul.f32 %v749, %v802
      %v849 = vmul.f32 %v749, %v806
      %v850 = vmul.f32 %v749, %v810
      %v851 = vmul.f32 %v753, %v798
      %v852 = vmul.f32 %v753, %v802
      %v853 = vmul.f32 %v753, %v806
      %v854 = vmul.f32 %v753, %v810
      %v855 = vmul.f32 %v757, %v798
      %v856 = vmul.f32 %v757, %v802
      %v857 = vmul.f32 %v757, %v806
      %v858 = vmul.f32 %v757, %v810
      %v859 = vmul.f32 %v761, %v798
      %v860 = vmul.f32 %v761, %v802
      %v861 = vmul.f32 %v761, %v806
      %v862 = vmul.f32 %v761, %v810
      %v863 = vmul.f32 %v765, %v798
      %v864 = vmul.f32 %v765, %v802
      %v865 = vmul.f32 %v765, %v806
      %v866 = vmul.f32 %v765, %v810
      %v867 = vmul.f32 %v769, %v798
      %v868 = vmul.f32 %v769, %v802
      %v869 = vmul.f32 %v769, %v806
      %v870 = vmul.f32 %v769, %v810
      %v871 = vmul.f32 %v773, %v798
      %v872 = vmul.f32 %v773, %v802
      %v873 = vmul.f32 %v773, %v806
      %v874 = vmul.f32 %v773, %v810
      %v875 = vadd.f32 %v647, %v811
      %v876 = vadd.f32 %v648, %v812
      %v877 = vadd.f32 %v649, %v813
      %v878 = vadd.f32 %v650, %v814
      %v879 = vadd.f32 %v651, %v815
      %v880 = vadd.f32 %v652, %v816
      %v881 = vadd.f32 %v653, %v817
      %v882 = vadd.f32 %v654, %v818
      %v883 = vadd.f32 %v655, %v819
      %v884 = vadd.f32 %v656, %v820
      %v885 = vadd.f32 %v657, %v821
      %v886 = vadd.f32 %v658, %v822
      %v887 = vadd.f32 %v659, %v823
      %v888 = vadd.f32 %v660, %v824
      %v889 = vadd.f32 %v661, %v825
      %v890 = vadd.f32 %v662, %v826
      %v891 = vadd.f32 %v663, %v827
      %v892 = vadd.f32 %v664, %v828
      %v893 = vadd.f32 %v665, %v829
      %v894 = vadd.f32 %v666, %v830
      %v895 = vadd.f32 %v667, %v831
      %v896 = vadd.f32 %v668, %v832
      %v897 = vadd.f32 %v669, %v833
      %v898 = vadd.f32 %v670, %v834
      %v899 = vadd.f32 %v671, %v835
      %v900 = vadd.f32 %v672, %v836
      %v901 = vadd.f32 %v673, %v837
      %v902 = vadd.f32 %v674, %v838
      %v903 = vadd.f32 %v675, %v839
      %v904 = vadd.f32 %v676, %v840
      %v905 = vadd.f32 %v677, %v841
      %v906 = vadd.f32 %v678, %v842
      %v907 = vadd.f32 %v679, %v843
      %v908 = vadd.f32 %v680, %v844
      %v909 = vadd.f32 %v681, %v845
      %v910 = vadd.f32 %v682, %v846
      %v911 = vadd.f32 %v683, %v847
      %v912 = vadd.f32 %v684, %v848
      %v913 = vadd.f32 %v685, %v849
      %v914 = vadd.f32 %v686, %v850
      %v915 = vadd.f32 %v687, %v851
      %v916 = vadd.f32 %v688, %v852
      %v917 = vadd.f32 %v689, %v853
      %v918 = vadd.f32 %v690, %v854
      %v919 = vadd.f32 %v691, %v855
      %v920 = vadd.f32 %v692, %v856
      %v921 = vadd.f32 %v693, %v857
      %v922 = vadd.f32 %v694, %v858
      %v923 = vadd.f32 %v695, %v859
      %v924 = vadd.f32 %v696, %v860
      %v925 = vadd.f32 %v697, %v861
      %v926 = vadd.f32 %v698, %v862
      %v927 = vadd.f32 %v699, %v863
      %v928 = vadd.f32 %v700, %v864
      %v929 = vadd.f32 %v701, %v865
      %v930 = vadd.f32 %v702, %v866
      %v931 = vadd.f32 %v703, %v867
      %v932 = vadd.f32 %v704, %v868
      %v933 = vadd.f32 %v705, %v869
      %v934 = vadd.f32 %v706, %v870
      %v935 = vadd.f32 %v707, %v871
      %v936 = vadd.f32 %v708, %v872
      %v937 = vadd.f32 %v709, %v873
      %v938 = vadd.f32 %v710, %v874
      %v939 = vld [vmem:[%s2] sm:$0xff]
      %v940 = vld [vmem:[%s2 + $0x8] sm:$0xff]
      %v941 = vld [vmem:[%s2 + $0x10] sm:$0xff]
      %v942 = vld [vmem:[%s2 + $0x18] sm:$0xff]
      %v943 = vld [vmem:[%s2 + $0x20] sm:$0xff]
      %v944 = vld [vmem:[%s2 + $0x28] sm:$0xff]
      %v945 = vld [vmem:[%s2 + $0x30] sm:$0xff]
      %v946 = vld [vmem:[%s2 + $0x38] sm:$0xff]
      %v947 = vld [vmem:[%s2 + $0x40] sm:$0xff]
      %v948 = vld [vmem:[%s2 + $0x48] sm:$0xff]
      %v949 = vld [vmem:[%s2 + $0x50] sm:$0xff]
      %v950 = vld [vmem:[%s2 + $0x58] sm:$0xff]
      %v951 = vld [vmem:[%s2 + $0x60] sm:$0xff]
      %v952 = vld [vmem:[%s2 + $0x68] sm:$0xff]
      %v953 = vld [vmem:[%s2 + $0x70] sm:$0xff]
      %v954 = vld [vmem:[%s2 + $0x78] sm:$0xff]
      %956 = vset.pattern.permute.xlu0 0
      %957 = vperm.xlu0 %956, %v939
      %v958 = vpop.permute.xlu0 %957
      %961 = vset.pattern.permute.xlu0 0
      %962 = vperm.xlu0 %961, %v940
      %v963 = vpop.permute.xlu0 %962
      %966 = vset.pattern.permute.xlu0 0
      %967 = vperm.xlu0 %966, %v941
      %v968 = vpop.permute.xlu0 %967
      %971 = vset.pattern.permute.xlu0 0
      %972 = vperm.xlu0 %971, %v942
      %v973 = vpop.permute.xlu0 %972
      %976 = vset.pattern.permute.xlu0 0
      %977 = vperm.xlu0 %976, %v943
      %v978 = vpop.permute.xlu0 %977
      %981 = vset.pattern.permute.xlu0 0
      %982 = vperm.xlu0 %981, %v944
      %v983 = vpop.permute.xlu0 %982
      %986 = vset.pattern.permute.xlu0 0
      %987 = vperm.xlu0 %986, %v945
      %v988 = vpop.permute.xlu0 %987
      %991 = vset.pattern.permute.xlu0 0
      %992 = vperm.xlu0 %991, %v946
      %v993 = vpop.permute.xlu0 %992
      %996 = vset.pattern.permute.xlu0 0
      %997 = vperm.xlu0 %996, %v947
      %v998 = vpop.permute.xlu0 %997
      %1001 = vset.pattern.permute.xlu0 0
      %1002 = vperm.xlu0 %1001, %v948
      %v1003 = vpop.permute.xlu0 %1002
      %1006 = vset.pattern.permute.xlu0 0
      %1007 = vperm.xlu0 %1006, %v949
      %v1008 = vpop.permute.xlu0 %1007
      %1011 = vset.pattern.permute.xlu0 0
      %1012 = vperm.xlu0 %1011, %v950
      %v1013 = vpop.permute.xlu0 %1012
      %1016 = vset.pattern.permute.xlu0 0
      %1017 = vperm.xlu0 %1016, %v951
      %v1018 = vpop.permute.xlu0 %1017
      %1021 = vset.pattern.permute.xlu0 0
      %1022 = vperm.xlu0 %1021, %v952
      %v1023 = vpop.permute.xlu0 %1022
      %1026 = vset.pattern.permute.xlu0 0
      %1027 = vperm.xlu0 %1026, %v953
      %v1028 = vpop.permute.xlu0 %1027
      %1031 = vset.pattern.permute.xlu0 0
      %1032 = vperm.xlu0 %1031, %v954
      %v1033 = vpop.permute.xlu0 %1032
      %v1035 = vadd.f32 %v875, %v958
      %v1036 = vadd.f32 %v876, %v958
      %v1037 = vadd.f32 %v877, %v958
      %v1038 = vadd.f32 %v878, %v958
      %v1039 = vadd.f32 %v879, %v963
      %v1040 = vadd.f32 %v880, %v963
      %v1041 = vadd.f32 %v881, %v963
      %v1042 = vadd.f32 %v882, %v963
      %v1043 = vadd.f32 %v883, %v968
      %v1044 = vadd.f32 %v884, %v968
      %v1045 = vadd.f32 %v885, %v968
      %v1046 = vadd.f32 %v886, %v968
      %v1047 = vadd.f32 %v887, %v973
      %v1048 = vadd.f32 %v888, %v973
      %v1049 = vadd.f32 %v889, %v973
      %v1050 = vadd.f32 %v890, %v973
      %v1051 = vadd.f32 %v891, %v978
      %v1052 = vadd.f32 %v892, %v978
      %v1053 = vadd.f32 %v893, %v978
      %v1054 = vadd.f32 %v894, %v978
      %v1055 = vadd.f32 %v895, %v983
      %v1056 = vadd.f32 %v896, %v983
      %v1057 = vadd.f32 %v897, %v983
      %v1058 = vadd.f32 %v898, %v983
      %v1059 = vadd.f32 %v899, %v988
      %v1060 = vadd.f32 %v900, %v988
      %v1061 = vadd.f32 %v901, %v988
      %v1062 = vadd.f32 %v902, %v988
      %v1063 = vadd.f32 %v903, %v993
      %v1064 = vadd.f32 %v904, %v993
      %v1065 = vadd.f32 %v905, %v993
      %v1066 = vadd.f32 %v906, %v993
      %v1067 = vadd.f32 %v907, %v998
      %v1068 = vadd.f32 %v908, %v998
      %v1069 = vadd.f32 %v909, %v998
      %v1070 = vadd.f32 %v910, %v998
      %v1071 = vadd.f32 %v911, %v1003
      %v1072 = vadd.f32 %v912, %v1003
      %v1073 = vadd.f32 %v913, %v1003
      %v1074 = vadd.f32 %v914, %v1003
      %v1075 = vadd.f32 %v915, %v1008
      %v1076 = vadd.f32 %v916, %v1008
      %v1077 = vadd.f32 %v917, %v1008
      %v1078 = vadd.f32 %v918, %v1008
      %v1079 = vadd.f32 %v919, %v1013
      %v1080 = vadd.f32 %v920, %v1013
      %v1081 = vadd.f32 %v921, %v1013
      %v1082 = vadd.f32 %v922, %v1013
      %v1083 = vadd.f32 %v923, %v1018
      %v1084 = vadd.f32 %v924, %v1018
      %v1085 = vadd.f32 %v925, %v1018
      %v1086 = vadd.f32 %v926, %v1018
      %v1087 = vadd.f32 %v927, %v1023
      %v1088 = vadd.f32 %v928, %v1023
      %v1089 = vadd.f32 %v929, %v1023
      %v1090 = vadd.f32 %v930, %v1023
      %v1091 = vadd.f32 %v931, %v1028
      %v1092 = vadd.f32 %v932, %v1028
      %v1093 = vadd.f32 %v933, %v1028
      %v1094 = vadd.f32 %v934, %v1028
      %v1095 = vadd.f32 %v935, %v1033
      %v1096 = vadd.f32 %v936, %v1033
      %v1097 = vadd.f32 %v937, %v1033
      %v1098 = vadd.f32 %v938, %v1033
      %v1099 = vmax.f32 %v1035, 0.0
      %v1100 = vmax.f32 %v1036, 0.0
      %v1101 = vmax.f32 %v1037, 0.0
      %v1102 = vmax.f32 %v1038, 0.0
      %v1103 = vmax.f32 %v1039, 0.0
      %v1104 = vmax.f32 %v1040, 0.0
      %v1105 = vmax.f32 %v1041, 0.0
      %v1106 = vmax.f32 %v1042, 0.0
      %v1107 = vmax.f32 %v1043, 0.0
      %v1108 = vmax.f32 %v1044, 0.0
      %v1109 = vmax.f32 %v1045, 0.0
      %v1110 = vmax.f32 %v1046, 0.0
      %v1111 = vmax.f32 %v1047, 0.0
      %v1112 = vmax.f32 %v1048, 0.0
      %v1113 = vmax.f32 %v1049, 0.0
      %v1114 = vmax.f32 %v1050, 0.0
      %v1115 = vmax.f32 %v1051, 0.0
      %v1116 = vmax.f32 %v1052, 0.0
      %v1117 = vmax.f32 %v1053, 0.0
      %v1118 = vmax.f32 %v1054, 0.0
      %v1119 = vmax.f32 %v1055, 0.0
      %v1120 = vmax.f32 %v1056, 0.0
      %v1121 = vmax.f32 %v1057, 0.0
      %v1122 = vmax.f32 %v1058, 0.0
      %v1123 = vmax.f32 %v1059, 0.0
      %v1124 = vmax.f32 %v1060, 0.0
      %v1125 = vmax.f32 %v1061, 0.0
      %v1126 = vmax.f32 %v1062, 0.0
      %v1127 = vmax.f32 %v1063, 0.0
      %v1128 = vmax.f32 %v1064, 0.0
      %v1129 = vmax.f32 %v1065, 0.0
      %v1130 = vmax.f32 %v1066, 0.0
      %v1131 = vmax.f32 %v1067, 0.0
      %v1132 = vmax.f32 %v1068, 0.0
      %v1133 = vmax.f32 %v1069, 0.0
      %v1134 = vmax.f32 %v1070, 0.0
      %v1135 = vmax.f32 %v1071, 0.0
      %v1136 = vmax.f32 %v1072, 0.0
      %v1137 = vmax.f32 %v1073, 0.0
      %v1138 = vmax.f32 %v1074, 0.0
      %v1139 = vmax.f32 %v1075, 0.0
      %v1140 = vmax.f32 %v1076, 0.0
      %v1141 = vmax.f32 %v1077, 0.0
      %v1142 = vmax.f32 %v1078, 0.0
      %v1143 = vmax.f32 %v1079, 0.0
      %v1144 = vmax.f32 %v1080, 0.0
      %v1145 = vmax.f32 %v1081, 0.0
      %v1146 = vmax.f32 %v1082, 0.0
      %v1147 = vmax.f32 %v1083, 0.0
      %v1148 = vmax.f32 %v1084, 0.0
      %v1149 = vmax.f32 %v1085, 0.0
      %v1150 = vmax.f32 %v1086, 0.0
      %v1151 = vmax.f32 %v1087, 0.0
      %v1152 = vmax.f32 %v1088, 0.0
      %v1153 = vmax.f32 %v1089, 0.0
      %v1154 = vmax.f32 %v1090, 0.0
      %v1155 = vmax.f32 %v1091, 0.0
      %v1156 = vmax.f32 %v1092, 0.0
      %v1157 = vmax.f32 %v1093, 0.0
      %v1158 = vmax.f32 %v1094, 0.0
      %v1159 = vmax.f32 %v1095, 0.0
      %v1160 = vmax.f32 %v1096, 0.0
      %v1161 = vmax.f32 %v1097, 0.0
      %v1162 = vmax.f32 %v1098, 0.0
      %v1163 = vld [vmem:[%s3] sm:$0xf]
      %v1164 = vld [vmem:[%s3 + $0x4] sm:$0xf]
      %v1165 = vld [vmem:[%s3 + $0x8] sm:$0xf]
      %v1166 = vld [vmem:[%s3 + $0xc] sm:$0xf]
      %v1167 = vld [vmem:[%s3 + $0x10] sm:$0xf]
      %v1168 = vld [vmem:[%s3 + $0x14] sm:$0xf]
      %v1169 = vld [vmem:[%s3 + $0x18] sm:$0xf]
      %v1170 = vld [vmem:[%s3 + $0x1c] sm:$0xf]
      %v1171 = vld [vmem:[%s3 + $0x20] sm:$0xf]
      %v1172 = vld [vmem:[%s3 + $0x24] sm:$0xf]
      %v1173 = vld [vmem:[%s3 + $0x28] sm:$0xf]
      %v1174 = vld [vmem:[%s3 + $0x2c] sm:$0xf]
      %v1175 = vld [vmem:[%s3 + $0x30] sm:$0xf]
      %v1176 = vld [vmem:[%s3 + $0x34] sm:$0xf]
      %v1177 = vld [vmem:[%s3 + $0x38] sm:$0xf]
      %v1178 = vld [vmem:[%s3 + $0x3c] sm:$0xf]
      %v1179 = vpack.c.bf16 %v1103, %v1099
      %v1180 = vpack.c.bf16 %v1104, %v1100
      %v1181 = vpack.c.bf16 %v1105, %v1101
      %v1182 = vpack.c.bf16 %v1106, %v1102
      %v1183 = vpack.c.bf16 %v1111, %v1107
      %v1184 = vpack.c.bf16 %v1112, %v1108
      %v1185 = vpack.c.bf16 %v1113, %v1109
      %v1186 = vpack.c.bf16 %v1114, %v1110
      %v1187 = vpack.c.bf16 %v1119, %v1115
      %v1188 = vpack.c.bf16 %v1120, %v1116
      %v1189 = vpack.c.bf16 %v1121, %v1117
      %v1190 = vpack.c.bf16 %v1122, %v1118
      %v1191 = vpack.c.bf16 %v1127, %v1123
      %v1192 = vpack.c.bf16 %v1128, %v1124
      %v1193 = vpack.c.bf16 %v1129, %v1125
      %v1194 = vpack.c.bf16 %v1130, %v1126
      %v1195 = vpack.c.bf16 %v1135, %v1131
      %v1196 = vpack.c.bf16 %v1136, %v1132
      %v1197 = vpack.c.bf16 %v1137, %v1133
      %v1198 = vpack.c.bf16 %v1138, %v1134
      %v1199 = vpack.c.bf16 %v1143, %v1139
      %v1200 = vpack.c.bf16 %v1144, %v1140
      %v1201 = vpack.c.bf16 %v1145, %v1141
      %v1202 = vpack.c.bf16 %v1146, %v1142
      %v1203 = vpack.c.bf16 %v1151, %v1147
      %v1204 = vpack.c.bf16 %v1152, %v1148
      %v1205 = vpack.c.bf16 %v1153, %v1149
      %v1206 = vpack.c.bf16 %v1154, %v1150
      %v1207 = vpack.c.bf16 %v1159, %v1155
      %v1208 = vpack.c.bf16 %v1160, %v1156
      %v1209 = vpack.c.bf16 %v1161, %v1157
      %v1210 = vpack.c.bf16 %v1162, %v1158
      %v1211 = vld [vmem:[%s4] sm:$0xff]
      %v1212 = vld [vmem:[%s4 + $0x8] sm:$0xff]
      %v1213 = vld [vmem:[%s4 + $0x10] sm:$0xff]
      %v1214 = vld [vmem:[%s4 + $0x18] sm:$0xff]
      %v1215 = vld [vmem:[%s4 + $0x20] sm:$0xff]
      %v1216 = vld [vmem:[%s4 + $0x28] sm:$0xff]
      %v1217 = vld [vmem:[%s4 + $0x30] sm:$0xff]
      %v1218 = vld [vmem:[%s4 + $0x38] sm:$0xff]
      %v1219 = vld [vmem:[%s4 + $0x40] sm:$0xff]
      %v1220 = vld [vmem:[%s4 + $0x48] sm:$0xff]
      %v1221 = vld [vmem:[%s4 + $0x50] sm:$0xff]
      %v1222 = vld [vmem:[%s4 + $0x58] sm:$0xff]
      %v1223 = vld [vmem:[%s4 + $0x60] sm:$0xff]
      %v1224 = vld [vmem:[%s4 + $0x68] sm:$0xff]
      %v1225 = vld [vmem:[%s4 + $0x70] sm:$0xff]
      %v1226 = vld [vmem:[%s4 + $0x78] sm:$0xff]
      %1228 = vset.pattern.permute.xlu0 0
      %1229 = vperm.xlu0 %1228, %v1211
      %v1230 = vpop.permute.xlu0 %1229
      %1233 = vset.pattern.permute.xlu0 0
      %1234 = vperm.xlu0 %1233, %v1212
      %v1235 = vpop.permute.xlu0 %1234
      %1238 = vset.pattern.permute.xlu0 0
      %1239 = vperm.xlu0 %1238, %v1213
      %v1240 = vpop.permute.xlu0 %1239
      %1243 = vset.pattern.permute.xlu0 0
      %1244 = vperm.xlu0 %1243, %v1214
      %v1245 = vpop.permute.xlu0 %1244
      %1248 = vset.pattern.permute.xlu0 0
      %1249 = vperm.xlu0 %1248, %v1215
      %v1250 = vpop.permute.xlu0 %1249
      %1253 = vset.pattern.permute.xlu0 0
      %1254 = vperm.xlu0 %1253, %v1216
      %v1255 = vpop.permute.xlu0 %1254
      %1258 = vset.pattern.permute.xlu0 0
      %1259 = vperm.xlu0 %1258, %v1217
      %v1260 = vpop.permute.xlu0 %1259
      %1263 = vset.pattern.permute.xlu0 0
      %1264 = vperm.xlu0 %1263, %v1218
      %v1265 = vpop.permute.xlu0 %1264
      %1268 = vset.pattern.permute.xlu0 0
      %1269 = vperm.xlu0 %1268, %v1219
      %v1270 = vpop.permute.xlu0 %1269
      %1273 = vset.pattern.permute.xlu0 0
      %1274 = vperm.xlu0 %1273, %v1220
      %v1275 = vpop.permute.xlu0 %1274
      %1278 = vset.pattern.permute.xlu0 0
      %1279 = vperm.xlu0 %1278, %v1221
      %v1280 = vpop.permute.xlu0 %1279
      %1283 = vset.pattern.permute.xlu0 0
      %1284 = vperm.xlu0 %1283, %v1222
      %v1285 = vpop.permute.xlu0 %1284
      %1288 = vset.pattern.permute.xlu0 0
      %1289 = vperm.xlu0 %1288, %v1223
      %v1290 = vpop.permute.xlu0 %1289
      %1293 = vset.pattern.permute.xlu0 0
      %1294 = vperm.xlu0 %1293, %v1224
      %v1295 = vpop.permute.xlu0 %1294
      %1298 = vset.pattern.permute.xlu0 0
      %1299 = vperm.xlu0 %1298, %v1225
      %v1300 = vpop.permute.xlu0 %1299
      %1303 = vset.pattern.permute.xlu0 0
      %1304 = vperm.xlu0 %1303, %v1226
      %v1305 = vpop.permute.xlu0 %1304
      %v1323 = vunpack.c.l.b16 %v1163
      %v1324 = vunpack.c.l.b16 %v1164
      %v1325 = vunpack.c.l.b16 %v1165
      %v1326 = vunpack.c.l.b16 %v1166
      %v1327 = vunpack.c.l.b16 %v1167
      %v1328 = vunpack.c.l.b16 %v1168
      %v1329 = vunpack.c.l.b16 %v1169
      %v1330 = vunpack.c.l.b16 %v1170
      %v1331 = vunpack.c.l.b16 %v1171
      %v1332 = vunpack.c.l.b16 %v1172
      %v1333 = vunpack.c.l.b16 %v1173
      %v1334 = vunpack.c.l.b16 %v1174
      %v1335 = vunpack.c.l.b16 %v1175
      %v1336 = vunpack.c.l.b16 %v1176
      %v1337 = vunpack.c.l.b16 %v1177
      %v1338 = vunpack.c.l.b16 %v1178
      %v1339 = vpack.c.b16 %v1324, %v1323
      %v1340 = vpack.c.b16 %v1326, %v1325
      %v1341 = vpack.c.b16 %v1328, %v1327
      %v1342 = vpack.c.b16 %v1330, %v1329
      %v1343 = vpack.c.b16 %v1332, %v1331
      %v1344 = vpack.c.b16 %v1334, %v1333
      %v1345 = vpack.c.b16 %v1336, %v1335
      %v1346 = vpack.c.b16 %v1338, %v1337
      %1355 = vmatprep.subr.bf16.mxu0 %v1180
      %1356 = vmatpush1.bf16.msra.mxu0 %v1179
      %1357 = vmatprep.subr.bf16.mxu0 %v1184
      %1358 = vmatpush1.bf16.msra.mxu0 %v1183
      %1359 = vmatprep.subr.bf16.mxu0 %v1188
      %1360 = vmatpush1.bf16.msra.mxu0 %v1187
      %1361 = vmatprep.subr.bf16.mxu0 %v1192
      %1362 = vmatpush1.bf16.msra.mxu0 %v1191
      %1363 = vmatprep.subr.bf16.mxu0 %v1196
      %1364 = vmatpush1.bf16.msra.mxu0 %v1195
      %1365 = vmatprep.subr.bf16.mxu0 %v1200
      %1366 = vmatpush1.bf16.msra.mxu0 %v1199
      %1367 = vmatprep.subr.bf16.mxu0 %v1204
      %1368 = vmatpush1.bf16.msra.mxu0 %v1203
      %1369 = vmatprep.subr.bf16.mxu0 %v1208
      %1370 = vmatpush1.bf16.msra.mxu0 %v1207
      %1371 = vmatprep.subr.bf16.mxu0 0
      %1372 = vmatpush1.bf16.msra.mxu0 0
      %1373 = vmatprep.subr.bf16.mxu0 0
      %1374 = vmatpush1.bf16.msra.mxu0 0
      %1375 = vmatprep.subr.bf16.mxu0 0
      %1376 = vmatpush1.bf16.msra.mxu0 0
      %1377 = vmatprep.subr.bf16.mxu0 0
      %1378 = vmatpush1.bf16.msra.mxu0 0
      %1379 = vmatprep.subr.bf16.mxu0 0
      %1380 = vmatpush1.bf16.msra.mxu0 0
      %1381 = vmatprep.subr.bf16.mxu0 0
      %1382 = vmatpush1.bf16.msra.mxu0 0
      %1383 = vmatprep.subr.bf16.mxu0 0
      %1384 = vmatpush1.bf16.msra.mxu0 0
      %1385 = vmatprep.subr.bf16.mxu0 0
      %1386 = vmatpush1.bf16.msra.mxu0 0
      %1387 = vmatprep.mubr.bf16.mxu0 0
      %1388 = vmatmul.mubr.bf16.gmra.mrb[0].mxu0 %v1339
      %v1389 = vpop.f32.mrb[0].mxu0
      %v1390 = vadd.f32 %v1230, %v1389
      %v1391 = vpop.f32.mrb[0].mxu0
      %v1392 = vadd.f32 %v1230, %v1391
      %v1393 = vpop.f32.mrb[0].mxu0
      %v1394 = vadd.f32 %v1235, %v1393
      %v1395 = vpop.f32.mrb[0].mxu0
      %v1396 = vadd.f32 %v1235, %v1395
      %1397 = vmatprep.mubr.bf16.mxu0 0
      %1398 = vmatmul.mubr.bf16.gmra.mrb[0].mxu0 %v1340
      %v1399 = vpop.f32.mrb[0].mxu0
      %v1400 = vadd.f32 %v1240, %v1399
      %v1401 = vpop.f32.mrb[0].mxu0
      %v1402 = vadd.f32 %v1240, %v1401
      %v1403 = vpop.f32.mrb[0].mxu0
      %v1404 = vadd.f32 %v1245, %v1403
      %v1405 = vpop.f32.mrb[0].mxu0
      %v1406 = vadd.f32 %v1245, %v1405
      %1407 = vmatprep.mubr.bf16.mxu0 0
      %1408 = vmatmul.mubr.bf16.gmra.mrb[0].mxu0 %v1341
      %v1409 = vpop.f32.mrb[0].mxu0
      %v1410 = vadd.f32 %v1250, %v1409
      %v1411 = vpop.f32.mrb[0].mxu0
      %v1412 = vadd.f32 %v1250, %v1411
      %v1413 = vpop.f32.mrb[0].mxu0
      %v1414 = vadd.f32 %v1255, %v1413
      %v1415 = vpop.f32.mrb[0].mxu0
      %v1416 = vadd.f32 %v1255, %v1415
      %1417 = vmatprep.mubr.bf16.mxu0 0
      %1418 = vmatmul.mubr.bf16.gmra.mrb[0].mxu0 %v1342
      %v1419 = vpop.f32.mrb[0].mxu0
      %v1420 = vadd.f32 %v1260, %v1419
      %v1421 = vpop.f32.mrb[0].mxu0
      %v1422 = vadd.f32 %v1260, %v1421
      %v1423 = vpop.f32.mrb[0].mxu0
      %v1424 = vadd.f32 %v1265, %v1423
      %v1425 = vpop.f32.mrb[0].mxu0
      %v1426 = vadd.f32 %v1265, %v1425
      %1427 = vmatprep.mubr.bf16.mxu0 0
      %1428 = vmatmul.mubr.bf16.gmra.mrb[0].mxu0 %v1343
      %v1429 = vpop.f32.mrb[0].mxu0
      %v1430 = vadd.f32 %v1270, %v1429
      %v1431 = vpop.f32.mrb[0].mxu0
      %v1432 = vadd.f32 %v1270, %v1431
      %v1433 = vpop.f32.mrb[0].mxu0
      %v1434 = vadd.f32 %v1275, %v1433
      %v1435 = vpop.f32.mrb[0].mxu0
      %v1436 = vadd.f32 %v1275, %v1435
      %1437 = vmatprep.mubr.bf16.mxu0 0
      %1438 = vmatmul.mubr.bf16.gmra.mrb[0].mxu0 %v1344
      %v1439 = vpop.f32.mrb[0].mxu0
      %v1440 = vadd.f32 %v1280, %v1439
      %v1441 = vpop.f32.mrb[0].mxu0
      %v1442 = vadd.f32 %v1280, %v1441
      %v1443 = vpop.f32.mrb[0].mxu0
      %v1444 = vadd.f32 %v1285, %v1443
      %v1445 = vpop.f32.mrb[0].mxu0
      %v1446 = vadd.f32 %v1285, %v1445
      %1447 = vmatprep.mubr.bf16.mxu0 0
      %1448 = vmatmul.mubr.bf16.gmra.mrb[0].mxu0 %v1345
      %v1449 = vpop.f32.mrb[0].mxu0
      %v1450 = vadd.f32 %v1290, %v1449
      %v1451 = vpop.f32.mrb[0].mxu0
      %v1452 = vadd.f32 %v1290, %v1451
      %v1453 = vpop.f32.mrb[0].mxu0
      %v1454 = vadd.f32 %v1295, %v1453
      %v1455 = vpop.f32.mrb[0].mxu0
      %v1456 = vadd.f32 %v1295, %v1455
      %1457 = vmatprep.mubr.bf16.mxu0 0
      %1458 = vmatmul.mubr.bf16.gmra.mrb[0].mxu0 %v1346
      %v1459 = vpop.f32.mrb[0].mxu0
      %v1460 = vadd.f32 %v1300, %v1459
      %v1461 = vpop.f32.mrb[0].mxu0
      %v1462 = vadd.f32 %v1300, %v1461
      %v1463 = vpop.f32.mrb[0].mxu0
      %v1464 = vadd.f32 %v1305, %v1463
      %v1465 = vpop.f32.mrb[0].mxu0
      %v1466 = vadd.f32 %v1305, %v1465
      %1467 = vdwg.mxu0
      %1468 = vmatprep.subr.bf16.mxu0 %v1182
      %1469 = vmatpush1.bf16.msra.mxu0 %v1181
      %1470 = vmatprep.subr.bf16.mxu0 %v1186
      %1471 = vmatpush1.bf16.msra.mxu0 %v1185
      %1472 = vmatprep.subr.bf16.mxu0 %v1190
      %1473 = vmatpush1.bf16.msra.mxu0 %v1189
      %1474 = vmatprep.subr.bf16.mxu0 %v1194
      %1475 = vmatpush1.bf16.msra.mxu0 %v1193
      %1476 = vmatprep.subr.bf16.mxu0 %v1198
      %1477 = vmatpush1.bf16.msra.mxu0 %v1197
      %1478 = vmatprep.subr.bf16.mxu0 %v1202
      %1479 = vmatpush1.bf16.msra.mxu0 %v1201
      %1480 = vmatprep.subr.bf16.mxu0 %v1206
      %1481 = vmatpush1.bf16.msra.mxu0 %v1205
      %1482 = vmatprep.subr.bf16.mxu0 %v1210
      %1483 = vmatpush1.bf16.msra.mxu0 %v1209
      %1484 = vmatprep.subr.bf16.mxu0 0
      %1485 = vmatpush1.bf16.msra.mxu0 0
      %1486 = vmatprep.subr.bf16.mxu0 0
      %1487 = vmatpush1.bf16.msra.mxu0 0
      %1488 = vmatprep.subr.bf16.mxu0 0
      %1489 = vmatpush1.bf16.msra.mxu0 0
      %1490 = vmatprep.subr.bf16.mxu0 0
      %1491 = vmatpush1.bf16.msra.mxu0 0
      %1492 = vmatprep.subr.bf16.mxu0 0
      %1493 = vmatpush1.bf16.msra.mxu0 0
      %1494 = vmatprep.subr.bf16.mxu0 0
      %1495 = vmatpush1.bf16.msra.mxu0 0
      %1496 = vmatprep.subr.bf16.mxu0 0
      %1497 = vmatpush1.bf16.msra.mxu0 0
      %1498 = vmatprep.subr.bf16.mxu0 0
      %1499 = vmatpush1.bf16.msra.mxu0 0
      %1500 = vmatprep.mubr.bf16.mxu0 0
      %1501 = vmatmul.mubr.bf16.gmra.mrb[0].mxu0 %v1339
      %v1502 = vpop.f32.mrb[0].mxu0
      %v1503 = vadd.f32 %v1230, %v1502
      %v1504 = vpop.f32.mrb[0].mxu0
      %v1505 = vadd.f32 %v1230, %v1504
      %v1506 = vpop.f32.mrb[0].mxu0
      %v1507 = vadd.f32 %v1235, %v1506
      %v1508 = vpop.f32.mrb[0].mxu0
      %v1509 = vadd.f32 %v1235, %v1508
      %1510 = vmatprep.mubr.bf16.mxu0 0
      %1511 = vmatmul.mubr.bf16.gmra.mrb[0].mxu0 %v1340
      %v1512 = vpop.f32.mrb[0].mxu0
      %v1513 = vadd.f32 %v1240, %v1512
      %v1514 = vpop.f32.mrb[0].mxu0
      %v1515 = vadd.f32 %v1240, %v1514
      %v1516 = vpop.f32.mrb[0].mxu0
      %v1517 = vadd.f32 %v1245, %v1516
      %v1518 = vpop.f32.mrb[0].mxu0
      %v1519 = vadd.f32 %v1245, %v1518
      %1520 = vmatprep.mubr.bf16.mxu0 0
      %1521 = vmatmul.mubr.bf16.gmra.mrb[0].mxu0 %v1341
      %v1522 = vpop.f32.mrb[0].mxu0
      %v1523 = vadd.f32 %v1250, %v1522
      %v1524 = vpop.f32.mrb[0].mxu0
      %v1525 = vadd.f32 %v1250, %v1524
      %v1526 = vpop.f32.mrb[0].mxu0
      %v1527 = vadd.f32 %v1255, %v1526
      %v1528 = vpop.f32.mrb[0].mxu0
      %v1529 = vadd.f32 %v1255, %v1528
      %1530 = vmatprep.mubr.bf16.mxu0 0
      %1531 = vmatmul.mubr.bf16.gmra.mrb[0].mxu0 %v1342
      %v1532 = vpop.f32.mrb[0].mxu0
      %v1533 = vadd.f32 %v1260, %v1532
      %v1534 = vpop.f32.mrb[0].mxu0
      %v1535 = vadd.f32 %v1260, %v1534
      %v1536 = vpop.f32.mrb[0].mxu0
      %v1537 = vadd.f32 %v1265, %v1536
      %v1538 = vpop.f32.mrb[0].mxu0
      %v1539 = vadd.f32 %v1265, %v1538
      %1540 = vmatprep.mubr.bf16.mxu0 0
      %1541 = vmatmul.mubr.bf16.gmra.mrb[0].mxu0 %v1343
      %v1542 = vpop.f32.mrb[0].mxu0
      %v1543 = vadd.f32 %v1270, %v1542
      %v1544 = vpop.f32.mrb[0].mxu0
      %v1545 = vadd.f32 %v1270, %v1544
      %v1546 = vpop.f32.mrb[0].mxu0
      %v1547 = vadd.f32 %v1275, %v1546
      %v1548 = vpop.f32.mrb[0].mxu0
      %v1549 = vadd.f32 %v1275, %v1548
      %1550 = vmatprep.mubr.bf16.mxu0 0
      %1551 = vmatmul.mubr.bf16.gmra.mrb[0].mxu0 %v1344
      %v1552 = vpop.f32.mrb[0].mxu0
      %v1553 = vadd.f32 %v1280, %v1552
      %v1554 = vpop.f32.mrb[0].mxu0
      %v1555 = vadd.f32 %v1280, %v1554
      %v1556 = vpop.f32.mrb[0].mxu0
      %v1557 = vadd.f32 %v1285, %v1556
      %v1558 = vpop.f32.mrb[0].mxu0
      %v1559 = vadd.f32 %v1285, %v1558
      %1560 = vmatprep.mubr.bf16.mxu0 0
      %1561 = vmatmul.mubr.bf16.gmra.mrb[0].mxu0 %v1345
      %v1562 = vpop.f32.mrb[0].mxu0
      %v1563 = vadd.f32 %v1290, %v1562
      %v1564 = vpop.f32.mrb[0].mxu0
      %v1565 = vadd.f32 %v1290, %v1564
      %v1566 = vpop.f32.mrb[0].mxu0
      %v1567 = vadd.f32 %v1295, %v1566
      %v1568 = vpop.f32.mrb[0].mxu0
      %v1569 = vadd.f32 %v1295, %v1568
      %1570 = vmatprep.mubr.bf16.mxu0 0
      %1571 = vmatmul.mubr.bf16.gmra.mrb[0].mxu0 %v1346
      %v1572 = vpop.f32.mrb[0].mxu0
      %v1573 = vadd.f32 %v1300, %v1572
      %v1574 = vpop.f32.mrb[0].mxu0
      %v1575 = vadd.f32 %v1300, %v1574
      %v1576 = vpop.f32.mrb[0].mxu0
      %v1577 = vadd.f32 %v1305, %v1576
      %v1578 = vpop.f32.mrb[0].mxu0
      %v1579 = vadd.f32 %v1305, %v1578
      %1580 = vdwg.mxu0
      %v1581 = vmax.f32 %v1390, 0.0
      %v1582 = vmax.f32 %v1392, 0.0
      %v1583 = vmax.f32 %v1503, 0.0
      %v1584 = vmax.f32 %v1505, 0.0
      %v1585 = vmax.f32 %v1394, 0.0
      %v1586 = vmax.f32 %v1396, 0.0
      %v1587 = vmax.f32 %v1507, 0.0
      %v1588 = vmax.f32 %v1509, 0.0
      %v1589 = vmax.f32 %v1400, 0.0
      %v1590 = vmax.f32 %v1402, 0.0
      %v1591 = vmax.f32 %v1513, 0.0
      %v1592 = vmax.f32 %v1515, 0.0
      %v1593 = vmax.f32 %v1404, 0.0
      %v1594 = vmax.f32 %v1406, 0.0
      %v1595 = vmax.f32 %v1517, 0.0
      %v1596 = vmax.f32 %v1519, 0.0
      %v1597 = vmax.f32 %v1410, 0.0
      %v1598 = vmax.f32 %v1412, 0.0
      %v1599 = vmax.f32 %v1523, 0.0
      %v1600 = vmax.f32 %v1525, 0.0
      %v1601 = vmax.f32 %v1414, 0.0
      %v1602 = vmax.f32 %v1416, 0.0
      %v1603 = vmax.f32 %v1527, 0.0
      %v1604 = vmax.f32 %v1529, 0.0
      %v1605 = vmax.f32 %v1420, 0.0
      %v1606 = vmax.f32 %v1422, 0.0
      %v1607 = vmax.f32 %v1533, 0.0
      %v1608 = vmax.f32 %v1535, 0.0
      %v1609 = vmax.f32 %v1424, 0.0
      %v1610 = vmax.f32 %v1426, 0.0
      %v1611 = vmax.f32 %v1537, 0.0
      %v1612 = vmax.f32 %v1539, 0.0
      %v1613 = vmax.f32 %v1430, 0.0
      %v1614 = vmax.f32 %v1432, 0.0
      %v1615 = vmax.f32 %v1543, 0.0
      %v1616 = vmax.f32 %v1545, 0.0
      %v1617 = vmax.f32 %v1434, 0.0
      %v1618 = vmax.f32 %v1436, 0.0
      %v1619 = vmax.f32 %v1547, 0.0
      %v1620 = vmax.f32 %v1549, 0.0
      %v1621 = vmax.f32 %v1440, 0.0
      %v1622 = vmax.f32 %v1442, 0.0
      %v1623 = vmax.f32 %v1553, 0.0
      %v1624 = vmax.f32 %v1555, 0.0
      %v1625 = vmax.f32 %v1444, 0.0
      %v1626 = vmax.f32 %v1446, 0.0
      %v1627 = vmax.f32 %v1557, 0.0
      %v1628 = vmax.f32 %v1559, 0.0
      %v1629 = vmax.f32 %v1450, 0.0
      %v1630 = vmax.f32 %v1452, 0.0
      %v1631 = vmax.f32 %v1563, 0.0
      %v1632 = vmax.f32 %v1565, 0.0
      %v1633 = vmax.f32 %v1454, 0.0
      %v1634 = vmax.f32 %v1456, 0.0
      %v1635 = vmax.f32 %v1567, 0.0
      %v1636 = vmax.f32 %v1569, 0.0
      %v1637 = vmax.f32 %v1460, 0.0
      %v1638 = vmax.f32 %v1462, 0.0
      %v1639 = vmax.f32 %v1573, 0.0
      %v1640 = vmax.f32 %v1575, 0.0
      %v1641 = vmax.f32 %v1464, 0.0
      %v1642 = vmax.f32 %v1466, 0.0
      %v1643 = vmax.f32 %v1577, 0.0
      %v1644 = vmax.f32 %v1579, 0.0
      %s1645 = scalar_lea.vmem %s3, 64
      %v1646 = vld [vmem:[%s1645] sm:$0xf]
      %v1647 = vld [vmem:[%s1645 + $0x4] sm:$0xf]
      %v1648 = vld [vmem:[%s1645 + $0x8] sm:$0xf]
      %v1649 = vld [vmem:[%s1645 + $0xc] sm:$0xf]
      %v1650 = vld [vmem:[%s1645 + $0x10] sm:$0xf]
      %v1651 = vld [vmem:[%s1645 + $0x14] sm:$0xf]
      %v1652 = vld [vmem:[%s1645 + $0x18] sm:$0xf]
      %v1653 = vld [vmem:[%s1645 + $0x1c] sm:$0xf]
      %v1654 = vld [vmem:[%s1645 + $0x20] sm:$0xf]
      %v1655 = vld [vmem:[%s1645 + $0x24] sm:$0xf]
      %v1656 = vld [vmem:[%s1645 + $0x28] sm:$0xf]
      %v1657 = vld [vmem:[%s1645 + $0x2c] sm:$0xf]
      %v1658 = vld [vmem:[%s1645 + $0x30] sm:$0xf]
      %v1659 = vld [vmem:[%s1645 + $0x34] sm:$0xf]
      %v1660 = vld [vmem:[%s1645 + $0x38] sm:$0xf]
      %v1661 = vld [vmem:[%s1645 + $0x3c] sm:$0xf]
      %v1662 = vpack.c.bf16 %v1585, %v1581
      %v1663 = vpack.c.bf16 %v1586, %v1582
      %v1664 = vpack.c.bf16 %v1587, %v1583
      %v1665 = vpack.c.bf16 %v1588, %v1584
      %v1666 = vpack.c.bf16 %v1593, %v1589
      %v1667 = vpack.c.bf16 %v1594, %v1590
      %v1668 = vpack.c.bf16 %v1595, %v1591
      %v1669 = vpack.c.bf16 %v1596, %v1592
      %v1670 = vpack.c.bf16 %v1601, %v1597
      %v1671 = vpack.c.bf16 %v1602, %v1598
      %v1672 = vpack.c.bf16 %v1603, %v1599
      %v1673 = vpack.c.bf16 %v1604, %v1600
      %v1674 = vpack.c.bf16 %v1609, %v1605
      %v1675 = vpack.c.bf16 %v1610, %v1606
      %v1676 = vpack.c.bf16 %v1611, %v1607
      %v1677 = vpack.c.bf16 %v1612, %v1608
      %v1678 = vpack.c.bf16 %v1617, %v1613
      %v1679 = vpack.c.bf16 %v1618, %v1614
      %v1680 = vpack.c.bf16 %v1619, %v1615
      %v1681 = vpack.c.bf16 %v1620, %v1616
      %v1682 = vpack.c.bf16 %v1625, %v1621
      %v1683 = vpack.c.bf16 %v1626, %v1622
      %v1684 = vpack.c.bf16 %v1627, %v1623
      %v1685 = vpack.c.bf16 %v1628, %v1624
      %v1686 = vpack.c.bf16 %v1633, %v1629
      %v1687 = vpack.c.bf16 %v1634, %v1630
      %v1688 = vpack.c.bf16 %v1635, %v1631
      %v1689 = vpack.c.bf16 %v1636, %v1632
      %v1690 = vpack.c.bf16 %v1641, %v1637
      %v1691 = vpack.c.bf16 %v1642, %v1638
      %v1692 = vpack.c.bf16 %v1643, %v1639
      %v1693 = vpack.c.bf16 %v1644, %v1640
      %s1694 = scalar_lea.vmem %s4, 128
      %v1695 = vld [vmem:[%s1694] sm:$0xff]
      %v1696 = vld [vmem:[%s1694 + $0x8] sm:$0xff]
      %v1697 = vld [vmem:[%s1694 + $0x10] sm:$0xff]
      %v1698 = vld [vmem:[%s1694 + $0x18] sm:$0xff]
      %v1699 = vld [vmem:[%s1694 + $0x20] sm:$0xff]
      %v1700 = vld [vmem:[%s1694 + $0x28] sm:$0xff]
      %v1701 = vld [vmem:[%s1694 + $0x30] sm:$0xff]
      %v1702 = vld [vmem:[%s1694 + $0x38] sm:$0xff]
      %v1703 = vld [vmem:[%s1694 + $0x40] sm:$0xff]
      %v1704 = vld [vmem:[%s1694 + $0x48] sm:$0xff]
      %v1705 = vld [vmem:[%s1694 + $0x50] sm:$0xff]
      %v1706 = vld [vmem:[%s1694 + $0x58] sm:$0xff]
      %v1707 = vld [vmem:[%s1694 + $0x60] sm:$0xff]
      %v1708 = vld [vmem:[%s1694 + $0x68] sm:$0xff]
      %v1709 = vld [vmem:[%s1694 + $0x70] sm:$0xff]
      %v1710 = vld [vmem:[%s1694 + $0x78] sm:$0xff]
      %1712 = vset.pattern.permute.xlu0 0
      %1713 = vperm.xlu0 %1712, %v1695
      %v1714 = vpop.permute.xlu0 %1713
      %1717 = vset.pattern.permute.xlu0 0
      %1718 = vperm.xlu0 %1717, %v1696
      %v1719 = vpop.permute.xlu0 %1718
      %1722 = vset.pattern.permute.xlu0 0
      %1723 = vperm.xlu0 %1722, %v1697
      %v1724 = vpop.permute.xlu0 %1723
      %1727 = vset.pattern.permute.xlu0 0
      %1728 = vperm.xlu0 %1727, %v1698
      %v1729 = vpop.permute.xlu0 %1728
      %1732 = vset.pattern.permute.xlu0 0
      %1733 = vperm.xlu0 %1732, %v1699
      %v1734 = vpop.permute.xlu0 %1733
      %1737 = vset.pattern.permute.xlu0 0
      %1738 = vperm.xlu0 %1737, %v1700
      %v1739 = vpop.permute.xlu0 %1738
      %1742 = vset.pattern.permute.xlu0 0
      %1743 = vperm.xlu0 %1742, %v1701
      %v1744 = vpop.permute.xlu0 %1743
      %1747 = vset.pattern.permute.xlu0 0
      %1748 = vperm.xlu0 %1747, %v1702
      %v1749 = vpop.permute.xlu0 %1748
      %1752 = vset.pattern.permute.xlu0 0
      %1753 = vperm.xlu0 %1752, %v1703
      %v1754 = vpop.permute.xlu0 %1753
      %1757 = vset.pattern.permute.xlu0 0
      %1758 = vperm.xlu0 %1757, %v1704
      %v1759 = vpop.permute.xlu0 %1758
      %1762 = vset.pattern.permute.xlu0 0
      %1763 = vperm.xlu0 %1762, %v1705
      %v1764 = vpop.permute.xlu0 %1763
      %1767 = vset.pattern.permute.xlu0 0
      %1768 = vperm.xlu0 %1767, %v1706
      %v1769 = vpop.permute.xlu0 %1768
      %1772 = vset.pattern.permute.xlu0 0
      %1773 = vperm.xlu0 %1772, %v1707
      %v1774 = vpop.permute.xlu0 %1773
      %1777 = vset.pattern.permute.xlu0 0
      %1778 = vperm.xlu0 %1777, %v1708
      %v1779 = vpop.permute.xlu0 %1778
      %1782 = vset.pattern.permute.xlu0 0
      %1783 = vperm.xlu0 %1782, %v1709
      %v1784 = vpop.permute.xlu0 %1783
      %1787 = vset.pattern.permute.xlu0 0
      %1788 = vperm.xlu0 %1787, %v1710
      %v1789 = vpop.permute.xlu0 %1788
      %v1807 = vunpack.c.l.b16 %v1646
      %v1808 = vunpack.c.l.b16 %v1647
      %v1809 = vunpack.c.l.b16 %v1648
      %v1810 = vunpack.c.l.b16 %v1649
      %v1811 = vunpack.c.l.b16 %v1650
      %v1812 = vunpack.c.l.b16 %v1651
      %v1813 = vunpack.c.l.b16 %v1652
      %v1814 = vunpack.c.l.b16 %v1653
      %v1815 = vunpack.c.l.b16 %v1654
      %v1816 = vunpack.c.l.b16 %v1655
      %v1817 = vunpack.c.l.b16 %v1656
      %v1818 = vunpack.c.l.b16 %v1657
      %v1819 = vunpack.c.l.b16 %v1658
      %v1820 = vunpack.c.l.b16 %v1659
      %v1821 = vunpack.c.l.b16 %v1660
      %v1822 = vunpack.c.l.b16 %v1661
      %v1823 = vpack.c.b16 %v1808, %v1807
      %v1824 = vpack.c.b16 %v1810, %v1809
      %v1825 = vpack.c.b16 %v1812, %v1811
      %v1826 = vpack.c.b16 %v1814, %v1813
      %v1827 = vpack.c.b16 %v1816, %v1815
      %v1828 = vpack.c.b16 %v1818, %v1817
      %v1829 = vpack.c.b16 %v1820, %v1819
      %v1830 = vpack.c.b16 %v1822, %v1821
      %1839 = vmatprep.subr.bf16.mxu0 %v1663
      %1840 = vmatpush1.bf16.msra.mxu0 %v1662
      %1841 = vmatprep.subr.bf16.mxu0 %v1667
      %1842 = vmatpush1.bf16.msra.mxu0 %v1666
      %1843 = vmatprep.subr.bf16.mxu0 %v1671
      %1844 = vmatpush1.bf16.msra.mxu0 %v1670
      %1845 = vmatprep.subr.bf16.mxu0 %v1675
      %1846 = vmatpush1.bf16.msra.mxu0 %v1674
      %1847 = vmatprep.subr.bf16.mxu0 %v1679
      %1848 = vmatpush1.bf16.msra.mxu0 %v1678
      %1849 = vmatprep.subr.bf16.mxu0 %v1683
      %1850 = vmatpush1.bf16.msra.mxu0 %v1682
      %1851 = vmatprep.subr.bf16.mxu0 %v1687
      %1852 = vmatpush1.bf16.msra.mxu0 %v1686
      %1853 = vmatprep.subr.bf16.mxu0 %v1691
      %1854 = vmatpush1.bf16.msra.mxu0 %v1690
      %1855 = vmatprep.subr.bf16.mxu0 0
      %1856 = vmatpush1.bf16.msra.mxu0 0
      %1857 = vmatprep.subr.bf16.mxu0 0
      %1858 = vmatpush1.bf16.msra.mxu0 0
      %1859 = vmatprep.subr.bf16.mxu0 0
      %1860 = vmatpush1.bf16.msra.mxu0 0
      %1861 = vmatprep.subr.bf16.mxu0 0
      %1862 = vmatpush1.bf16.msra.mxu0 0
      %1863 = vmatprep.subr.bf16.mxu0 0
      %1864 = vmatpush1.bf16.msra.mxu0 0
      %1865 = vmatprep.subr.bf16.mxu0 0
      %1866 = vmatpush1.bf16.msra.mxu0 0
      %1867 = vmatprep.subr.bf16.mxu0 0
      %1868 = vmatpush1.bf16.msra.mxu0 0
      %1869 = vmatprep.subr.bf16.mxu0 0
      %1870 = vmatpush1.bf16.msra.mxu0 0
      %1871 = vmatprep.mubr.bf16.mxu0 0
      %1872 = vmatmul.mubr.bf16.gmra.mrb[0].mxu0 %v1823
      %v1873 = vpop.f32.mrb[0].mxu0
      %v1874 = vadd.f32 %v1714, %v1873
      %v1875 = vpop.f32.mrb[0].mxu0
      %v1876 = vadd.f32 %v1714, %v1875
      %v1877 = vpop.f32.mrb[0].mxu0
      %v1878 = vadd.f32 %v1719, %v1877
      %v1879 = vpop.f32.mrb[0].mxu0
      %v1880 = vadd.f32 %v1719, %v1879
      %1881 = vmatprep.mubr.bf16.mxu0 0
      %1882 = vmatmul.mubr.bf16.gmra.mrb[0].mxu0 %v1824
      %v1883 = vpop.f32.mrb[0].mxu0
      %v1884 = vadd.f32 %v1724, %v1883
      %v1885 = vpop.f32.mrb[0].mxu0
      %v1886 = vadd.f32 %v1724, %v1885
      %v1887 = vpop.f32.mrb[0].mxu0
      %v1888 = vadd.f32 %v1729, %v1887
      %v1889 = vpop.f32.mrb[0].mxu0
      %v1890 = vadd.f32 %v1729, %v1889
      %1891 = vmatprep.mubr.bf16.mxu0 0
      %1892 = vmatmul.mubr.bf16.gmra.mrb[0].mxu0 %v1825
      %v1893 = vpop.f32.mrb[0].mxu0
      %v1894 = vadd.f32 %v1734, %v1893
      %v1895 = vpop.f32.mrb[0].mxu0
      %v1896 = vadd.f32 %v1734, %v1895
      %v1897 = vpop.f32.mrb[0].mxu0
      %v1898 = vadd.f32 %v1739, %v1897
      %v1899 = vpop.f32.mrb[0].mxu0
      %v1900 = vadd.f32 %v1739, %v1899
      %1901 = vmatprep.mubr.bf16.mxu0 0
      %1902 = vmatmul.mubr.bf16.gmra.mrb[0].mxu0 %v1826
      %v1903 = vpop.f32.mrb[0].mxu0
      %v1904 = vadd.f32 %v1744, %v1903
      %v1905 = vpop.f32.mrb[0].mxu0
      %v1906 = vadd.f32 %v1744, %v1905
      %v1907 = vpop.f32.mrb[0].mxu0
      %v1908 = vadd.f32 %v1749, %v1907
      %v1909 = vpop.f32.mrb[0].mxu0
      %v1910 = vadd.f32 %v1749, %v1909
      %1911 = vmatprep.mubr.bf16.mxu0 0
      %1912 = vmatmul.mubr.bf16.gmra.mrb[0].mxu0 %v1827
      %v1913 = vpop.f32.mrb[0].mxu0
      %v1914 = vadd.f32 %v1754, %v1913
      %v1915 = vpop.f32.mrb[0].mxu0
      %v1916 = vadd.f32 %v1754, %v1915
      %v1917 = vpop.f32.mrb[0].mxu0
      %v1918 = vadd.f32 %v1759, %v1917
      %v1919 = vpop.f32.mrb[0].mxu0
      %v1920 = vadd.f32 %v1759, %v1919
      %1921 = vmatprep.mubr.bf16.mxu0 0
      %1922 = vmatmul.mubr.bf16.gmra.mrb[0].mxu0 %v1828
      %v1923 = vpop.f32.mrb[0].mxu0
      %v1924 = vadd.f32 %v1764, %v1923
      %v1925 = vpop.f32.mrb[0].mxu0
      %v1926 = vadd.f32 %v1764, %v1925
      %v1927 = vpop.f32.mrb[0].mxu0
      %v1928 = vadd.f32 %v1769, %v1927
      %v1929 = vpop.f32.mrb[0].mxu0
      %v1930 = vadd.f32 %v1769, %v1929
      %1931 = vmatprep.mubr.bf16.mxu0 0
      %1932 = vmatmul.mubr.bf16.gmra.mrb[0].mxu0 %v1829
      %v1933 = vpop.f32.mrb[0].mxu0
      %v1934 = vadd.f32 %v1774, %v1933
      %v1935 = vpop.f32.mrb[0].mxu0
      %v1936 = vadd.f32 %v1774, %v1935
      %v1937 = vpop.f32.mrb[0].mxu0
      %v1938 = vadd.f32 %v1779, %v1937
      %v1939 = vpop.f32.mrb[0].mxu0
      %v1940 = vadd.f32 %v1779, %v1939
      %1941 = vmatprep.mubr.bf16.mxu0 0
      %1942 = vmatmul.mubr.bf16.gmra.mrb[0].mxu0 %v1830
      %v1943 = vpop.f32.mrb[0].mxu0
      %v1944 = vadd.f32 %v1784, %v1943
      %v1945 = vpop.f32.mrb[0].mxu0
      %v1946 = vadd.f32 %v1784, %v1945
      %v1947 = vpop.f32.mrb[0].mxu0
      %v1948 = vadd.f32 %v1789, %v1947
      %v1949 = vpop.f32.mrb[0].mxu0
      %v1950 = vadd.f32 %v1789, %v1949
      %1951 = vdwg.mxu0
      %1952 = vmatprep.subr.bf16.mxu0 %v1665
      %1953 = vmatpush1.bf16.msra.mxu0 %v1664
      %1954 = vmatprep.subr.bf16.mxu0 %v1669
      %1955 = vmatpush1.bf16.msra.mxu0 %v1668
      %1956 = vmatprep.subr.bf16.mxu0 %v1673
      %1957 = vmatpush1.bf16.msra.mxu0 %v1672
      %1958 = vmatprep.subr.bf16.mxu0 %v1677
      %1959 = vmatpush1.bf16.msra.mxu0 %v1676
      %1960 = vmatprep.subr.bf16.mxu0 %v1681
      %1961 = vmatpush1.bf16.msra.mxu0 %v1680
      %1962 = vmatprep.subr.bf16.mxu0 %v1685
      %1963 = vmatpush1.bf16.msra.mxu0 %v1684
      %1964 = vmatprep.subr.bf16.mxu0 %v1689
      %1965 = vmatpush1.bf16.msra.mxu0 %v1688
      %1966 = vmatprep.subr.bf16.mxu0 %v1693
      %1967 = vmatpush1.bf16.msra.mxu0 %v1692
      %1968 = vmatprep.subr.bf16.mxu0 0
      %1969 = vmatpush1.bf16.msra.mxu0 0
      %1970 = vmatprep.subr.bf16.mxu0 0
      %1971 = vmatpush1.bf16.msra.mxu0 0
      %1972 = vmatprep.subr.bf16.mxu0 0
      %1973 = vmatpush1.bf16.msra.mxu0 0
      %1974 = vmatprep.subr.bf16.mxu0 0
      %1975 = vmatpush1.bf16.msra.mxu0 0
      %1976 = vmatprep.subr.bf16.mxu0 0
      %1977 = vmatpush1.bf16.msra.mxu0 0
      %1978 = vmatprep.subr.bf16.mxu0 0
      %1979 = vmatpush1.bf16.msra.mxu0 0
      %1980 = vmatprep.subr.bf16.mxu0 0
      %1981 = vmatpush1.bf16.msra.mxu0 0
      %1982 = vmatprep.subr.bf16.mxu0 0
      %1983 = vmatpush1.bf16.msra.mxu0 0
      %1984 = vmatprep.mubr.bf16.mxu0 0
      %1985 = vmatmul.mubr.bf16.gmra.mrb[0].mxu0 %v1823
      %v1986 = vpop.f32.mrb[0].mxu0
      %v1987 = vadd.f32 %v1714, %v1986
      %v1988 = vpop.f32.mrb[0].mxu0
      %v1989 = vadd.f32 %v1714, %v1988
      %v1990 = vpop.f32.mrb[0].mxu0
      %v1991 = vadd.f32 %v1719, %v1990
      %v1992 = vpop.f32.mrb[0].mxu0
      %v1993 = vadd.f32 %v1719, %v1992
      %1994 = vmatprep.mubr.bf16.mxu0 0
      %1995 = vmatmul.mubr.bf16.gmra.mrb[0].mxu0 %v1824
      %v1996 = vpop.f32.mrb[0].mxu0
      %v1997 = vadd.f32 %v1724, %v1996
      %v1998 = vpop.f32.mrb[0].mxu0
      %v1999 = vadd.f32 %v1724, %v1998
      %v2000 = vpop.f32.mrb[0].mxu0
      %v2001 = vadd.f32 %v1729, %v2000
      %v2002 = vpop.f32.mrb[0].mxu0
      %v2003 = vadd.f32 %v1729, %v2002
      %2004 = vmatprep.mubr.bf16.mxu0 0
      %2005 = vmatmul.mubr.bf16.gmra.mrb[0].mxu0 %v1825
      %v2006 = vpop.f32.mrb[0].mxu0
      %v2007 = vadd.f32 %v1734, %v2006
      %v2008 = vpop.f32.mrb[0].mxu0
      %v2009 = vadd.f32 %v1734, %v2008
      %v2010 = vpop.f32.mrb[0].mxu0
      %v2011 = vadd.f32 %v1739, %v2010
      %v2012 = vpop.f32.mrb[0].mxu0
      %v2013 = vadd.f32 %v1739, %v2012
      %2014 = vmatprep.mubr.bf16.mxu0 0
      %2015 = vmatmul.mubr.bf16.gmra.mrb[0].mxu0 %v1826
      %v2016 = vpop.f32.mrb[0].mxu0
      %v2017 = vadd.f32 %v1744, %v2016
      %v2018 = vpop.f32.mrb[0].mxu0
      %v2019 = vadd.f32 %v1744, %v2018
      %v2020 = vpop.f32.mrb[0].mxu0
      %v2021 = vadd.f32 %v1749, %v2020
      %v2022 = vpop.f32.mrb[0].mxu0
      %v2023 = vadd.f32 %v1749, %v2022
      %2024 = vmatprep.mubr.bf16.mxu0 0
      %2025 = vmatmul.mubr.bf16.gmra.mrb[0].mxu0 %v1827
      %v2026 = vpop.f32.mrb[0].mxu0
      %v2027 = vadd.f32 %v1754, %v2026
      %v2028 = vpop.f32.mrb[0].mxu0
      %v2029 = vadd.f32 %v1754, %v2028
      %v2030 = vpop.f32.mrb[0].mxu0
      %v2031 = vadd.f32 %v1759, %v2030
      %v2032 = vpop.f32.mrb[0].mxu0
      %v2033 = vadd.f32 %v1759, %v2032
      %2034 = vmatprep.mubr.bf16.mxu0 0
      %2035 = vmatmul.mubr.bf16.gmra.mrb[0].mxu0 %v1828
      %v2036 = vpop.f32.mrb[0].mxu0
      %v2037 = vadd.f32 %v1764, %v2036
      %v2038 = vpop.f32.mrb[0].mxu0
      %v2039 = vadd.f32 %v1764, %v2038
      %v2040 = vpop.f32.mrb[0].mxu0
      %v2041 = vadd.f32 %v1769, %v2040
      %v2042 = vpop.f32.mrb[0].mxu0
      %v2043 = vadd.f32 %v1769, %v2042
      %2044 = vmatprep.mubr.bf16.mxu0 0
      %2045 = vmatmul.mubr.bf16.gmra.mrb[0].mxu0 %v1829
      %v2046 = vpop.f32.mrb[0].mxu0
      %v2047 = vadd.f32 %v1774, %v2046
      %v2048 = vpop.f32.mrb[0].mxu0
      %v2049 = vadd.f32 %v1774, %v2048
      %v2050 = vpop.f32.mrb[0].mxu0
      %v2051 = vadd.f32 %v1779, %v2050
      %v2052 = vpop.f32.mrb[0].mxu0
      %v2053 = vadd.f32 %v1779, %v2052
      %2054 = vmatprep.mubr.bf16.mxu0 0
      %2055 = vmatmul.mubr.bf16.gmra.mrb[0].mxu0 %v1830
      %v2056 = vpop.f32.mrb[0].mxu0
      %v2057 = vadd.f32 %v1784, %v2056
      %v2058 = vpop.f32.mrb[0].mxu0
      %v2059 = vadd.f32 %v1784, %v2058
      %v2060 = vpop.f32.mrb[0].mxu0
      %v2061 = vadd.f32 %v1789, %v2060
      %v2062 = vpop.f32.mrb[0].mxu0
      %v2063 = vadd.f32 %v1789, %v2062
      %2064 = vdwg.mxu0
      %v2065 = vmax.f32 %v1874, 0.0
      %v2066 = vmax.f32 %v1876, 0.0
      %v2067 = vmax.f32 %v1987, 0.0
      %v2068 = vmax.f32 %v1989, 0.0
      %v2069 = vmax.f32 %v1878, 0.0
      %v2070 = vmax.f32 %v1880, 0.0
      %v2071 = vmax.f32 %v1991, 0.0
      %v2072 = vmax.f32 %v1993, 0.0
      %v2073 = vmax.f32 %v1884, 0.0
      %v2074 = vmax.f32 %v1886, 0.0
      %v2075 = vmax.f32 %v1997, 0.0
      %v2076 = vmax.f32 %v1999, 0.0
      %v2077 = vmax.f32 %v1888, 0.0
      %v2078 = vmax.f32 %v1890, 0.0
      %v2079 = vmax.f32 %v2001, 0.0
      %v2080 = vmax.f32 %v2003, 0.0
      %v2081 = vmax.f32 %v1894, 0.0
      %v2082 = vmax.f32 %v1896, 0.0
      %v2083 = vmax.f32 %v2007, 0.0
      %v2084 = vmax.f32 %v2009, 0.0
      %v2085 = vmax.f32 %v1898, 0.0
      %v2086 = vmax.f32 %v1900, 0.0
      %v2087 = vmax.f32 %v2011, 0.0
      %v2088 = vmax.f32 %v2013, 0.0
      %v2089 = vmax.f32 %v1904, 0.0
      %v2090 = vmax.f32 %v1906, 0.0
      %v2091 = vmax.f32 %v2017, 0.0
      %v2092 = vmax.f32 %v2019, 0.0
      %v2093 = vmax.f32 %v1908, 0.0
      %v2094 = vmax.f32 %v1910, 0.0
      %v2095 = vmax.f32 %v2021, 0.0
      %v2096 = vmax.f32 %v2023, 0.0
      %v2097 = vmax.f32 %v1914, 0.0
      %v2098 = vmax.f32 %v1916, 0.0
      %v2099 = vmax.f32 %v2027, 0.0
      %v2100 = vmax.f32 %v2029, 0.0
      %v2101 = vmax.f32 %v1918, 0.0
      %v2102 = vmax.f32 %v1920, 0.0
      %v2103 = vmax.f32 %v2031, 0.0
      %v2104 = vmax.f32 %v2033, 0.0
      %v2105 = vmax.f32 %v1924, 0.0
      %v2106 = vmax.f32 %v1926, 0.0
      %v2107 = vmax.f32 %v2037, 0.0
      %v2108 = vmax.f32 %v2039, 0.0
      %v2109 = vmax.f32 %v1928, 0.0
      %v2110 = vmax.f32 %v1930, 0.0
      %v2111 = vmax.f32 %v2041, 0.0
      %v2112 = vmax.f32 %v2043, 0.0
      %v2113 = vmax.f32 %v1934, 0.0
      %v2114 = vmax.f32 %v1936, 0.0
      %v2115 = vmax.f32 %v2047, 0.0
      %v2116 = vmax.f32 %v2049, 0.0
      %v2117 = vmax.f32 %v1938, 0.0
      %v2118 = vmax.f32 %v1940, 0.0
      %v2119 = vmax.f32 %v2051, 0.0
      %v2120 = vmax.f32 %v2053, 0.0
      %v2121 = vmax.f32 %v1944, 0.0
      %v2122 = vmax.f32 %v1946, 0.0
      %v2123 = vmax.f32 %v2057, 0.0
      %v2124 = vmax.f32 %v2059, 0.0
      %v2125 = vmax.f32 %v1948, 0.0
      %v2126 = vmax.f32 %v1950, 0.0
      %v2127 = vmax.f32 %v2061, 0.0
      %v2128 = vmax.f32 %v2063, 0.0
      %s2129 = scalar_lea.vmem %s3, 128
      %v2130 = vld [vmem:[%s2129] sm:$0xf]
      %v2131 = vld [vmem:[%s2129 + $0x4] sm:$0xf]
      %v2132 = vld [vmem:[%s2129 + $0x8] sm:$0xf]
      %v2133 = vld [vmem:[%s2129 + $0xc] sm:$0xf]
      %v2134 = vld [vmem:[%s2129 + $0x10] sm:$0xf]
      %v2135 = vld [vmem:[%s2129 + $0x14] sm:$0xf]
      %v2136 = vld [vmem:[%s2129 + $0x18] sm:$0xf]
      %v2137 = vld [vmem:[%s2129 + $0x1c] sm:$0xf]
      %v2138 = vld [vmem:[%s2129 + $0x20] sm:$0xf]
      %v2139 = vld [vmem:[%s2129 + $0x24] sm:$0xf]
      %v2140 = vld [vmem:[%s2129 + $0x28] sm:$0xf]
      %v2141 = vld [vmem:[%s2129 + $0x2c] sm:$0xf]
      %v2142 = vld [vmem:[%s2129 + $0x30] sm:$0xf]
      %v2143 = vld [vmem:[%s2129 + $0x34] sm:$0xf]
      %v2144 = vld [vmem:[%s2129 + $0x38] sm:$0xf]
      %v2145 = vld [vmem:[%s2129 + $0x3c] sm:$0xf]
      %v2146 = vpack.c.bf16 %v2069, %v2065
      %v2147 = vpack.c.bf16 %v2070, %v2066
      %v2148 = vpack.c.bf16 %v2071, %v2067
      %v2149 = vpack.c.bf16 %v2072, %v2068
      %v2150 = vpack.c.bf16 %v2077, %v2073
      %v2151 = vpack.c.bf16 %v2078, %v2074
      %v2152 = vpack.c.bf16 %v2079, %v2075
      %v2153 = vpack.c.bf16 %v2080, %v2076
      %v2154 = vpack.c.bf16 %v2085, %v2081
      %v2155 = vpack.c.bf16 %v2086, %v2082
      %v2156 = vpack.c.bf16 %v2087, %v2083
      %v2157 = vpack.c.bf16 %v2088, %v2084
      %v2158 = vpack.c.bf16 %v2093, %v2089
      %v2159 = vpack.c.bf16 %v2094, %v2090
      %v2160 = vpack.c.bf16 %v2095, %v2091
      %v2161 = vpack.c.bf16 %v2096, %v2092
      %v2162 = vpack.c.bf16 %v2101, %v2097
      %v2163 = vpack.c.bf16 %v2102, %v2098
      %v2164 = vpack.c.bf16 %v2103, %v2099
      %v2165 = vpack.c.bf16 %v2104, %v2100
      %v2166 = vpack.c.bf16 %v2109, %v2105
      %v2167 = vpack.c.bf16 %v2110, %v2106
      %v2168 = vpack.c.bf16 %v2111, %v2107
      %v2169 = vpack.c.bf16 %v2112, %v2108
      %v2170 = vpack.c.bf16 %v2117, %v2113
      %v2171 = vpack.c.bf16 %v2118, %v2114
      %v2172 = vpack.c.bf16 %v2119, %v2115
      %v2173 = vpack.c.bf16 %v2120, %v2116
      %v2174 = vpack.c.bf16 %v2125, %v2121
      %v2175 = vpack.c.bf16 %v2126, %v2122
      %v2176 = vpack.c.bf16 %v2127, %v2123
      %v2177 = vpack.c.bf16 %v2128, %v2124
      %s2178 = scalar_lea.vmem %s4, 256
      %v2179 = vld [vmem:[%s2178] sm:$0xff]
      %v2180 = vld [vmem:[%s2178 + $0x8] sm:$0xff]
      %v2181 = vld [vmem:[%s2178 + $0x10] sm:$0xff]
      %v2182 = vld [vmem:[%s2178 + $0x18] sm:$0xff]
      %v2183 = vld [vmem:[%s2178 + $0x20] sm:$0xff]
      %v2184 = vld [vmem:[%s2178 + $0x28] sm:$0xff]
      %v2185 = vld [vmem:[%s2178 + $0x30] sm:$0xff]
      %v2186 = vld [vmem:[%s2178 + $0x38] sm:$0xff]
      %v2187 = vld [vmem:[%s2178 + $0x40] sm:$0xff]
      %v2188 = vld [vmem:[%s2178 + $0x48] sm:$0xff]
      %v2189 = vld [vmem:[%s2178 + $0x50] sm:$0xff]
      %v2190 = vld [vmem:[%s2178 + $0x58] sm:$0xff]
      %v2191 = vld [vmem:[%s2178 + $0x60] sm:$0xff]
      %v2192 = vld [vmem:[%s2178 + $0x68] sm:$0xff]
      %v2193 = vld [vmem:[%s2178 + $0x70] sm:$0xff]
      %v2194 = vld [vmem:[%s2178 + $0x78] sm:$0xff]
      %2196 = vset.pattern.permute.xlu0 0
      %2197 = vperm.xlu0 %2196, %v2179
      %v2198 = vpop.permute.xlu0 %2197
      %2201 = vset.pattern.permute.xlu0 0
      %2202 = vperm.xlu0 %2201, %v2180
      %v2203 = vpop.permute.xlu0 %2202
      %2206 = vset.pattern.permute.xlu0 0
      %2207 = vperm.xlu0 %2206, %v2181
      %v2208 = vpop.permute.xlu0 %2207
      %2211 = vset.pattern.permute.xlu0 0
      %2212 = vperm.xlu0 %2211, %v2182
      %v2213 = vpop.permute.xlu0 %2212
      %2216 = vset.pattern.permute.xlu0 0
      %2217 = vperm.xlu0 %2216, %v2183
      %v2218 = vpop.permute.xlu0 %2217
      %2221 = vset.pattern.permute.xlu0 0
      %2222 = vperm.xlu0 %2221, %v2184
      %v2223 = vpop.permute.xlu0 %2222
      %2226 = vset.pattern.permute.xlu0 0
      %2227 = vperm.xlu0 %2226, %v2185
      %v2228 = vpop.permute.xlu0 %2227
      %2231 = vset.pattern.permute.xlu0 0
      %2232 = vperm.xlu0 %2231, %v2186
      %v2233 = vpop.permute.xlu0 %2232
      %2236 = vset.pattern.permute.xlu0 0
      %2237 = vperm.xlu0 %2236, %v2187
      %v2238 = vpop.permute.xlu0 %2237
      %2241 = vset.pattern.permute.xlu0 0
      %2242 = vperm.xlu0 %2241, %v2188
      %v2243 = vpop.permute.xlu0 %2242
      %2246 = vset.pattern.permute.xlu0 0
      %2247 = vperm.xlu0 %2246, %v2189
      %v2248 = vpop.permute.xlu0 %2247
      %2251 = vset.pattern.permute.xlu0 0
      %2252 = vperm.xlu0 %2251, %v2190
      %v2253 = vpop.permute.xlu0 %2252
      %2256 = vset.pattern.permute.xlu0 0
      %2257 = vperm.xlu0 %2256, %v2191
      %v2258 = vpop.permute.xlu0 %2257
      %2261 = vset.pattern.permute.xlu0 0
      %2262 = vperm.xlu0 %2261, %v2192
      %v2263 = vpop.permute.xlu0 %2262
      %2266 = vset.pattern.permute.xlu0 0
      %2267 = vperm.xlu0 %2266, %v2193
      %v2268 = vpop.permute.xlu0 %2267
      %2271 = vset.pattern.permute.xlu0 0
      %2272 = vperm.xlu0 %2271, %v2194
      %v2273 = vpop.permute.xlu0 %2272
      %v2291 = vunpack.c.l.b16 %v2130
      %v2292 = vunpack.c.l.b16 %v2131
      %v2293 = vunpack.c.l.b16 %v2132
      %v2294 = vunpack.c.l.b16 %v2133
      %v2295 = vunpack.c.l.b16 %v2134
      %v2296 = vunpack.c.l.b16 %v2135
      %v2297 = vunpack.c.l.b16 %v2136
      %v2298 = vunpack.c.l.b16 %v2137
      %v2299 = vunpack.c.l.b16 %v2138
      %v2300 = vunpack.c.l.b16 %v2139
      %v2301 = vunpack.c.l.b16 %v2140
      %v2302 = vunpack.c.l.b16 %v2141
      %v2303 = vunpack.c.l.b16 %v2142
      %v2304 = vunpack.c.l.b16 %v2143
      %v2305 = vunpack.c.l.b16 %v2144
      %v2306 = vunpack.c.l.b16 %v2145
      %v2307 = vpack.c.b16 %v2292, %v2291
      %v2308 = vpack.c.b16 %v2294, %v2293
      %v2309 = vpack.c.b16 %v2296, %v2295
      %v2310 = vpack.c.b16 %v2298, %v2297
      %v2311 = vpack.c.b16 %v2300, %v2299
      %v2312 = vpack.c.b16 %v2302, %v2301
      %v2313 = vpack.c.b16 %v2304, %v2303
      %v2314 = vpack.c.b16 %v2306, %v2305
      %2323 = vmatprep.subr.bf16.mxu0 %v2147
      %2324 = vmatpush1.bf16.msra.mxu0 %v2146
      %2325 = vmatprep.subr.bf16.mxu0 %v2151
      %2326 = vmatpush1.bf16.msra.mxu0 %v2150
      %2327 = vmatprep.subr.bf16.mxu0 %v2155
      %2328 = vmatpush1.bf16.msra.mxu0 %v2154
      %2329 = vmatprep.subr.bf16.mxu0 %v2159
      %2330 = vmatpush1.bf16.msra.mxu0 %v2158
      %2331 = vmatprep.subr.bf16.mxu0 %v2163
      %2332 = vmatpush1.bf16.msra.mxu0 %v2162
      %2333 = vmatprep.subr.bf16.mxu0 %v2167
      %2334 = vmatpush1.bf16.msra.mxu0 %v2166
      %2335 = vmatprep.subr.bf16.mxu0 %v2171
      %2336 = vmatpush1.bf16.msra.mxu0 %v2170
      %2337 = vmatprep.subr.bf16.mxu0 %v2175
      %2338 = vmatpush1.bf16.msra.mxu0 %v2174
      %2339 = vmatprep.subr.bf16.mxu0 0
      %2340 = vmatpush1.bf16.msra.mxu0 0
      %2341 = vmatprep.subr.bf16.mxu0 0
      %2342 = vmatpush1.bf16.msra.mxu0 0
      %2343 = vmatprep.subr.bf16.mxu0 0
      %2344 = vmatpush1.bf16.msra.mxu0 0
      %2345 = vmatprep.subr.bf16.mxu0 0
      %2346 = vmatpush1.bf16.msra.mxu0 0
      %2347 = vmatprep.subr.bf16.mxu0 0
      %2348 = vmatpush1.bf16.msra.mxu0 0
      %2349 = vmatprep.subr.bf16.mxu0 0
      %2350 = vmatpush1.bf16.msra.mxu0 0
      %2351 = vmatprep.subr.bf16.mxu0 0
      %2352 = vmatpush1.bf16.msra.mxu0 0
      %2353 = vmatprep.subr.bf16.mxu0 0
      %2354 = vmatpush1.bf16.msra.mxu0 0
      %2355 = vmatprep.mubr.bf16.mxu0 0
      %2356 = vmatmul.mubr.bf16.gmra.mrb[0].mxu0 %v2307
      %v2357 = vpop.f32.mrb[0].mxu0
      %v2358 = vadd.f32 %v2198, %v2357
      %v2359 = vpop.f32.mrb[0].mxu0
      %v2360 = vadd.f32 %v2198, %v2359
      %v2361 = vpop.f32.mrb[0].mxu0
      %v2362 = vadd.f32 %v2203, %v2361
      %v2363 = vpop.f32.mrb[0].mxu0
      %v2364 = vadd.f32 %v2203, %v2363
      %2365 = vmatprep.mubr.bf16.mxu0 0
      %2366 = vmatmul.mubr.bf16.gmra.mrb[0].mxu0 %v2308
      %v2367 = vpop.f32.mrb[0].mxu0
      %v2368 = vadd.f32 %v2208, %v2367
      %v2369 = vpop.f32.mrb[0].mxu0
      %v2370 = vadd.f32 %v2208, %v2369
      %v2371 = vpop.f32.mrb[0].mxu0
      %v2372 = vadd.f32 %v2213, %v2371
      %v2373 = vpop.f32.mrb[0].mxu0
      %v2374 = vadd.f32 %v2213, %v2373
      %2375 = vmatprep.mubr.bf16.mxu0 0
      %2376 = vmatmul.mubr.bf16.gmra.mrb[0].mxu0 %v2309
      %v2377 = vpop.f32.mrb[0].mxu0
      %v2378 = vadd.f32 %v2218, %v2377
      %v2379 = vpop.f32.mrb[0].mxu0
      %v2380 = vadd.f32 %v2218, %v2379
      %v2381 = vpop.f32.mrb[0].mxu0
      %v2382 = vadd.f32 %v2223, %v2381
      %v2383 = vpop.f32.mrb[0].mxu0
      %v2384 = vadd.f32 %v2223, %v2383
      %2385 = vmatprep.mubr.bf16.mxu0 0
      %2386 = vmatmul.mubr.bf16.gmra.mrb[0].mxu0 %v2310
      %v2387 = vpop.f32.mrb[0].mxu0
      %v2388 = vadd.f32 %v2228, %v2387
      %v2389 = vpop.f32.mrb[0].mxu0
      %v2390 = vadd.f32 %v2228, %v2389
      %v2391 = vpop.f32.mrb[0].mxu0
      %v2392 = vadd.f32 %v2233, %v2391
      %v2393 = vpop.f32.mrb[0].mxu0
      %v2394 = vadd.f32 %v2233, %v2393
      %2395 = vmatprep.mubr.bf16.mxu0 0
      %2396 = vmatmul.mubr.bf16.gmra.mrb[0].mxu0 %v2311
      %v2397 = vpop.f32.mrb[0].mxu0
      %v2398 = vadd.f32 %v2238, %v2397
      %v2399 = vpop.f32.mrb[0].mxu0
      %v2400 = vadd.f32 %v2238, %v2399
      %v2401 = vpop.f32.mrb[0].mxu0
      %v2402 = vadd.f32 %v2243, %v2401
      %v2403 = vpop.f32.mrb[0].mxu0
      %v2404 = vadd.f32 %v2243, %v2403
      %2405 = vmatprep.mubr.bf16.mxu0 0
      %2406 = vmatmul.mubr.bf16.gmra.mrb[0].mxu0 %v2312
      %v2407 = vpop.f32.mrb[0].mxu0
      %v2408 = vadd.f32 %v2248, %v2407
      %v2409 = vpop.f32.mrb[0].mxu0
      %v2410 = vadd.f32 %v2248, %v2409
      %v2411 = vpop.f32.mrb[0].mxu0
      %v2412 = vadd.f32 %v2253, %v2411
      %v2413 = vpop.f32.mrb[0].mxu0
      %v2414 = vadd.f32 %v2253, %v2413
      %2415 = vmatprep.mubr.bf16.mxu0 0
      %2416 = vmatmul.mubr.bf16.gmra.mrb[0].mxu0 %v2313
      %v2417 = vpop.f32.mrb[0].mxu0
      %v2418 = vadd.f32 %v2258, %v2417
      %v2419 = vpop.f32.mrb[0].mxu0
      %v2420 = vadd.f32 %v2258, %v2419
      %v2421 = vpop.f32.mrb[0].mxu0
      %v2422 = vadd.f32 %v2263, %v2421
      %v2423 = vpop.f32.mrb[0].mxu0
      %v2424 = vadd.f32 %v2263, %v2423
      %2425 = vmatprep.mubr.bf16.mxu0 0
      %2426 = vmatmul.mubr.bf16.gmra.mrb[0].mxu0 %v2314
      %v2427 = vpop.f32.mrb[0].mxu0
      %v2428 = vadd.f32 %v2268, %v2427
      %v2429 = vpop.f32.mrb[0].mxu0
      %v2430 = vadd.f32 %v2268, %v2429
      %v2431 = vpop.f32.mrb[0].mxu0
      %v2432 = vadd.f32 %v2273, %v2431
      %v2433 = vpop.f32.mrb[0].mxu0
      %v2434 = vadd.f32 %v2273, %v2433
      %2435 = vdwg.mxu0
      %2436 = vmatprep.subr.bf16.mxu0 %v2149
      %2437 = vmatpush1.bf16.msra.mxu0 %v2148
      %2438 = vmatprep.subr.bf16.mxu0 %v2153
      %2439 = vmatpush1.bf16.msra.mxu0 %v2152
      %2440 = vmatprep.subr.bf16.mxu0 %v2157
      %2441 = vmatpush1.bf16.msra.mxu0 %v2156
      %2442 = vmatprep.subr.bf16.mxu0 %v2161
      %2443 = vmatpush1.bf16.msra.mxu0 %v2160
      %2444 = vmatprep.subr.bf16.mxu0 %v2165
      %2445 = vmatpush1.bf16.msra.mxu0 %v2164
      %2446 = vmatprep.subr.bf16.mxu0 %v2169
      %2447 = vmatpush1.bf16.msra.mxu0 %v2168
      %2448 = vmatprep.subr.bf16.mxu0 %v2173
      %2449 = vmatpush1.bf16.msra.mxu0 %v2172
      %2450 = vmatprep.subr.bf16.mxu0 %v2177
      %2451 = vmatpush1.bf16.msra.mxu0 %v2176
      %2452 = vmatprep.subr.bf16.mxu0 0
      %2453 = vmatpush1.bf16.msra.mxu0 0
      %2454 = vmatprep.subr.bf16.mxu0 0
      %2455 = vmatpush1.bf16.msra.mxu0 0
      %2456 = vmatprep.subr.bf16.mxu0 0
      %2457 = vmatpush1.bf16.msra.mxu0 0
      %2458 = vmatprep.subr.bf16.mxu0 0
      %2459 = vmatpush1.bf16.msra.mxu0 0
      %2460 = vmatprep.subr.bf16.mxu0 0
      %2461 = vmatpush1.bf16.msra.mxu0 0
      %2462 = vmatprep.subr.bf16.mxu0 0
      %2463 = vmatpush1.bf16.msra.mxu0 0
      %2464 = vmatprep.subr.bf16.mxu0 0
      %2465 = vmatpush1.bf16.msra.mxu0 0
      %2466 = vmatprep.subr.bf16.mxu0 0
      %2467 = vmatpush1.bf16.msra.mxu0 0
      %2468 = vmatprep.mubr.bf16.mxu0 0
      %2469 = vmatmul.mubr.bf16.gmra.mrb[0].mxu0 %v2307
      %v2470 = vpop.f32.mrb[0].mxu0
      %v2471 = vadd.f32 %v2198, %v2470
      %v2472 = vpop.f32.mrb[0].mxu0
      %v2473 = vadd.f32 %v2198, %v2472
      %v2474 = vpop.f32.mrb[0].mxu0
      %v2475 = vadd.f32 %v2203, %v2474
      %v2476 = vpop.f32.mrb[0].mxu0
      %v2477 = vadd.f32 %v2203, %v2476
      %2478 = vmatprep.mubr.bf16.mxu0 0
      %2479 = vmatmul.mubr.bf16.gmra.mrb[0].mxu0 %v2308
      %v2480 = vpop.f32.mrb[0].mxu0
      %v2481 = vadd.f32 %v2208, %v2480
      %v2482 = vpop.f32.mrb[0].mxu0
      %v2483 = vadd.f32 %v2208, %v2482
      %v2484 = vpop.f32.mrb[0].mxu0
      %v2485 = vadd.f32 %v2213, %v2484
      %v2486 = vpop.f32.mrb[0].mxu0
      %v2487 = vadd.f32 %v2213, %v2486
      %2488 = vmatprep.mubr.bf16.mxu0 0
      %2489 = vmatmul.mubr.bf16.gmra.mrb[0].mxu0 %v2309
      %v2490 = vpop.f32.mrb[0].mxu0
      %v2491 = vadd.f32 %v2218, %v2490
      %v2492 = vpop.f32.mrb[0].mxu0
      %v2493 = vadd.f32 %v2218, %v2492
      %v2494 = vpop.f32.mrb[0].mxu0
      %v2495 = vadd.f32 %v2223, %v2494
      %v2496 = vpop.f32.mrb[0].mxu0
      %v2497 = vadd.f32 %v2223, %v2496
      %2498 = vmatprep.mubr.bf16.mxu0 0
      %2499 = vmatmul.mubr.bf16.gmra.mrb[0].mxu0 %v2310
      %v2500 = vpop.f32.mrb[0].mxu0
      %v2501 = vadd.f32 %v2228, %v2500
      %v2502 = vpop.f32.mrb[0].mxu0
      %v2503 = vadd.f32 %v2228, %v2502
      %v2504 = vpop.f32.mrb[0].mxu0
      %v2505 = vadd.f32 %v2233, %v2504
      %v2506 = vpop.f32.mrb[0].mxu0
      %v2507 = vadd.f32 %v2233, %v2506
      %2508 = vmatprep.mubr.bf16.mxu0 0
      %2509 = vmatmul.mubr.bf16.gmra.mrb[0].mxu0 %v2311
      %v2510 = vpop.f32.mrb[0].mxu0
      %v2511 = vadd.f32 %v2238, %v2510
      %v2512 = vpop.f32.mrb[0].mxu0
      %v2513 = vadd.f32 %v2238, %v2512
      %v2514 = vpop.f32.mrb[0].mxu0
      %v2515 = vadd.f32 %v2243, %v2514
      %v2516 = vpop.f32.mrb[0].mxu0
      %v2517 = vadd.f32 %v2243, %v2516
      %2518 = vmatprep.mubr.bf16.mxu0 0
      %2519 = vmatmul.mubr.bf16.gmra.mrb[0].mxu0 %v2312
      %v2520 = vpop.f32.mrb[0].mxu0
      %v2521 = vadd.f32 %v2248, %v2520
      %v2522 = vpop.f32.mrb[0].mxu0
      %v2523 = vadd.f32 %v2248, %v2522
      %v2524 = vpop.f32.mrb[0].mxu0
      %v2525 = vadd.f32 %v2253, %v2524
      %v2526 = vpop.f32.mrb[0].mxu0
      %v2527 = vadd.f32 %v2253, %v2526
      %2528 = vmatprep.mubr.bf16.mxu0 0
      %2529 = vmatmul.mubr.bf16.gmra.mrb[0].mxu0 %v2313
      %v2530 = vpop.f32.mrb[0].mxu0
      %v2531 = vadd.f32 %v2258, %v2530
      %v2532 = vpop.f32.mrb[0].mxu0
      %v2533 = vadd.f32 %v2258, %v2532
      %v2534 = vpop.f32.mrb[0].mxu0
      %v2535 = vadd.f32 %v2263, %v2534
      %v2536 = vpop.f32.mrb[0].mxu0
      %v2537 = vadd.f32 %v2263, %v2536
      %2538 = vmatprep.mubr.bf16.mxu0 0
      %2539 = vmatmul.mubr.bf16.gmra.mrb[0].mxu0 %v2314
      %v2540 = vpop.f32.mrb[0].mxu0
      %v2541 = vadd.f32 %v2268, %v2540
      %v2542 = vpop.f32.mrb[0].mxu0
      %v2543 = vadd.f32 %v2268, %v2542
      %v2544 = vpop.f32.mrb[0].mxu0
      %v2545 = vadd.f32 %v2273, %v2544
      %v2546 = vpop.f32.mrb[0].mxu0
      %v2547 = vadd.f32 %v2273, %v2546
      %2548 = vdwg.mxu0
      %v2549 = vmax.f32 %v2358, 0.0
      %v2550 = vmax.f32 %v2360, 0.0
      %v2551 = vmax.f32 %v2471, 0.0
      %v2552 = vmax.f32 %v2473, 0.0
      %v2553 = vmax.f32 %v2362, 0.0
      %v2554 = vmax.f32 %v2364, 0.0
      %v2555 = vmax.f32 %v2475, 0.0
      %v2556 = vmax.f32 %v2477, 0.0
      %v2557 = vmax.f32 %v2368, 0.0
      %v2558 = vmax.f32 %v2370, 0.0
      %v2559 = vmax.f32 %v2481, 0.0
      %v2560 = vmax.f32 %v2483, 0.0
      %v2561 = vmax.f32 %v2372, 0.0
      %v2562 = vmax.f32 %v2374, 0.0
      %v2563 = vmax.f32 %v2485, 0.0
      %v2564 = vmax.f32 %v2487, 0.0
      %v2565 = vmax.f32 %v2378, 0.0
      %v2566 = vmax.f32 %v2380, 0.0
      %v2567 = vmax.f32 %v2491, 0.0
      %v2568 = vmax.f32 %v2493, 0.0
      %v2569 = vmax.f32 %v2382, 0.0
      %v2570 = vmax.f32 %v2384, 0.0
      %v2571 = vmax.f32 %v2495, 0.0
      %v2572 = vmax.f32 %v2497, 0.0
      %v2573 = vmax.f32 %v2388, 0.0
      %v2574 = vmax.f32 %v2390, 0.0
      %v2575 = vmax.f32 %v2501, 0.0
      %v2576 = vmax.f32 %v2503, 0.0
      %v2577 = vmax.f32 %v2392, 0.0
      %v2578 = vmax.f32 %v2394, 0.0
      %v2579 = vmax.f32 %v2505, 0.0
      %v2580 = vmax.f32 %v2507, 0.0
      %v2581 = vmax.f32 %v2398, 0.0
      %v2582 = vmax.f32 %v2400, 0.0
      %v2583 = vmax.f32 %v2511, 0.0
      %v2584 = vmax.f32 %v2513, 0.0
      %v2585 = vmax.f32 %v2402, 0.0
      %v2586 = vmax.f32 %v2404, 0.0
      %v2587 = vmax.f32 %v2515, 0.0
      %v2588 = vmax.f32 %v2517, 0.0
      %v2589 = vmax.f32 %v2408, 0.0
      %v2590 = vmax.f32 %v2410, 0.0
      %v2591 = vmax.f32 %v2521, 0.0
      %v2592 = vmax.f32 %v2523, 0.0
      %v2593 = vmax.f32 %v2412, 0.0
      %v2594 = vmax.f32 %v2414, 0.0
      %v2595 = vmax.f32 %v2525, 0.0
      %v2596 = vmax.f32 %v2527, 0.0
      %v2597 = vmax.f32 %v2418, 0.0
      %v2598 = vmax.f32 %v2420, 0.0
      %v2599 = vmax.f32 %v2531, 0.0
      %v2600 = vmax.f32 %v2533, 0.0
      %v2601 = vmax.f32 %v2422, 0.0
      %v2602 = vmax.f32 %v2424, 0.0
      %v2603 = vmax.f32 %v2535, 0.0
      %v2604 = vmax.f32 %v2537, 0.0
      %v2605 = vmax.f32 %v2428, 0.0
      %v2606 = vmax.f32 %v2430, 0.0
      %v2607 = vmax.f32 %v2541, 0.0
      %v2608 = vmax.f32 %v2543, 0.0
      %v2609 = vmax.f32 %v2432, 0.0
      %v2610 = vmax.f32 %v2434, 0.0
      %v2611 = vmax.f32 %v2545, 0.0
      %v2612 = vmax.f32 %v2547, 0.0
      %s2613 = scalar_lea.vmem %s3, 192
      %v2614 = vld [vmem:[%s2613] sm:$0xf]
      %v2615 = vld [vmem:[%s2613 + $0x4] sm:$0xf]
      %v2616 = vld [vmem:[%s2613 + $0x8] sm:$0xf]
      %v2617 = vld [vmem:[%s2613 + $0xc] sm:$0xf]
      %v2618 = vld [vmem:[%s2613 + $0x10] sm:$0xf]
      %v2619 = vld [vmem:[%s2613 + $0x14] sm:$0xf]
      %v2620 = vld [vmem:[%s2613 + $0x18] sm:$0xf]
      %v2621 = vld [vmem:[%s2613 + $0x1c] sm:$0xf]
      %v2622 = vld [vmem:[%s2613 + $0x20] sm:$0xf]
      %v2623 = vld [vmem:[%s2613 + $0x24] sm:$0xf]
      %v2624 = vld [vmem:[%s2613 + $0x28] sm:$0xf]
      %v2625 = vld [vmem:[%s2613 + $0x2c] sm:$0xf]
      %v2626 = vld [vmem:[%s2613 + $0x30] sm:$0xf]
      %v2627 = vld [vmem:[%s2613 + $0x34] sm:$0xf]
      %v2628 = vld [vmem:[%s2613 + $0x38] sm:$0xf]
      %v2629 = vld [vmem:[%s2613 + $0x3c] sm:$0xf]
      %v2630 = vpack.c.bf16 %v2553, %v2549
      %v2631 = vpack.c.bf16 %v2554, %v2550
      %v2632 = vpack.c.bf16 %v2555, %v2551
      %v2633 = vpack.c.bf16 %v2556, %v2552
      %v2634 = vpack.c.bf16 %v2561, %v2557
      %v2635 = vpack.c.bf16 %v2562, %v2558
      %v2636 = vpack.c.bf16 %v2563, %v2559
      %v2637 = vpack.c.bf16 %v2564, %v2560
      %v2638 = vpack.c.bf16 %v2569, %v2565
      %v2639 = vpack.c.bf16 %v2570, %v2566
      %v2640 = vpack.c.bf16 %v2571, %v2567
      %v2641 = vpack.c.bf16 %v2572, %v2568
      %v2642 = vpack.c.bf16 %v2577, %v2573
      %v2643 = vpack.c.bf16 %v2578, %v2574
      %v2644 = vpack.c.bf16 %v2579, %v2575
      %v2645 = vpack.c.bf16 %v2580, %v2576
      %v2646 = vpack.c.bf16 %v2585, %v2581
      %v2647 = vpack.c.bf16 %v2586, %v2582
      %v2648 = vpack.c.bf16 %v2587, %v2583
      %v2649 = vpack.c.bf16 %v2588, %v2584
      %v2650 = vpack.c.bf16 %v2593, %v2589
      %v2651 = vpack.c.bf16 %v2594, %v2590
      %v2652 = vpack.c.bf16 %v2595, %v2591
      %v2653 = vpack.c.bf16 %v2596, %v2592
      %v2654 = vpack.c.bf16 %v2601, %v2597
      %v2655 = vpack.c.bf16 %v2602, %v2598
      %v2656 = vpack.c.bf16 %v2603, %v2599
      %v2657 = vpack.c.bf16 %v2604, %v2600
      %v2658 = vpack.c.bf16 %v2609, %v2605
      %v2659 = vpack.c.bf16 %v2610, %v2606
      %v2660 = vpack.c.bf16 %v2611, %v2607
      %v2661 = vpack.c.bf16 %v2612, %v2608
      %s2662 = scalar_lea.vmem %s4, 384
      %v2663 = vld [vmem:[%s2662] sm:$0xff]
      %v2664 = vld [vmem:[%s2662 + $0x8] sm:$0xff]
      %v2665 = vld [vmem:[%s2662 + $0x10] sm:$0xff]
      %v2666 = vld [vmem:[%s2662 + $0x18] sm:$0xff]
      %v2667 = vld [vmem:[%s2662 + $0x20] sm:$0xff]
      %v2668 = vld [vmem:[%s2662 + $0x28] sm:$0xff]
      %v2669 = vld [vmem:[%s2662 + $0x30] sm:$0xff]
      %v2670 = vld [vmem:[%s2662 + $0x38] sm:$0xff]
      %v2671 = vld [vmem:[%s2662 + $0x40] sm:$0xff]
      %v2672 = vld [vmem:[%s2662 + $0x48] sm:$0xff]
      %v2673 = vld [vmem:[%s2662 + $0x50] sm:$0xff]
      %v2674 = vld [vmem:[%s2662 + $0x58] sm:$0xff]
      %v2675 = vld [vmem:[%s2662 + $0x60] sm:$0xff]
      %v2676 = vld [vmem:[%s2662 + $0x68] sm:$0xff]
      %v2677 = vld [vmem:[%s2662 + $0x70] sm:$0xff]
      %v2678 = vld [vmem:[%s2662 + $0x78] sm:$0xff]
      %2680 = vset.pattern.permute.xlu0 0
      %2681 = vperm.xlu0 %2680, %v2663
      %v2682 = vpop.permute.xlu0 %2681
      %2685 = vset.pattern.permute.xlu0 0
      %2686 = vperm.xlu0 %2685, %v2664
      %v2687 = vpop.permute.xlu0 %2686
      %2690 = vset.pattern.permute.xlu0 0
      %2691 = vperm.xlu0 %2690, %v2665
      %v2692 = vpop.permute.xlu0 %2691
      %2695 = vset.pattern.permute.xlu0 0
      %2696 = vperm.xlu0 %2695, %v2666
      %v2697 = vpop.permute.xlu0 %2696
      %2700 = vset.pattern.permute.xlu0 0
      %2701 = vperm.xlu0 %2700, %v2667
      %v2702 = vpop.permute.xlu0 %2701
      %2705 = vset.pattern.permute.xlu0 0
      %2706 = vperm.xlu0 %2705, %v2668
      %v2707 = vpop.permute.xlu0 %2706
      %2710 = vset.pattern.permute.xlu0 0
      %2711 = vperm.xlu0 %2710, %v2669
      %v2712 = vpop.permute.xlu0 %2711
      %2715 = vset.pattern.permute.xlu0 0
      %2716 = vperm.xlu0 %2715, %v2670
      %v2717 = vpop.permute.xlu0 %2716
      %2720 = vset.pattern.permute.xlu0 0
      %2721 = vperm.xlu0 %2720, %v2671
      %v2722 = vpop.permute.xlu0 %2721
      %2725 = vset.pattern.permute.xlu0 0
      %2726 = vperm.xlu0 %2725, %v2672
      %v2727 = vpop.permute.xlu0 %2726
      %2730 = vset.pattern.permute.xlu0 0
      %2731 = vperm.xlu0 %2730, %v2673
      %v2732 = vpop.permute.xlu0 %2731
      %2735 = vset.pattern.permute.xlu0 0
      %2736 = vperm.xlu0 %2735, %v2674
      %v2737 = vpop.permute.xlu0 %2736
      %2740 = vset.pattern.permute.xlu0 0
      %2741 = vperm.xlu0 %2740, %v2675
      %v2742 = vpop.permute.xlu0 %2741
      %2745 = vset.pattern.permute.xlu0 0
      %2746 = vperm.xlu0 %2745, %v2676
      %v2747 = vpop.permute.xlu0 %2746
      %2750 = vset.pattern.permute.xlu0 0
      %2751 = vperm.xlu0 %2750, %v2677
      %v2752 = vpop.permute.xlu0 %2751
      %2755 = vset.pattern.permute.xlu0 0
      %2756 = vperm.xlu0 %2755, %v2678
      %v2757 = vpop.permute.xlu0 %2756
      %v2775 = vunpack.c.l.b16 %v2614
      %v2776 = vunpack.c.l.b16 %v2615
      %v2777 = vunpack.c.l.b16 %v2616
      %v2778 = vunpack.c.l.b16 %v2617
      %v2779 = vunpack.c.l.b16 %v2618
      %v2780 = vunpack.c.l.b16 %v2619
      %v2781 = vunpack.c.l.b16 %v2620
      %v2782 = vunpack.c.l.b16 %v2621
      %v2783 = vunpack.c.l.b16 %v2622
      %v2784 = vunpack.c.l.b16 %v2623
      %v2785 = vunpack.c.l.b16 %v2624
      %v2786 = vunpack.c.l.b16 %v2625
      %v2787 = vunpack.c.l.b16 %v2626
      %v2788 = vunpack.c.l.b16 %v2627
      %v2789 = vunpack.c.l.b16 %v2628
      %v2790 = vunpack.c.l.b16 %v2629
      %v2791 = vpack.c.b16 %v2776, %v2775
      %v2792 = vpack.c.b16 %v2778, %v2777
      %v2793 = vpack.c.b16 %v2780, %v2779
      %v2794 = vpack.c.b16 %v2782, %v2781
      %v2795 = vpack.c.b16 %v2784, %v2783
      %v2796 = vpack.c.b16 %v2786, %v2785
      %v2797 = vpack.c.b16 %v2788, %v2787
      %v2798 = vpack.c.b16 %v2790, %v2789
      %2807 = vmatprep.subr.bf16.mxu0 %v2631
      %2808 = vmatpush1.bf16.msra.mxu0 %v2630
      %2809 = vmatprep.subr.bf16.mxu0 %v2635
      %2810 = vmatpush1.bf16.msra.mxu0 %v2634
      %2811 = vmatprep.subr.bf16.mxu0 %v2639
      %2812 = vmatpush1.bf16.msra.mxu0 %v2638
      %2813 = vmatprep.subr.bf16.mxu0 %v2643
      %2814 = vmatpush1.bf16.msra.mxu0 %v2642
      %2815 = vmatprep.subr.bf16.mxu0 %v2647
      %2816 = vmatpush1.bf16.msra.mxu0 %v2646
      %2817 = vmatprep.subr.bf16.mxu0 %v2651
      %2818 = vmatpush1.bf16.msra.mxu0 %v2650
      %2819 = vmatprep.subr.bf16.mxu0 %v2655
      %2820 = vmatpush1.bf16.msra.mxu0 %v2654
      %2821 = vmatprep.subr.bf16.mxu0 %v2659
      %2822 = vmatpush1.bf16.msra.mxu0 %v2658
      %2823 = vmatprep.subr.bf16.mxu0 0
      %2824 = vmatpush1.bf16.msra.mxu0 0
      %2825 = vmatprep.subr.bf16.mxu0 0
      %2826 = vmatpush1.bf16.msra.mxu0 0
      %2827 = vmatprep.subr.bf16.mxu0 0
      %2828 = vmatpush1.bf16.msra.mxu0 0
      %2829 = vmatprep.subr.bf16.mxu0 0
      %2830 = vmatpush1.bf16.msra.mxu0 0
      %2831 = vmatprep.subr.bf16.mxu0 0
      %2832 = vmatpush1.bf16.msra.mxu0 0
      %2833 = vmatprep.subr.bf16.mxu0 0
      %2834 = vmatpush1.bf16.msra.mxu0 0
      %2835 = vmatprep.subr.bf16.mxu0 0
      %2836 = vmatpush1.bf16.msra.mxu0 0
      %2837 = vmatprep.subr.bf16.mxu0 0
      %2838 = vmatpush1.bf16.msra.mxu0 0
      %2839 = vmatprep.mubr.bf16.mxu0 0
      %2840 = vmatmul.mubr.bf16.gmra.mrb[0].mxu0 %v2791
      %v2841 = vpop.f32.mrb[0].mxu0
      %v2842 = vadd.f32 %v2682, %v2841
      %v2843 = vpop.f32.mrb[0].mxu0
      %v2844 = vadd.f32 %v2682, %v2843
      %v2845 = vpop.f32.mrb[0].mxu0
      %v2846 = vadd.f32 %v2687, %v2845
      %v2847 = vpop.f32.mrb[0].mxu0
      %v2848 = vadd.f32 %v2687, %v2847
      %2849 = vmatprep.mubr.bf16.mxu0 0
      %2850 = vmatmul.mubr.bf16.gmra.mrb[0].mxu0 %v2792
      %v2851 = vpop.f32.mrb[0].mxu0
      %v2852 = vadd.f32 %v2692, %v2851
      %v2853 = vpop.f32.mrb[0].mxu0
      %v2854 = vadd.f32 %v2692, %v2853
      %v2855 = vpop.f32.mrb[0].mxu0
      %v2856 = vadd.f32 %v2697, %v2855
      %v2857 = vpop.f32.mrb[0].mxu0
      %v2858 = vadd.f32 %v2697, %v2857
      %2859 = vmatprep.mubr.bf16.mxu0 0
      %2860 = vmatmul.mubr.bf16.gmra.mrb[0].mxu0 %v2793
      %v2861 = vpop.f32.mrb[0].mxu0
      %v2862 = vadd.f32 %v2702, %v2861
      %v2863 = vpop.f32.mrb[0].mxu0
      %v2864 = vadd.f32 %v2702, %v2863
      %v2865 = vpop.f32.mrb[0].mxu0
      %v2866 = vadd.f32 %v2707, %v2865
      %v2867 = vpop.f32.mrb[0].mxu0
      %v2868 = vadd.f32 %v2707, %v2867
      %2869 = vmatprep.mubr.bf16.mxu0 0
      %2870 = vmatmul.mubr.bf16.gmra.mrb[0].mxu0 %v2794
      %v2871 = vpop.f32.mrb[0].mxu0
      %v2872 = vadd.f32 %v2712, %v2871
      %v2873 = vpop.f32.mrb[0].mxu0
      %v2874 = vadd.f32 %v2712, %v2873
      %v2875 = vpop.f32.mrb[0].mxu0
      %v2876 = vadd.f32 %v2717, %v2875
      %v2877 = vpop.f32.mrb[0].mxu0
      %v2878 = vadd.f32 %v2717, %v2877
      %2879 = vmatprep.mubr.bf16.mxu0 0
      %2880 = vmatmul.mubr.bf16.gmra.mrb[0].mxu0 %v2795
      %v2881 = vpop.f32.mrb[0].mxu0
      %v2882 = vadd.f32 %v2722, %v2881
      %v2883 = vpop.f32.mrb[0].mxu0
      %v2884 = vadd.f32 %v2722, %v2883
      %v2885 = vpop.f32.mrb[0].mxu0
      %v2886 = vadd.f32 %v2727, %v2885
      %v2887 = vpop.f32.mrb[0].mxu0
      %v2888 = vadd.f32 %v2727, %v2887
      %2889 = vmatprep.mubr.bf16.mxu0 0
      %2890 = vmatmul.mubr.bf16.gmra.mrb[0].mxu0 %v2796
      %v2891 = vpop.f32.mrb[0].mxu0
      %v2892 = vadd.f32 %v2732, %v2891
      %v2893 = vpop.f32.mrb[0].mxu0
      %v2894 = vadd.f32 %v2732, %v2893
      %v2895 = vpop.f32.mrb[0].mxu0
      %v2896 = vadd.f32 %v2737, %v2895
      %v2897 = vpop.f32.mrb[0].mxu0
      %v2898 = vadd.f32 %v2737, %v2897
      %2899 = vmatprep.mubr.bf16.mxu0 0
      %2900 = vmatmul.mubr.bf16.gmra.mrb[0].mxu0 %v2797
      %v2901 = vpop.f32.mrb[0].mxu0
      %v2902 = vadd.f32 %v2742, %v2901
      %v2903 = vpop.f32.mrb[0].mxu0
      %v2904 = vadd.f32 %v2742, %v2903
      %v2905 = vpop.f32.mrb[0].mxu0
      %v2906 = vadd.f32 %v2747, %v2905
      %v2907 = vpop.f32.mrb[0].mxu0
      %v2908 = vadd.f32 %v2747, %v2907
      %2909 = vmatprep.mubr.bf16.mxu0 0
      %2910 = vmatmul.mubr.bf16.gmra.mrb[0].mxu0 %v2798
      %v2911 = vpop.f32.mrb[0].mxu0
      %v2912 = vadd.f32 %v2752, %v2911
      %v2913 = vpop.f32.mrb[0].mxu0
      %v2914 = vadd.f32 %v2752, %v2913
      %v2915 = vpop.f32.mrb[0].mxu0
      %v2916 = vadd.f32 %v2757, %v2915
      %v2917 = vpop.f32.mrb[0].mxu0
      %v2918 = vadd.f32 %v2757, %v2917
      %2919 = vdwg.mxu0
      %2920 = vmatprep.subr.bf16.mxu0 %v2633
      %2921 = vmatpush1.bf16.msra.mxu0 %v2632
      %2922 = vmatprep.subr.bf16.mxu0 %v2637
      %2923 = vmatpush1.bf16.msra.mxu0 %v2636
      %2924 = vmatprep.subr.bf16.mxu0 %v2641
      %2925 = vmatpush1.bf16.msra.mxu0 %v2640
      %2926 = vmatprep.subr.bf16.mxu0 %v2645
      %2927 = vmatpush1.bf16.msra.mxu0 %v2644
      %2928 = vmatprep.subr.bf16.mxu0 %v2649
      %2929 = vmatpush1.bf16.msra.mxu0 %v2648
      %2930 = vmatprep.subr.bf16.mxu0 %v2653
      %2931 = vmatpush1.bf16.msra.mxu0 %v2652
      %2932 = vmatprep.subr.bf16.mxu0 %v2657
      %2933 = vmatpush1.bf16.msra.mxu0 %v2656
      %2934 = vmatprep.subr.bf16.mxu0 %v2661
      %2935 = vmatpush1.bf16.msra.mxu0 %v2660
      %2936 = vmatprep.subr.bf16.mxu0 0
      %2937 = vmatpush1.bf16.msra.mxu0 0
      %2938 = vmatprep.subr.bf16.mxu0 0
      %2939 = vmatpush1.bf16.msra.mxu0 0
      %2940 = vmatprep.subr.bf16.mxu0 0
      %2941 = vmatpush1.bf16.msra.mxu0 0
      %2942 = vmatprep.subr.bf16.mxu0 0
      %2943 = vmatpush1.bf16.msra.mxu0 0
      %2944 = vmatprep.subr.bf16.mxu0 0
      %2945 = vmatpush1.bf16.msra.mxu0 0
      %2946 = vmatprep.subr.bf16.mxu0 0
      %2947 = vmatpush1.bf16.msra.mxu0 0
      %2948 = vmatprep.subr.bf16.mxu0 0
      %2949 = vmatpush1.bf16.msra.mxu0 0
      %2950 = vmatprep.subr.bf16.mxu0 0
      %2951 = vmatpush1.bf16.msra.mxu0 0
      %2952 = vmatprep.mubr.bf16.mxu0 0
      %2953 = vmatmul.mubr.bf16.gmra.mrb[0].mxu0 %v2791
      %v2954 = vpop.f32.mrb[0].mxu0
      %v2955 = vadd.f32 %v2682, %v2954
      %v2956 = vpop.f32.mrb[0].mxu0
      %v2957 = vadd.f32 %v2682, %v2956
      %v2958 = vpop.f32.mrb[0].mxu0
      %v2959 = vadd.f32 %v2687, %v2958
      %v2960 = vpop.f32.mrb[0].mxu0
      %v2961 = vadd.f32 %v2687, %v2960
      %2962 = vmatprep.mubr.bf16.mxu0 0
      %2963 = vmatmul.mubr.bf16.gmra.mrb[0].mxu0 %v2792
      %v2964 = vpop.f32.mrb[0].mxu0
      %v2965 = vadd.f32 %v2692, %v2964
      %v2966 = vpop.f32.mrb[0].mxu0
      %v2967 = vadd.f32 %v2692, %v2966
      %v2968 = vpop.f32.mrb[0].mxu0
      %v2969 = vadd.f32 %v2697, %v2968
      %v2970 = vpop.f32.mrb[0].mxu0
      %v2971 = vadd.f32 %v2697, %v2970
      %2972 = vmatprep.mubr.bf16.mxu0 0
      %2973 = vmatmul.mubr.bf16.gmra.mrb[0].mxu0 %v2793
      %v2974 = vpop.f32.mrb[0].mxu0
      %v2975 = vadd.f32 %v2702, %v2974
      %v2976 = vpop.f32.mrb[0].mxu0
      %v2977 = vadd.f32 %v2702, %v2976
      %v2978 = vpop.f32.mrb[0].mxu0
      %v2979 = vadd.f32 %v2707, %v2978
      %v2980 = vpop.f32.mrb[0].mxu0
      %v2981 = vadd.f32 %v2707, %v2980
      %2982 = vmatprep.mubr.bf16.mxu0 0
      %2983 = vmatmul.mubr.bf16.gmra.mrb[0].mxu0 %v2794
      %v2984 = vpop.f32.mrb[0].mxu0
      %v2985 = vadd.f32 %v2712, %v2984
      %v2986 = vpop.f32.mrb[0].mxu0
      %v2987 = vadd.f32 %v2712, %v2986
      %v2988 = vpop.f32.mrb[0].mxu0
      %v2989 = vadd.f32 %v2717, %v2988
      %v2990 = vpop.f32.mrb[0].mxu0
      %v2991 = vadd.f32 %v2717, %v2990
      %2992 = vmatprep.mubr.bf16.mxu0 0
      %2993 = vmatmul.mubr.bf16.gmra.mrb[0].mxu0 %v2795
      %v2994 = vpop.f32.mrb[0].mxu0
      %v2995 = vadd.f32 %v2722, %v2994
      %v2996 = vpop.f32.mrb[0].mxu0
      %v2997 = vadd.f32 %v2722, %v2996
      %v2998 = vpop.f32.mrb[0].mxu0
      %v2999 = vadd.f32 %v2727, %v2998
      %v3000 = vpop.f32.mrb[0].mxu0
      %v3001 = vadd.f32 %v2727, %v3000
      %3002 = vmatprep.mubr.bf16.mxu0 0
      %3003 = vmatmul.mubr.bf16.gmra.mrb[0].mxu0 %v2796
      %v3004 = vpop.f32.mrb[0].mxu0
      %v3005 = vadd.f32 %v2732, %v3004
      %v3006 = vpop.f32.mrb[0].mxu0
      %v3007 = vadd.f32 %v2732, %v3006
      %v3008 = vpop.f32.mrb[0].mxu0
      %v3009 = vadd.f32 %v2737, %v3008
      %v3010 = vpop.f32.mrb[0].mxu0
      %v3011 = vadd.f32 %v2737, %v3010
      %3012 = vmatprep.mubr.bf16.mxu0 0
      %3013 = vmatmul.mubr.bf16.gmra.mrb[0].mxu0 %v2797
      %v3014 = vpop.f32.mrb[0].mxu0
      %v3015 = vadd.f32 %v2742, %v3014
      %v3016 = vpop.f32.mrb[0].mxu0
      %v3017 = vadd.f32 %v2742, %v3016
      %v3018 = vpop.f32.mrb[0].mxu0
      %v3019 = vadd.f32 %v2747, %v3018
      %v3020 = vpop.f32.mrb[0].mxu0
      %v3021 = vadd.f32 %v2747, %v3020
      %3022 = vmatprep.mubr.bf16.mxu0 0
      %3023 = vmatmul.mubr.bf16.gmra.mrb[0].mxu0 %v2798
      %v3024 = vpop.f32.mrb[0].mxu0
      %v3025 = vadd.f32 %v2752, %v3024
      %v3026 = vpop.f32.mrb[0].mxu0
      %v3027 = vadd.f32 %v2752, %v3026
      %v3028 = vpop.f32.mrb[0].mxu0
      %v3029 = vadd.f32 %v2757, %v3028
      %v3030 = vpop.f32.mrb[0].mxu0
      %v3031 = vadd.f32 %v2757, %v3030
      %3032 = vdwg.mxu0
      %v3033 = vmax.f32 %v2842, 0.0
      %v3034 = vmax.f32 %v2844, 0.0
      %v3035 = vmax.f32 %v2955, 0.0
      %v3036 = vmax.f32 %v2957, 0.0
      %v3037 = vmax.f32 %v2846, 0.0
      %v3038 = vmax.f32 %v2848, 0.0
      %v3039 = vmax.f32 %v2959, 0.0
      %v3040 = vmax.f32 %v2961, 0.0
      %v3041 = vmax.f32 %v2852, 0.0
      %v3042 = vmax.f32 %v2854, 0.0
      %v3043 = vmax.f32 %v2965, 0.0
      %v3044 = vmax.f32 %v2967, 0.0
      %v3045 = vmax.f32 %v2856, 0.0
      %v3046 = vmax.f32 %v2858, 0.0
      %v3047 = vmax.f32 %v2969, 0.0
      %v3048 = vmax.f32 %v2971, 0.0
      %v3049 = vmax.f32 %v2862, 0.0
      %v3050 = vmax.f32 %v2864, 0.0
      %v3051 = vmax.f32 %v2975, 0.0
      %v3052 = vmax.f32 %v2977, 0.0
      %v3053 = vmax.f32 %v2866, 0.0
      %v3054 = vmax.f32 %v2868, 0.0
      %v3055 = vmax.f32 %v2979, 0.0
      %v3056 = vmax.f32 %v2981, 0.0
      %v3057 = vmax.f32 %v2872, 0.0
      %v3058 = vmax.f32 %v2874, 0.0
      %v3059 = vmax.f32 %v2985, 0.0
      %v3060 = vmax.f32 %v2987, 0.0
      %v3061 = vmax.f32 %v2876, 0.0
      %v3062 = vmax.f32 %v2878, 0.0
      %v3063 = vmax.f32 %v2989, 0.0
      %v3064 = vmax.f32 %v2991, 0.0
      %v3065 = vmax.f32 %v2882, 0.0
      %v3066 = vmax.f32 %v2884, 0.0
      %v3067 = vmax.f32 %v2995, 0.0
      %v3068 = vmax.f32 %v2997, 0.0
      %v3069 = vmax.f32 %v2886, 0.0
      %v3070 = vmax.f32 %v2888, 0.0
      %v3071 = vmax.f32 %v2999, 0.0
      %v3072 = vmax.f32 %v3001, 0.0
      %v3073 = vmax.f32 %v2892, 0.0
      %v3074 = vmax.f32 %v2894, 0.0
      %v3075 = vmax.f32 %v3005, 0.0
      %v3076 = vmax.f32 %v3007, 0.0
      %v3077 = vmax.f32 %v2896, 0.0
      %v3078 = vmax.f32 %v2898, 0.0
      %v3079 = vmax.f32 %v3009, 0.0
      %v3080 = vmax.f32 %v3011, 0.0
      %v3081 = vmax.f32 %v2902, 0.0
      %v3082 = vmax.f32 %v2904, 0.0
      %v3083 = vmax.f32 %v3015, 0.0
      %v3084 = vmax.f32 %v3017, 0.0
      %v3085 = vmax.f32 %v2906, 0.0
      %v3086 = vmax.f32 %v2908, 0.0
      %v3087 = vmax.f32 %v3019, 0.0
      %v3088 = vmax.f32 %v3021, 0.0
      %v3089 = vmax.f32 %v2912, 0.0
      %v3090 = vmax.f32 %v2914, 0.0
      %v3091 = vmax.f32 %v3025, 0.0
      %v3092 = vmax.f32 %v3027, 0.0
      %v3093 = vmax.f32 %v2916, 0.0
      %v3094 = vmax.f32 %v2918, 0.0
      %v3095 = vmax.f32 %v3029, 0.0
      %v3096 = vmax.f32 %v3031, 0.0
      %s3097 = scalar_lea.vmem %s3, 256
      %v3098 = vld [vmem:[%s3097] sm:$0xf]
      %v3099 = vld [vmem:[%s3097 + $0x4] sm:$0xf]
      %v3100 = vld [vmem:[%s3097 + $0x8] sm:$0xf]
      %v3101 = vld [vmem:[%s3097 + $0xc] sm:$0xf]
      %v3102 = vld [vmem:[%s3097 + $0x10] sm:$0xf]
      %v3103 = vld [vmem:[%s3097 + $0x14] sm:$0xf]
      %v3104 = vld [vmem:[%s3097 + $0x18] sm:$0xf]
      %v3105 = vld [vmem:[%s3097 + $0x1c] sm:$0xf]
      %v3106 = vld [vmem:[%s3097 + $0x20] sm:$0xf]
      %v3107 = vld [vmem:[%s3097 + $0x24] sm:$0xf]
      %v3108 = vld [vmem:[%s3097 + $0x28] sm:$0xf]
      %v3109 = vld [vmem:[%s3097 + $0x2c] sm:$0xf]
      %v3110 = vld [vmem:[%s3097 + $0x30] sm:$0xf]
      %v3111 = vld [vmem:[%s3097 + $0x34] sm:$0xf]
      %v3112 = vld [vmem:[%s3097 + $0x38] sm:$0xf]
      %v3113 = vld [vmem:[%s3097 + $0x3c] sm:$0xf]
      %v3114 = vpack.c.bf16 %v3037, %v3033
      %v3115 = vpack.c.bf16 %v3038, %v3034
      %v3116 = vpack.c.bf16 %v3039, %v3035
      %v3117 = vpack.c.bf16 %v3040, %v3036
      %v3118 = vpack.c.bf16 %v3045, %v3041
      %v3119 = vpack.c.bf16 %v3046, %v3042
      %v3120 = vpack.c.bf16 %v3047, %v3043
      %v3121 = vpack.c.bf16 %v3048, %v3044
      %v3122 = vpack.c.bf16 %v3053, %v3049
      %v3123 = vpack.c.bf16 %v3054, %v3050
      %v3124 = vpack.c.bf16 %v3055, %v3051
      %v3125 = vpack.c.bf16 %v3056, %v3052
      %v3126 = vpack.c.bf16 %v3061, %v3057
      %v3127 = vpack.c.bf16 %v3062, %v3058
      %v3128 = vpack.c.bf16 %v3063, %v3059
      %v3129 = vpack.c.bf16 %v3064, %v3060
      %v3130 = vpack.c.bf16 %v3069, %v3065
      %v3131 = vpack.c.bf16 %v3070, %v3066
      %v3132 = vpack.c.bf16 %v3071, %v3067
      %v3133 = vpack.c.bf16 %v3072, %v3068
      %v3134 = vpack.c.bf16 %v3077, %v3073
      %v3135 = vpack.c.bf16 %v3078, %v3074
      %v3136 = vpack.c.bf16 %v3079, %v3075
      %v3137 = vpack.c.bf16 %v3080, %v3076
      %v3138 = vpack.c.bf16 %v3085, %v3081
      %v3139 = vpack.c.bf16 %v3086, %v3082
      %v3140 = vpack.c.bf16 %v3087, %v3083
      %v3141 = vpack.c.bf16 %v3088, %v3084
      %v3142 = vpack.c.bf16 %v3093, %v3089
      %v3143 = vpack.c.bf16 %v3094, %v3090
      %v3144 = vpack.c.bf16 %v3095, %v3091
      %v3145 = vpack.c.bf16 %v3096, %v3092
      %s3146 = scalar_lea.vmem %s4, 512
      %v3147 = vld [vmem:[%s3146] sm:$0xff]
      %v3148 = vld [vmem:[%s3146 + $0x8] sm:$0xff]
      %v3149 = vld [vmem:[%s3146 + $0x10] sm:$0xff]
      %v3150 = vld [vmem:[%s3146 + $0x18] sm:$0xff]
      %v3151 = vld [vmem:[%s3146 + $0x20] sm:$0xff]
      %v3152 = vld [vmem:[%s3146 + $0x28] sm:$0xff]
      %v3153 = vld [vmem:[%s3146 + $0x30] sm:$0xff]
      %v3154 = vld [vmem:[%s3146 + $0x38] sm:$0xff]
      %v3155 = vld [vmem:[%s3146 + $0x40] sm:$0xff]
      %v3156 = vld [vmem:[%s3146 + $0x48] sm:$0xff]
      %v3157 = vld [vmem:[%s3146 + $0x50] sm:$0xff]
      %v3158 = vld [vmem:[%s3146 + $0x58] sm:$0xff]
      %v3159 = vld [vmem:[%s3146 + $0x60] sm:$0xff]
      %v3160 = vld [vmem:[%s3146 + $0x68] sm:$0xff]
      %v3161 = vld [vmem:[%s3146 + $0x70] sm:$0xff]
      %v3162 = vld [vmem:[%s3146 + $0x78] sm:$0xff]
      %3164 = vset.pattern.permute.xlu0 0
      %3165 = vperm.xlu0 %3164, %v3147
      %v3166 = vpop.permute.xlu0 %3165
      %3169 = vset.pattern.permute.xlu0 0
      %3170 = vperm.xlu0 %3169, %v3148
      %v3171 = vpop.permute.xlu0 %3170
      %3174 = vset.pattern.permute.xlu0 0
      %3175 = vperm.xlu0 %3174, %v3149
      %v3176 = vpop.permute.xlu0 %3175
      %3179 = vset.pattern.permute.xlu0 0
      %3180 = vperm.xlu0 %3179, %v3150
      %v3181 = vpop.permute.xlu0 %3180
      %3184 = vset.pattern.permute.xlu0 0
      %3185 = vperm.xlu0 %3184, %v3151
      %v3186 = vpop.permute.xlu0 %3185
      %3189 = vset.pattern.permute.xlu0 0
      %3190 = vperm.xlu0 %3189, %v3152
      %v3191 = vpop.permute.xlu0 %3190
      %3194 = vset.pattern.permute.xlu0 0
      %3195 = vperm.xlu0 %3194, %v3153
      %v3196 = vpop.permute.xlu0 %3195
      %3199 = vset.pattern.permute.xlu0 0
      %3200 = vperm.xlu0 %3199, %v3154
      %v3201 = vpop.permute.xlu0 %3200
      %3204 = vset.pattern.permute.xlu0 0
      %3205 = vperm.xlu0 %3204, %v3155
      %v3206 = vpop.permute.xlu0 %3205
      %3209 = vset.pattern.permute.xlu0 0
      %3210 = vperm.xlu0 %3209, %v3156
      %v3211 = vpop.permute.xlu0 %3210
      %3214 = vset.pattern.permute.xlu0 0
      %3215 = vperm.xlu0 %3214, %v3157
      %v3216 = vpop.permute.xlu0 %3215
      %3219 = vset.pattern.permute.xlu0 0
      %3220 = vperm.xlu0 %3219, %v3158
      %v3221 = vpop.permute.xlu0 %3220
      %3224 = vset.pattern.permute.xlu0 0
      %3225 = vperm.xlu0 %3224, %v3159
      %v3226 = vpop.permute.xlu0 %3225
      %3229 = vset.pattern.permute.xlu0 0
      %3230 = vperm.xlu0 %3229, %v3160
      %v3231 = vpop.permute.xlu0 %3230
      %3234 = vset.pattern.permute.xlu0 0
      %3235 = vperm.xlu0 %3234, %v3161
      %v3236 = vpop.permute.xlu0 %3235
      %3239 = vset.pattern.permute.xlu0 0
      %3240 = vperm.xlu0 %3239, %v3162
      %v3241 = vpop.permute.xlu0 %3240
      %v3259 = vunpack.c.l.b16 %v3098
      %v3260 = vunpack.c.l.b16 %v3099
      %v3261 = vunpack.c.l.b16 %v3100
      %v3262 = vunpack.c.l.b16 %v3101
      %v3263 = vunpack.c.l.b16 %v3102
      %v3264 = vunpack.c.l.b16 %v3103
      %v3265 = vunpack.c.l.b16 %v3104
      %v3266 = vunpack.c.l.b16 %v3105
      %v3267 = vunpack.c.l.b16 %v3106
      %v3268 = vunpack.c.l.b16 %v3107
      %v3269 = vunpack.c.l.b16 %v3108
      %v3270 = vunpack.c.l.b16 %v3109
      %v3271 = vunpack.c.l.b16 %v3110
      %v3272 = vunpack.c.l.b16 %v3111
      %v3273 = vunpack.c.l.b16 %v3112
      %v3274 = vunpack.c.l.b16 %v3113
      %v3275 = vpack.c.b16 %v3260, %v3259
      %v3276 = vpack.c.b16 %v3262, %v3261
      %v3277 = vpack.c.b16 %v3264, %v3263
      %v3278 = vpack.c.b16 %v3266, %v3265
      %v3279 = vpack.c.b16 %v3268, %v3267
      %v3280 = vpack.c.b16 %v3270, %v3269
      %v3281 = vpack.c.b16 %v3272, %v3271
      %v3282 = vpack.c.b16 %v3274, %v3273
      %3291 = vmatprep.subr.bf16.mxu0 %v3115
      %3292 = vmatpush1.bf16.msra.mxu0 %v3114
      %3293 = vmatprep.subr.bf16.mxu0 %v3119
      %3294 = vmatpush1.bf16.msra.mxu0 %v3118
      %3295 = vmatprep.subr.bf16.mxu0 %v3123
      %3296 = vmatpush1.bf16.msra.mxu0 %v3122
      %3297 = vmatprep.subr.bf16.mxu0 %v3127
      %3298 = vmatpush1.bf16.msra.mxu0 %v3126
      %3299 = vmatprep.subr.bf16.mxu0 %v3131
      %3300 = vmatpush1.bf16.msra.mxu0 %v3130
      %3301 = vmatprep.subr.bf16.mxu0 %v3135
      %3302 = vmatpush1.bf16.msra.mxu0 %v3134
      %3303 = vmatprep.subr.bf16.mxu0 %v3139
      %3304 = vmatpush1.bf16.msra.mxu0 %v3138
      %3305 = vmatprep.subr.bf16.mxu0 %v3143
      %3306 = vmatpush1.bf16.msra.mxu0 %v3142
      %3307 = vmatprep.subr.bf16.mxu0 0
      %3308 = vmatpush1.bf16.msra.mxu0 0
      %3309 = vmatprep.subr.bf16.mxu0 0
      %3310 = vmatpush1.bf16.msra.mxu0 0
      %3311 = vmatprep.subr.bf16.mxu0 0
      %3312 = vmatpush1.bf16.msra.mxu0 0
      %3313 = vmatprep.subr.bf16.mxu0 0
      %3314 = vmatpush1.bf16.msra.mxu0 0
      %3315 = vmatprep.subr.bf16.mxu0 0
      %3316 = vmatpush1.bf16.msra.mxu0 0
      %3317 = vmatprep.subr.bf16.mxu0 0
      %3318 = vmatpush1.bf16.msra.mxu0 0
      %3319 = vmatprep.subr.bf16.mxu0 0
      %3320 = vmatpush1.bf16.msra.mxu0 0
      %3321 = vmatprep.subr.bf16.mxu0 0
      %3322 = vmatpush1.bf16.msra.mxu0 0
      %3323 = vmatprep.mubr.bf16.mxu0 0
      %3324 = vmatmul.mubr.bf16.gmra.mrb[0].mxu0 %v3275
      %v3325 = vpop.f32.mrb[0].mxu0
      %v3326 = vadd.f32 %v3166, %v3325
      %v3327 = vpop.f32.mrb[0].mxu0
      %v3328 = vadd.f32 %v3166, %v3327
      %v3329 = vpop.f32.mrb[0].mxu0
      %v3330 = vadd.f32 %v3171, %v3329
      %v3331 = vpop.f32.mrb[0].mxu0
      %v3332 = vadd.f32 %v3171, %v3331
      %3333 = vmatprep.mubr.bf16.mxu0 0
      %3334 = vmatmul.mubr.bf16.gmra.mrb[0].mxu0 %v3276
      %v3335 = vpop.f32.mrb[0].mxu0
      %v3336 = vadd.f32 %v3176, %v3335
      %v3337 = vpop.f32.mrb[0].mxu0
      %v3338 = vadd.f32 %v3176, %v3337
      %v3339 = vpop.f32.mrb[0].mxu0
      %v3340 = vadd.f32 %v3181, %v3339
      %v3341 = vpop.f32.mrb[0].mxu0
      %v3342 = vadd.f32 %v3181, %v3341
      %3343 = vmatprep.mubr.bf16.mxu0 0
      %3344 = vmatmul.mubr.bf16.gmra.mrb[0].mxu0 %v3277
      %v3345 = vpop.f32.mrb[0].mxu0
      %v3346 = vadd.f32 %v3186, %v3345
      %v3347 = vpop.f32.mrb[0].mxu0
      %v3348 = vadd.f32 %v3186, %v3347
      %v3349 = vpop.f32.mrb[0].mxu0
      %v3350 = vadd.f32 %v3191, %v3349
      %v3351 = vpop.f32.mrb[0].mxu0
      %v3352 = vadd.f32 %v3191, %v3351
      %3353 = vmatprep.mubr.bf16.mxu0 0
      %3354 = vmatmul.mubr.bf16.gmra.mrb[0].mxu0 %v3278
      %v3355 = vpop.f32.mrb[0].mxu0
      %v3356 = vadd.f32 %v3196, %v3355
      %v3357 = vpop.f32.mrb[0].mxu0
      %v3358 = vadd.f32 %v3196, %v3357
      %v3359 = vpop.f32.mrb[0].mxu0
      %v3360 = vadd.f32 %v3201, %v3359
      %v3361 = vpop.f32.mrb[0].mxu0
      %v3362 = vadd.f32 %v3201, %v3361
      %3363 = vmatprep.mubr.bf16.mxu0 0
      %3364 = vmatmul.mubr.bf16.gmra.mrb[0].mxu0 %v3279
      %v3365 = vpop.f32.mrb[0].mxu0
      %v3366 = vadd.f32 %v3206, %v3365
      %v3367 = vpop.f32.mrb[0].mxu0
      %v3368 = vadd.f32 %v3206, %v3367
      %v3369 = vpop.f32.mrb[0].mxu0
      %v3370 = vadd.f32 %v3211, %v3369
      %v3371 = vpop.f32.mrb[0].mxu0
      %v3372 = vadd.f32 %v3211, %v3371
      %3373 = vmatprep.mubr.bf16.mxu0 0
      %3374 = vmatmul.mubr.bf16.gmra.mrb[0].mxu0 %v3280
      %v3375 = vpop.f32.mrb[0].mxu0
      %v3376 = vadd.f32 %v3216, %v3375
      %v3377 = vpop.f32.mrb[0].mxu0
      %v3378 = vadd.f32 %v3216, %v3377
      %v3379 = vpop.f32.mrb[0].mxu0
      %v3380 = vadd.f32 %v3221, %v3379
      %v3381 = vpop.f32.mrb[0].mxu0
      %v3382 = vadd.f32 %v3221, %v3381
      %3383 = vmatprep.mubr.bf16.mxu0 0
      %3384 = vmatmul.mubr.bf16.gmra.mrb[0].mxu0 %v3281
      %v3385 = vpop.f32.mrb[0].mxu0
      %v3386 = vadd.f32 %v3226, %v3385
      %v3387 = vpop.f32.mrb[0].mxu0
      %v3388 = vadd.f32 %v3226, %v3387
      %v3389 = vpop.f32.mrb[0].mxu0
      %v3390 = vadd.f32 %v3231, %v3389
      %v3391 = vpop.f32.mrb[0].mxu0
      %v3392 = vadd.f32 %v3231, %v3391
      %3393 = vmatprep.mubr.bf16.mxu0 0
      %3394 = vmatmul.mubr.bf16.gmra.mrb[0].mxu0 %v3282
      %v3395 = vpop.f32.mrb[0].mxu0
      %v3396 = vadd.f32 %v3236, %v3395
      %v3397 = vpop.f32.mrb[0].mxu0
      %v3398 = vadd.f32 %v3236, %v3397
      %v3399 = vpop.f32.mrb[0].mxu0
      %v3400 = vadd.f32 %v3241, %v3399
      %v3401 = vpop.f32.mrb[0].mxu0
      %v3402 = vadd.f32 %v3241, %v3401
      %3403 = vdwg.mxu0
      %3404 = vmatprep.subr.bf16.mxu0 %v3117
      %3405 = vmatpush1.bf16.msra.mxu0 %v3116
      %3406 = vmatprep.subr.bf16.mxu0 %v3121
      %3407 = vmatpush1.bf16.msra.mxu0 %v3120
      %3408 = vmatprep.subr.bf16.mxu0 %v3125
      %3409 = vmatpush1.bf16.msra.mxu0 %v3124
      %3410 = vmatprep.subr.bf16.mxu0 %v3129
      %3411 = vmatpush1.bf16.msra.mxu0 %v3128
      %3412 = vmatprep.subr.bf16.mxu0 %v3133
      %3413 = vmatpush1.bf16.msra.mxu0 %v3132
      %3414 = vmatprep.subr.bf16.mxu0 %v3137
      %3415 = vmatpush1.bf16.msra.mxu0 %v3136
      %3416 = vmatprep.subr.bf16.mxu0 %v3141
      %3417 = vmatpush1.bf16.msra.mxu0 %v3140
      %3418 = vmatprep.subr.bf16.mxu0 %v3145
      %3419 = vmatpush1.bf16.msra.mxu0 %v3144
      %3420 = vmatprep.subr.bf16.mxu0 0
      %3421 = vmatpush1.bf16.msra.mxu0 0
      %3422 = vmatprep.subr.bf16.mxu0 0
      %3423 = vmatpush1.bf16.msra.mxu0 0
      %3424 = vmatprep.subr.bf16.mxu0 0
      %3425 = vmatpush1.bf16.msra.mxu0 0
      %3426 = vmatprep.subr.bf16.mxu0 0
      %3427 = vmatpush1.bf16.msra.mxu0 0
      %3428 = vmatprep.subr.bf16.mxu0 0
      %3429 = vmatpush1.bf16.msra.mxu0 0
      %3430 = vmatprep.subr.bf16.mxu0 0
      %3431 = vmatpush1.bf16.msra.mxu0 0
      %3432 = vmatprep.subr.bf16.mxu0 0
      %3433 = vmatpush1.bf16.msra.mxu0 0
      %3434 = vmatprep.subr.bf16.mxu0 0
      %3435 = vmatpush1.bf16.msra.mxu0 0
      %3436 = vmatprep.mubr.bf16.mxu0 0
      %3437 = vmatmul.mubr.bf16.gmra.mrb[0].mxu0 %v3275
      %v3438 = vpop.f32.mrb[0].mxu0
      %v3439 = vadd.f32 %v3166, %v3438
      %v3440 = vpop.f32.mrb[0].mxu0
      %v3441 = vadd.f32 %v3166, %v3440
      %v3442 = vpop.f32.mrb[0].mxu0
      %v3443 = vadd.f32 %v3171, %v3442
      %v3444 = vpop.f32.mrb[0].mxu0
      %v3445 = vadd.f32 %v3171, %v3444
      %3446 = vmatprep.mubr.bf16.mxu0 0
      %3447 = vmatmul.mubr.bf16.gmra.mrb[0].mxu0 %v3276
      %v3448 = vpop.f32.mrb[0].mxu0
      %v3449 = vadd.f32 %v3176, %v3448
      %v3450 = vpop.f32.mrb[0].mxu0
      %v3451 = vadd.f32 %v3176, %v3450
      %v3452 = vpop.f32.mrb[0].mxu0
      %v3453 = vadd.f32 %v3181, %v3452
      %v3454 = vpop.f32.mrb[0].mxu0
      %v3455 = vadd.f32 %v3181, %v3454
      %3456 = vmatprep.mubr.bf16.mxu0 0
      %3457 = vmatmul.mubr.bf16.gmra.mrb[0].mxu0 %v3277
      %v3458 = vpop.f32.mrb[0].mxu0
      %v3459 = vadd.f32 %v3186, %v3458
      %v3460 = vpop.f32.mrb[0].mxu0
      %v3461 = vadd.f32 %v3186, %v3460
      %v3462 = vpop.f32.mrb[0].mxu0
      %v3463 = vadd.f32 %v3191, %v3462
      %v3464 = vpop.f32.mrb[0].mxu0
      %v3465 = vadd.f32 %v3191, %v3464
      %3466 = vmatprep.mubr.bf16.mxu0 0
      %3467 = vmatmul.mubr.bf16.gmra.mrb[0].mxu0 %v3278
      %v3468 = vpop.f32.mrb[0].mxu0
      %v3469 = vadd.f32 %v3196, %v3468
      %v3470 = vpop.f32.mrb[0].mxu0
      %v3471 = vadd.f32 %v3196, %v3470
      %v3472 = vpop.f32.mrb[0].mxu0
      %v3473 = vadd.f32 %v3201, %v3472
      %v3474 = vpop.f32.mrb[0].mxu0
      %v3475 = vadd.f32 %v3201, %v3474
      %3476 = vmatprep.mubr.bf16.mxu0 0
      %3477 = vmatmul.mubr.bf16.gmra.mrb[0].mxu0 %v3279
      %v3478 = vpop.f32.mrb[0].mxu0
      %v3479 = vadd.f32 %v3206, %v3478
      %v3480 = vpop.f32.mrb[0].mxu0
      %v3481 = vadd.f32 %v3206, %v3480
      %v3482 = vpop.f32.mrb[0].mxu0
      %v3483 = vadd.f32 %v3211, %v3482
      %v3484 = vpop.f32.mrb[0].mxu0
      %v3485 = vadd.f32 %v3211, %v3484
      %3486 = vmatprep.mubr.bf16.mxu0 0
      %3487 = vmatmul.mubr.bf16.gmra.mrb[0].mxu0 %v3280
      %v3488 = vpop.f32.mrb[0].mxu0
      %v3489 = vadd.f32 %v3216, %v3488
      %v3490 = vpop.f32.mrb[0].mxu0
      %v3491 = vadd.f32 %v3216, %v3490
      %v3492 = vpop.f32.mrb[0].mxu0
      %v3493 = vadd.f32 %v3221, %v3492
      %v3494 = vpop.f32.mrb[0].mxu0
      %v3495 = vadd.f32 %v3221, %v3494
      %3496 = vmatprep.mubr.bf16.mxu0 0
      %3497 = vmatmul.mubr.bf16.gmra.mrb[0].mxu0 %v3281
      %v3498 = vpop.f32.mrb[0].mxu0
      %v3499 = vadd.f32 %v3226, %v3498
      %v3500 = vpop.f32.mrb[0].mxu0
      %v3501 = vadd.f32 %v3226, %v3500
      %v3502 = vpop.f32.mrb[0].mxu0
      %v3503 = vadd.f32 %v3231, %v3502
      %v3504 = vpop.f32.mrb[0].mxu0
      %v3505 = vadd.f32 %v3231, %v3504
      %3506 = vmatprep.mubr.bf16.mxu0 0
      %3507 = vmatmul.mubr.bf16.gmra.mrb[0].mxu0 %v3282
      %v3508 = vpop.f32.mrb[0].mxu0
      %v3509 = vadd.f32 %v3236, %v3508
      %v3510 = vpop.f32.mrb[0].mxu0
      %v3511 = vadd.f32 %v3236, %v3510
      %v3512 = vpop.f32.mrb[0].mxu0
      %v3513 = vadd.f32 %v3241, %v3512
      %v3514 = vpop.f32.mrb[0].mxu0
      %v3515 = vadd.f32 %v3241, %v3514
      %3516 = vdwg.mxu0
      %v3517 = vmax.f32 %v3326, 0.0
      %v3518 = vmax.f32 %v3328, 0.0
      %v3519 = vmax.f32 %v3439, 0.0
      %v3520 = vmax.f32 %v3441, 0.0
      %v3521 = vmax.f32 %v3330, 0.0
      %v3522 = vmax.f32 %v3332, 0.0
      %v3523 = vmax.f32 %v3443, 0.0
      %v3524 = vmax.f32 %v3445, 0.0
      %v3525 = vmax.f32 %v3336, 0.0
      %v3526 = vmax.f32 %v3338, 0.0
      %v3527 = vmax.f32 %v3449, 0.0
      %v3528 = vmax.f32 %v3451, 0.0
      %v3529 = vmax.f32 %v3340, 0.0
      %v3530 = vmax.f32 %v3342, 0.0
      %v3531 = vmax.f32 %v3453, 0.0
      %v3532 = vmax.f32 %v3455, 0.0
      %v3533 = vmax.f32 %v3346, 0.0
      %v3534 = vmax.f32 %v3348, 0.0
      %v3535 = vmax.f32 %v3459, 0.0
      %v3536 = vmax.f32 %v3461, 0.0
      %v3537 = vmax.f32 %v3350, 0.0
      %v3538 = vmax.f32 %v3352, 0.0
      %v3539 = vmax.f32 %v3463, 0.0
      %v3540 = vmax.f32 %v3465, 0.0
      %v3541 = vmax.f32 %v3356, 0.0
      %v3542 = vmax.f32 %v3358, 0.0
      %v3543 = vmax.f32 %v3469, 0.0
      %v3544 = vmax.f32 %v3471, 0.0
      %v3545 = vmax.f32 %v3360, 0.0
      %v3546 = vmax.f32 %v3362, 0.0
      %v3547 = vmax.f32 %v3473, 0.0
      %v3548 = vmax.f32 %v3475, 0.0
      %v3549 = vmax.f32 %v3366, 0.0
      %v3550 = vmax.f32 %v3368, 0.0
      %v3551 = vmax.f32 %v3479, 0.0
      %v3552 = vmax.f32 %v3481, 0.0
      %v3553 = vmax.f32 %v3370, 0.0
      %v3554 = vmax.f32 %v3372, 0.0
      %v3555 = vmax.f32 %v3483, 0.0
      %v3556 = vmax.f32 %v3485, 0.0
      %v3557 = vmax.f32 %v3376, 0.0
      %v3558 = vmax.f32 %v3378, 0.0
      %v3559 = vmax.f32 %v3489, 0.0
      %v3560 = vmax.f32 %v3491, 0.0
      %v3561 = vmax.f32 %v3380, 0.0
      %v3562 = vmax.f32 %v3382, 0.0
      %v3563 = vmax.f32 %v3493, 0.0
      %v3564 = vmax.f32 %v3495, 0.0
      %v3565 = vmax.f32 %v3386, 0.0
      %v3566 = vmax.f32 %v3388, 0.0
      %v3567 = vmax.f32 %v3499, 0.0
      %v3568 = vmax.f32 %v3501, 0.0
      %v3569 = vmax.f32 %v3390, 0.0
      %v3570 = vmax.f32 %v3392, 0.0
      %v3571 = vmax.f32 %v3503, 0.0
      %v3572 = vmax.f32 %v3505, 0.0
      %v3573 = vmax.f32 %v3396, 0.0
      %v3574 = vmax.f32 %v3398, 0.0
      %v3575 = vmax.f32 %v3509, 0.0
      %v3576 = vmax.f32 %v3511, 0.0
      %v3577 = vmax.f32 %v3400, 0.0
      %v3578 = vmax.f32 %v3402, 0.0
      %v3579 = vmax.f32 %v3513, 0.0
      %v3580 = vmax.f32 %v3515, 0.0
      %s3581 = scalar_lea.vmem %s3, 320
      %v3582 = vld [vmem:[%s3581] sm:$0xf]
      %v3583 = vld [vmem:[%s3581 + $0x4] sm:$0xf]
      %v3584 = vld [vmem:[%s3581 + $0x8] sm:$0xf]
      %v3585 = vld [vmem:[%s3581 + $0xc] sm:$0xf]
      %v3586 = vld [vmem:[%s3581 + $0x10] sm:$0xf]
      %v3587 = vld [vmem:[%s3581 + $0x14] sm:$0xf]
      %v3588 = vld [vmem:[%s3581 + $0x18] sm:$0xf]
      %v3589 = vld [vmem:[%s3581 + $0x1c] sm:$0xf]
      %v3590 = vld [vmem:[%s3581 + $0x20] sm:$0xf]
      %v3591 = vld [vmem:[%s3581 + $0x24] sm:$0xf]
      %v3592 = vld [vmem:[%s3581 + $0x28] sm:$0xf]
      %v3593 = vld [vmem:[%s3581 + $0x2c] sm:$0xf]
      %v3594 = vld [vmem:[%s3581 + $0x30] sm:$0xf]
      %v3595 = vld [vmem:[%s3581 + $0x34] sm:$0xf]
      %v3596 = vld [vmem:[%s3581 + $0x38] sm:$0xf]
      %v3597 = vld [vmem:[%s3581 + $0x3c] sm:$0xf]
      %v3598 = vpack.c.bf16 %v3521, %v3517
      %v3599 = vpack.c.bf16 %v3522, %v3518
      %v3600 = vpack.c.bf16 %v3523, %v3519
      %v3601 = vpack.c.bf16 %v3524, %v3520
      %v3602 = vpack.c.bf16 %v3529, %v3525
      %v3603 = vpack.c.bf16 %v3530, %v3526
      %v3604 = vpack.c.bf16 %v3531, %v3527
      %v3605 = vpack.c.bf16 %v3532, %v3528
      %v3606 = vpack.c.bf16 %v3537, %v3533
      %v3607 = vpack.c.bf16 %v3538, %v3534
      %v3608 = vpack.c.bf16 %v3539, %v3535
      %v3609 = vpack.c.bf16 %v3540, %v3536
      %v3610 = vpack.c.bf16 %v3545, %v3541
      %v3611 = vpack.c.bf16 %v3546, %v3542
      %v3612 = vpack.c.bf16 %v3547, %v3543
      %v3613 = vpack.c.bf16 %v3548, %v3544
      %v3614 = vpack.c.bf16 %v3553, %v3549
      %v3615 = vpack.c.bf16 %v3554, %v3550
      %v3616 = vpack.c.bf16 %v3555, %v3551
      %v3617 = vpack.c.bf16 %v3556, %v3552
      %v3618 = vpack.c.bf16 %v3561, %v3557
      %v3619 = vpack.c.bf16 %v3562, %v3558
      %v3620 = vpack.c.bf16 %v3563, %v3559
      %v3621 = vpack.c.bf16 %v3564, %v3560
      %v3622 = vpack.c.bf16 %v3569, %v3565
      %v3623 = vpack.c.bf16 %v3570, %v3566
      %v3624 = vpack.c.bf16 %v3571, %v3567
      %v3625 = vpack.c.bf16 %v3572, %v3568
      %v3626 = vpack.c.bf16 %v3577, %v3573
      %v3627 = vpack.c.bf16 %v3578, %v3574
      %v3628 = vpack.c.bf16 %v3579, %v3575
      %v3629 = vpack.c.bf16 %v3580, %v3576
      %s3630 = scalar_lea.vmem %s4, 640
      %v3631 = vld [vmem:[%s3630] sm:$0xff]
      %v3632 = vld [vmem:[%s3630 + $0x8] sm:$0xff]
      %v3633 = vld [vmem:[%s3630 + $0x10] sm:$0xff]
      %v3634 = vld [vmem:[%s3630 + $0x18] sm:$0xff]
      %v3635 = vld [vmem:[%s3630 + $0x20] sm:$0xff]
      %v3636 = vld [vmem:[%s3630 + $0x28] sm:$0xff]
      %v3637 = vld [vmem:[%s3630 + $0x30] sm:$0xff]
      %v3638 = vld [vmem:[%s3630 + $0x38] sm:$0xff]
      %v3639 = vld [vmem:[%s3630 + $0x40] sm:$0xff]
      %v3640 = vld [vmem:[%s3630 + $0x48] sm:$0xff]
      %v3641 = vld [vmem:[%s3630 + $0x50] sm:$0xff]
      %v3642 = vld [vmem:[%s3630 + $0x58] sm:$0xff]
      %v3643 = vld [vmem:[%s3630 + $0x60] sm:$0xff]
      %v3644 = vld [vmem:[%s3630 + $0x68] sm:$0xff]
      %v3645 = vld [vmem:[%s3630 + $0x70] sm:$0xff]
      %v3646 = vld [vmem:[%s3630 + $0x78] sm:$0xff]
      %3648 = vset.pattern.permute.xlu0 0
      %3649 = vperm.xlu0 %3648, %v3631
      %v3650 = vpop.permute.xlu0 %3649
      %3653 = vset.pattern.permute.xlu0 0
      %3654 = vperm.xlu0 %3653, %v3632
      %v3655 = vpop.permute.xlu0 %3654
      %3658 = vset.pattern.permute.xlu0 0
      %3659 = vperm.xlu0 %3658, %v3633
      %v3660 = vpop.permute.xlu0 %3659
      %3663 = vset.pattern.permute.xlu0 0
      %3664 = vperm.xlu0 %3663, %v3634
      %v3665 = vpop.permute.xlu0 %3664
      %3668 = vset.pattern.permute.xlu0 0
      %3669 = vperm.xlu0 %3668, %v3635
      %v3670 = vpop.permute.xlu0 %3669
      %3673 = vset.pattern.permute.xlu0 0
      %3674 = vperm.xlu0 %3673, %v3636
      %v3675 = vpop.permute.xlu0 %3674
      %3678 = vset.pattern.permute.xlu0 0
      %3679 = vperm.xlu0 %3678, %v3637
      %v3680 = vpop.permute.xlu0 %3679
      %3683 = vset.pattern.permute.xlu0 0
      %3684 = vperm.xlu0 %3683, %v3638
      %v3685 = vpop.permute.xlu0 %3684
      %3688 = vset.pattern.permute.xlu0 0
      %3689 = vperm.xlu0 %3688, %v3639
      %v3690 = vpop.permute.xlu0 %3689
      %3693 = vset.pattern.permute.xlu0 0
      %3694 = vperm.xlu0 %3693, %v3640
      %v3695 = vpop.permute.xlu0 %3694
      %3698 = vset.pattern.permute.xlu0 0
      %3699 = vperm.xlu0 %3698, %v3641
      %v3700 = vpop.permute.xlu0 %3699
      %3703 = vset.pattern.permute.xlu0 0
      %3704 = vperm.xlu0 %3703, %v3642
      %v3705 = vpop.permute.xlu0 %3704
      %3708 = vset.pattern.permute.xlu0 0
      %3709 = vperm.xlu0 %3708, %v3643
      %v3710 = vpop.permute.xlu0 %3709
      %3713 = vset.pattern.permute.xlu0 0
      %3714 = vperm.xlu0 %3713, %v3644
      %v3715 = vpop.permute.xlu0 %3714
      %3718 = vset.pattern.permute.xlu0 0
      %3719 = vperm.xlu0 %3718, %v3645
      %v3720 = vpop.permute.xlu0 %3719
      %3723 = vset.pattern.permute.xlu0 0
      %3724 = vperm.xlu0 %3723, %v3646
      %v3725 = vpop.permute.xlu0 %3724
      %v3743 = vunpack.c.l.b16 %v3582
      %v3744 = vunpack.c.l.b16 %v3583
      %v3745 = vunpack.c.l.b16 %v3584
      %v3746 = vunpack.c.l.b16 %v3585
      %v3747 = vunpack.c.l.b16 %v3586
      %v3748 = vunpack.c.l.b16 %v3587
      %v3749 = vunpack.c.l.b16 %v3588
      %v3750 = vunpack.c.l.b16 %v3589
      %v3751 = vunpack.c.l.b16 %v3590
      %v3752 = vunpack.c.l.b16 %v3591
      %v3753 = vunpack.c.l.b16 %v3592
      %v3754 = vunpack.c.l.b16 %v3593
      %v3755 = vunpack.c.l.b16 %v3594
      %v3756 = vunpack.c.l.b16 %v3595
      %v3757 = vunpack.c.l.b16 %v3596
      %v3758 = vunpack.c.l.b16 %v3597
      %v3759 = vpack.c.b16 %v3744, %v3743
      %v3760 = vpack.c.b16 %v3746, %v3745
      %v3761 = vpack.c.b16 %v3748, %v3747
      %v3762 = vpack.c.b16 %v3750, %v3749
      %v3763 = vpack.c.b16 %v3752, %v3751
      %v3764 = vpack.c.b16 %v3754, %v3753
      %v3765 = vpack.c.b16 %v3756, %v3755
      %v3766 = vpack.c.b16 %v3758, %v3757
      %3775 = vmatprep.subr.bf16.mxu0 %v3599
      %3776 = vmatpush1.bf16.msra.mxu0 %v3598
      %3777 = vmatprep.subr.bf16.mxu0 %v3603
      %3778 = vmatpush1.bf16.msra.mxu0 %v3602
      %3779 = vmatprep.subr.bf16.mxu0 %v3607
      %3780 = vmatpush1.bf16.msra.mxu0 %v3606
      %3781 = vmatprep.subr.bf16.mxu0 %v3611
      %3782 = vmatpush1.bf16.msra.mxu0 %v3610
      %3783 = vmatprep.subr.bf16.mxu0 %v3615
      %3784 = vmatpush1.bf16.msra.mxu0 %v3614
      %3785 = vmatprep.subr.bf16.mxu0 %v3619
      %3786 = vmatpush1.bf16.msra.mxu0 %v3618
      %3787 = vmatprep.subr.bf16.mxu0 %v3623
      %3788 = vmatpush1.bf16.msra.mxu0 %v3622
      %3789 = vmatprep.subr.bf16.mxu0 %v3627
      %3790 = vmatpush1.bf16.msra.mxu0 %v3626
      %3791 = vmatprep.subr.bf16.mxu0 0
      %3792 = vmatpush1.bf16.msra.mxu0 0
      %3793 = vmatprep.subr.bf16.mxu0 0
      %3794 = vmatpush1.bf16.msra.mxu0 0
      %3795 = vmatprep.subr.bf16.mxu0 0
      %3796 = vmatpush1.bf16.msra.mxu0 0
      %3797 = vmatprep.subr.bf16.mxu0 0
      %3798 = vmatpush1.bf16.msra.mxu0 0
      %3799 = vmatprep.subr.bf16.mxu0 0
      %3800 = vmatpush1.bf16.msra.mxu0 0
      %3801 = vmatprep.subr.bf16.mxu0 0
      %3802 = vmatpush1.bf16.msra.mxu0 0
      %3803 = vmatprep.subr.bf16.mxu0 0
      %3804 = vmatpush1.bf16.msra.mxu0 0
      %3805 = vmatprep.subr.bf16.mxu0 0
      %3806 = vmatpush1.bf16.msra.mxu0 0
      %3807 = vmatprep.mubr.bf16.mxu0 0
      %3808 = vmatmul.mubr.bf16.gmra.mrb[0].mxu0 %v3759
      %v3809 = vpop.f32.mrb[0].mxu0
      %v3810 = vadd.f32 %v3650, %v3809
      %v3811 = vpop.f32.mrb[0].mxu0
      %v3812 = vadd.f32 %v3650, %v3811
      %v3813 = vpop.f32.mrb[0].mxu0
      %v3814 = vadd.f32 %v3655, %v3813
      %v3815 = vpop.f32.mrb[0].mxu0
      %v3816 = vadd.f32 %v3655, %v3815
      %3817 = vmatprep.mubr.bf16.mxu0 0
      %3818 = vmatmul.mubr.bf16.gmra.mrb[0].mxu0 %v3760
      %v3819 = vpop.f32.mrb[0].mxu0
      %v3820 = vadd.f32 %v3660, %v3819
      %v3821 = vpop.f32.mrb[0].mxu0
      %v3822 = vadd.f32 %v3660, %v3821
      %v3823 = vpop.f32.mrb[0].mxu0
      %v3824 = vadd.f32 %v3665, %v3823
      %v3825 = vpop.f32.mrb[0].mxu0
      %v3826 = vadd.f32 %v3665, %v3825
      %3827 = vmatprep.mubr.bf16.mxu0 0
      %3828 = vmatmul.mubr.bf16.gmra.mrb[0].mxu0 %v3761
      %v3829 = vpop.f32.mrb[0].mxu0
      %v3830 = vadd.f32 %v3670, %v3829
      %v3831 = vpop.f32.mrb[0].mxu0
      %v3832 = vadd.f32 %v3670, %v3831
      %v3833 = vpop.f32.mrb[0].mxu0
      %v3834 = vadd.f32 %v3675, %v3833
      %v3835 = vpop.f32.mrb[0].mxu0
      %v3836 = vadd.f32 %v3675, %v3835
      %3837 = vmatprep.mubr.bf16.mxu0 0
      %3838 = vmatmul.mubr.bf16.gmra.mrb[0].mxu0 %v3762
      %v3839 = vpop.f32.mrb[0].mxu0
      %v3840 = vadd.f32 %v3680, %v3839
      %v3841 = vpop.f32.mrb[0].mxu0
      %v3842 = vadd.f32 %v3680, %v3841
      %v3843 = vpop.f32.mrb[0].mxu0
      %v3844 = vadd.f32 %v3685, %v3843
      %v3845 = vpop.f32.mrb[0].mxu0
      %v3846 = vadd.f32 %v3685, %v3845
      %3847 = vmatprep.mubr.bf16.mxu0 0
      %3848 = vmatmul.mubr.bf16.gmra.mrb[0].mxu0 %v3763
      %v3849 = vpop.f32.mrb[0].mxu0
      %v3850 = vadd.f32 %v3690, %v3849
      %v3851 = vpop.f32.mrb[0].mxu0
      %v3852 = vadd.f32 %v3690, %v3851
      %v3853 = vpop.f32.mrb[0].mxu0
      %v3854 = vadd.f32 %v3695, %v3853
      %v3855 = vpop.f32.mrb[0].mxu0
      %v3856 = vadd.f32 %v3695, %v3855
      %3857 = vmatprep.mubr.bf16.mxu0 0
      %3858 = vmatmul.mubr.bf16.gmra.mrb[0].mxu0 %v3764
      %v3859 = vpop.f32.mrb[0].mxu0
      %v3860 = vadd.f32 %v3700, %v3859
      %v3861 = vpop.f32.mrb[0].mxu0
      %v3862 = vadd.f32 %v3700, %v3861
      %v3863 = vpop.f32.mrb[0].mxu0
      %v3864 = vadd.f32 %v3705, %v3863
      %v3865 = vpop.f32.mrb[0].mxu0
      %v3866 = vadd.f32 %v3705, %v3865
      %3867 = vmatprep.mubr.bf16.mxu0 0
      %3868 = vmatmul.mubr.bf16.gmra.mrb[0].mxu0 %v3765
      %v3869 = vpop.f32.mrb[0].mxu0
      %v3870 = vadd.f32 %v3710, %v3869
      %v3871 = vpop.f32.mrb[0].mxu0
      %v3872 = vadd.f32 %v3710, %v3871
      %v3873 = vpop.f32.mrb[0].mxu0
      %v3874 = vadd.f32 %v3715, %v3873
      %v3875 = vpop.f32.mrb[0].mxu0
      %v3876 = vadd.f32 %v3715, %v3875
      %3877 = vmatprep.mubr.bf16.mxu0 0
      %3878 = vmatmul.mubr.bf16.gmra.mrb[0].mxu0 %v3766
      %v3879 = vpop.f32.mrb[0].mxu0
      %v3880 = vadd.f32 %v3720, %v3879
      %v3881 = vpop.f32.mrb[0].mxu0
      %v3882 = vadd.f32 %v3720, %v3881
      %v3883 = vpop.f32.mrb[0].mxu0
      %v3884 = vadd.f32 %v3725, %v3883
      %v3885 = vpop.f32.mrb[0].mxu0
      %v3886 = vadd.f32 %v3725, %v3885
      %3887 = vdwg.mxu0
      %3888 = vmatprep.subr.bf16.mxu0 %v3601
      %3889 = vmatpush1.bf16.msra.mxu0 %v3600
      %3890 = vmatprep.subr.bf16.mxu0 %v3605
      %3891 = vmatpush1.bf16.msra.mxu0 %v3604
      %3892 = vmatprep.subr.bf16.mxu0 %v3609
      %3893 = vmatpush1.bf16.msra.mxu0 %v3608
      %3894 = vmatprep.subr.bf16.mxu0 %v3613
      %3895 = vmatpush1.bf16.msra.mxu0 %v3612
      %3896 = vmatprep.subr.bf16.mxu0 %v3617
      %3897 = vmatpush1.bf16.msra.mxu0 %v3616
      %3898 = vmatprep.subr.bf16.mxu0 %v3621
      %3899 = vmatpush1.bf16.msra.mxu0 %v3620
      %3900 = vmatprep.subr.bf16.mxu0 %v3625
      %3901 = vmatpush1.bf16.msra.mxu0 %v3624
      %3902 = vmatprep.subr.bf16.mxu0 %v3629
      %3903 = vmatpush1.bf16.msra.mxu0 %v3628
      %3904 = vmatprep.subr.bf16.mxu0 0
      %3905 = vmatpush1.bf16.msra.mxu0 0
      %3906 = vmatprep.subr.bf16.mxu0 0
      %3907 = vmatpush1.bf16.msra.mxu0 0
      %3908 = vmatprep.subr.bf16.mxu0 0
      %3909 = vmatpush1.bf16.msra.mxu0 0
      %3910 = vmatprep.subr.bf16.mxu0 0
      %3911 = vmatpush1.bf16.msra.mxu0 0
      %3912 = vmatprep.subr.bf16.mxu0 0
      %3913 = vmatpush1.bf16.msra.mxu0 0
      %3914 = vmatprep.subr.bf16.mxu0 0
      %3915 = vmatpush1.bf16.msra.mxu0 0
      %3916 = vmatprep.subr.bf16.mxu0 0
      %3917 = vmatpush1.bf16.msra.mxu0 0
      %3918 = vmatprep.subr.bf16.mxu0 0
      %3919 = vmatpush1.bf16.msra.mxu0 0
      %3920 = vmatprep.mubr.bf16.mxu0 0
      %3921 = vmatmul.mubr.bf16.gmra.mrb[0].mxu0 %v3759
      %v3922 = vpop.f32.mrb[0].mxu0
      %v3923 = vadd.f32 %v3650, %v3922
      %v3924 = vpop.f32.mrb[0].mxu0
      %v3925 = vadd.f32 %v3650, %v3924
      %v3926 = vpop.f32.mrb[0].mxu0
      %v3927 = vadd.f32 %v3655, %v3926
      %v3928 = vpop.f32.mrb[0].mxu0
      %v3929 = vadd.f32 %v3655, %v3928
      %3930 = vmatprep.mubr.bf16.mxu0 0
      %3931 = vmatmul.mubr.bf16.gmra.mrb[0].mxu0 %v3760
      %v3932 = vpop.f32.mrb[0].mxu0
      %v3933 = vadd.f32 %v3660, %v3932
      %v3934 = vpop.f32.mrb[0].mxu0
      %v3935 = vadd.f32 %v3660, %v3934
      %v3936 = vpop.f32.mrb[0].mxu0
      %v3937 = vadd.f32 %v3665, %v3936
      %v3938 = vpop.f32.mrb[0].mxu0
      %v3939 = vadd.f32 %v3665, %v3938
      %3940 = vmatprep.mubr.bf16.mxu0 0
      %3941 = vmatmul.mubr.bf16.gmra.mrb[0].mxu0 %v3761
      %v3942 = vpop.f32.mrb[0].mxu0
      %v3943 = vadd.f32 %v3670, %v3942
      %v3944 = vpop.f32.mrb[0].mxu0
      %v3945 = vadd.f32 %v3670, %v3944
      %v3946 = vpop.f32.mrb[0].mxu0
      %v3947 = vadd.f32 %v3675, %v3946
      %v3948 = vpop.f32.mrb[0].mxu0
      %v3949 = vadd.f32 %v3675, %v3948
      %3950 = vmatprep.mubr.bf16.mxu0 0
      %3951 = vmatmul.mubr.bf16.gmra.mrb[0].mxu0 %v3762
      %v3952 = vpop.f32.mrb[0].mxu0
      %v3953 = vadd.f32 %v3680, %v3952
      %v3954 = vpop.f32.mrb[0].mxu0
      %v3955 = vadd.f32 %v3680, %v3954
      %v3956 = vpop.f32.mrb[0].mxu0
      %v3957 = vadd.f32 %v3685, %v3956
      %v3958 = vpop.f32.mrb[0].mxu0
      %v3959 = vadd.f32 %v3685, %v3958
      %3960 = vmatprep.mubr.bf16.mxu0 0
      %3961 = vmatmul.mubr.bf16.gmra.mrb[0].mxu0 %v3763
      %v3962 = vpop.f32.mrb[0].mxu0
      %v3963 = vadd.f32 %v3690, %v3962
      %v3964 = vpop.f32.mrb[0].mxu0
      %v3965 = vadd.f32 %v3690, %v3964
      %v3966 = vpop.f32.mrb[0].mxu0
      %v3967 = vadd.f32 %v3695, %v3966
      %v3968 = vpop.f32.mrb[0].mxu0
      %v3969 = vadd.f32 %v3695, %v3968
      %3970 = vmatprep.mubr.bf16.mxu0 0
      %3971 = vmatmul.mubr.bf16.gmra.mrb[0].mxu0 %v3764
      %v3972 = vpop.f32.mrb[0].mxu0
      %v3973 = vadd.f32 %v3700, %v3972
      %v3974 = vpop.f32.mrb[0].mxu0
      %v3975 = vadd.f32 %v3700, %v3974
      %v3976 = vpop.f32.mrb[0].mxu0
      %v3977 = vadd.f32 %v3705, %v3976
      %v3978 = vpop.f32.mrb[0].mxu0
      %v3979 = vadd.f32 %v3705, %v3978
      %3980 = vmatprep.mubr.bf16.mxu0 0
      %3981 = vmatmul.mubr.bf16.gmra.mrb[0].mxu0 %v3765
      %v3982 = vpop.f32.mrb[0].mxu0
      %v3983 = vadd.f32 %v3710, %v3982
      %v3984 = vpop.f32.mrb[0].mxu0
      %v3985 = vadd.f32 %v3710, %v3984
      %v3986 = vpop.f32.mrb[0].mxu0
      %v3987 = vadd.f32 %v3715, %v3986
      %v3988 = vpop.f32.mrb[0].mxu0
      %v3989 = vadd.f32 %v3715, %v3988
      %3990 = vmatprep.mubr.bf16.mxu0 0
      %3991 = vmatmul.mubr.bf16.gmra.mrb[0].mxu0 %v3766
      %v3992 = vpop.f32.mrb[0].mxu0
      %v3993 = vadd.f32 %v3720, %v3992
      %v3994 = vpop.f32.mrb[0].mxu0
      %v3995 = vadd.f32 %v3720, %v3994
      %v3996 = vpop.f32.mrb[0].mxu0
      %v3997 = vadd.f32 %v3725, %v3996
      %v3998 = vpop.f32.mrb[0].mxu0
      %v3999 = vadd.f32 %v3725, %v3998
      %4000 = vdwg.mxu0
      %v4001 = vmax.f32 %v3810, 0.0
      %v4002 = vmax.f32 %v3812, 0.0
      %v4003 = vmax.f32 %v3923, 0.0
      %v4004 = vmax.f32 %v3925, 0.0
      %v4005 = vmax.f32 %v3814, 0.0
      %v4006 = vmax.f32 %v3816, 0.0
      %v4007 = vmax.f32 %v3927, 0.0
      %v4008 = vmax.f32 %v3929, 0.0
      %v4009 = vmax.f32 %v3820, 0.0
      %v4010 = vmax.f32 %v3822, 0.0
      %v4011 = vmax.f32 %v3933, 0.0
      %v4012 = vmax.f32 %v3935, 0.0
      %v4013 = vmax.f32 %v3824, 0.0
      %v4014 = vmax.f32 %v3826, 0.0
      %v4015 = vmax.f32 %v3937, 0.0
      %v4016 = vmax.f32 %v3939, 0.0
      %v4017 = vmax.f32 %v3830, 0.0
      %v4018 = vmax.f32 %v3832, 0.0
      %v4019 = vmax.f32 %v3943, 0.0
      %v4020 = vmax.f32 %v3945, 0.0
      %v4021 = vmax.f32 %v3834, 0.0
      %v4022 = vmax.f32 %v3836, 0.0
      %v4023 = vmax.f32 %v3947, 0.0
      %v4024 = vmax.f32 %v3949, 0.0
      %v4025 = vmax.f32 %v3840, 0.0
      %v4026 = vmax.f32 %v3842, 0.0
      %v4027 = vmax.f32 %v3953, 0.0
      %v4028 = vmax.f32 %v3955, 0.0
      %v4029 = vmax.f32 %v3844, 0.0
      %v4030 = vmax.f32 %v3846, 0.0
      %v4031 = vmax.f32 %v3957, 0.0
      %v4032 = vmax.f32 %v3959, 0.0
      %v4033 = vmax.f32 %v3850, 0.0
      %v4034 = vmax.f32 %v3852, 0.0
      %v4035 = vmax.f32 %v3963, 0.0
      %v4036 = vmax.f32 %v3965, 0.0
      %v4037 = vmax.f32 %v3854, 0.0
      %v4038 = vmax.f32 %v3856, 0.0
      %v4039 = vmax.f32 %v3967, 0.0
      %v4040 = vmax.f32 %v3969, 0.0
      %v4041 = vmax.f32 %v3860, 0.0
      %v4042 = vmax.f32 %v3862, 0.0
      %v4043 = vmax.f32 %v3973, 0.0
      %v4044 = vmax.f32 %v3975, 0.0
      %v4045 = vmax.f32 %v3864, 0.0
      %v4046 = vmax.f32 %v3866, 0.0
      %v4047 = vmax.f32 %v3977, 0.0
      %v4048 = vmax.f32 %v3979, 0.0
      %v4049 = vmax.f32 %v3870, 0.0
      %v4050 = vmax.f32 %v3872, 0.0
      %v4051 = vmax.f32 %v3983, 0.0
      %v4052 = vmax.f32 %v3985, 0.0
      %v4053 = vmax.f32 %v3874, 0.0
      %v4054 = vmax.f32 %v3876, 0.0
      %v4055 = vmax.f32 %v3987, 0.0
      %v4056 = vmax.f32 %v3989, 0.0
      %v4057 = vmax.f32 %v3880, 0.0
      %v4058 = vmax.f32 %v3882, 0.0
      %v4059 = vmax.f32 %v3993, 0.0
      %v4060 = vmax.f32 %v3995, 0.0
      %v4061 = vmax.f32 %v3884, 0.0
      %v4062 = vmax.f32 %v3886, 0.0
      %v4063 = vmax.f32 %v3997, 0.0
      %v4064 = vmax.f32 %v3999, 0.0
      %s4065 = scalar_lea.vmem %s3, 384
      %v4066 = vld [vmem:[%s4065] sm:$0xf]
      %v4067 = vld [vmem:[%s4065 + $0x4] sm:$0xf]
      %v4068 = vld [vmem:[%s4065 + $0x8] sm:$0xf]
      %v4069 = vld [vmem:[%s4065 + $0xc] sm:$0xf]
      %v4070 = vld [vmem:[%s4065 + $0x10] sm:$0xf]
      %v4071 = vld [vmem:[%s4065 + $0x14] sm:$0xf]
      %v4072 = vld [vmem:[%s4065 + $0x18] sm:$0xf]
      %v4073 = vld [vmem:[%s4065 + $0x1c] sm:$0xf]
      %v4074 = vld [vmem:[%s4065 + $0x20] sm:$0xf]
      %v4075 = vld [vmem:[%s4065 + $0x24] sm:$0xf]
      %v4076 = vld [vmem:[%s4065 + $0x28] sm:$0xf]
      %v4077 = vld [vmem:[%s4065 + $0x2c] sm:$0xf]
      %v4078 = vld [vmem:[%s4065 + $0x30] sm:$0xf]
      %v4079 = vld [vmem:[%s4065 + $0x34] sm:$0xf]
      %v4080 = vld [vmem:[%s4065 + $0x38] sm:$0xf]
      %v4081 = vld [vmem:[%s4065 + $0x3c] sm:$0xf]
      %v4082 = vpack.c.bf16 %v4005, %v4001
      %v4083 = vpack.c.bf16 %v4006, %v4002
      %v4084 = vpack.c.bf16 %v4007, %v4003
      %v4085 = vpack.c.bf16 %v4008, %v4004
      %v4086 = vpack.c.bf16 %v4013, %v4009
      %v4087 = vpack.c.bf16 %v4014, %v4010
      %v4088 = vpack.c.bf16 %v4015, %v4011
      %v4089 = vpack.c.bf16 %v4016, %v4012
      %v4090 = vpack.c.bf16 %v4021, %v4017
      %v4091 = vpack.c.bf16 %v4022, %v4018
      %v4092 = vpack.c.bf16 %v4023, %v4019
      %v4093 = vpack.c.bf16 %v4024, %v4020
      %v4094 = vpack.c.bf16 %v4029, %v4025
      %v4095 = vpack.c.bf16 %v4030, %v4026
      %v4096 = vpack.c.bf16 %v4031, %v4027
      %v4097 = vpack.c.bf16 %v4032, %v4028
      %v4098 = vpack.c.bf16 %v4037, %v4033
      %v4099 = vpack.c.bf16 %v4038, %v4034
      %v4100 = vpack.c.bf16 %v4039, %v4035
      %v4101 = vpack.c.bf16 %v4040, %v4036
      %v4102 = vpack.c.bf16 %v4045, %v4041
      %v4103 = vpack.c.bf16 %v4046, %v4042
      %v4104 = vpack.c.bf16 %v4047, %v4043
      %v4105 = vpack.c.bf16 %v4048, %v4044
      %v4106 = vpack.c.bf16 %v4053, %v4049
      %v4107 = vpack.c.bf16 %v4054, %v4050
      %v4108 = vpack.c.bf16 %v4055, %v4051
      %v4109 = vpack.c.bf16 %v4056, %v4052
      %v4110 = vpack.c.bf16 %v4061, %v4057
      %v4111 = vpack.c.bf16 %v4062, %v4058
      %v4112 = vpack.c.bf16 %v4063, %v4059
      %v4113 = vpack.c.bf16 %v4064, %v4060
      %s4114 = scalar_lea.vmem %s4, 768
      %v4115 = vld [vmem:[%s4114] sm:$0xff]
      %v4116 = vld [vmem:[%s4114 + $0x8] sm:$0xff]
      %v4117 = vld [vmem:[%s4114 + $0x10] sm:$0xff]
      %v4118 = vld [vmem:[%s4114 + $0x18] sm:$0xff]
      %v4119 = vld [vmem:[%s4114 + $0x20] sm:$0xff]
      %v4120 = vld [vmem:[%s4114 + $0x28] sm:$0xff]
      %v4121 = vld [vmem:[%s4114 + $0x30] sm:$0xff]
      %v4122 = vld [vmem:[%s4114 + $0x38] sm:$0xff]
      %v4123 = vld [vmem:[%s4114 + $0x40] sm:$0xff]
      %v4124 = vld [vmem:[%s4114 + $0x48] sm:$0xff]
      %v4125 = vld [vmem:[%s4114 + $0x50] sm:$0xff]
      %v4126 = vld [vmem:[%s4114 + $0x58] sm:$0xff]
      %v4127 = vld [vmem:[%s4114 + $0x60] sm:$0xff]
      %v4128 = vld [vmem:[%s4114 + $0x68] sm:$0xff]
      %v4129 = vld [vmem:[%s4114 + $0x70] sm:$0xff]
      %v4130 = vld [vmem:[%s4114 + $0x78] sm:$0xff]
      %4132 = vset.pattern.permute.xlu0 0
      %4133 = vperm.xlu0 %4132, %v4115
      %v4134 = vpop.permute.xlu0 %4133
      %4137 = vset.pattern.permute.xlu0 0
      %4138 = vperm.xlu0 %4137, %v4116
      %v4139 = vpop.permute.xlu0 %4138
      %4142 = vset.pattern.permute.xlu0 0
      %4143 = vperm.xlu0 %4142, %v4117
      %v4144 = vpop.permute.xlu0 %4143
      %4147 = vset.pattern.permute.xlu0 0
      %4148 = vperm.xlu0 %4147, %v4118
      %v4149 = vpop.permute.xlu0 %4148
      %4152 = vset.pattern.permute.xlu0 0
      %4153 = vperm.xlu0 %4152, %v4119
      %v4154 = vpop.permute.xlu0 %4153
      %4157 = vset.pattern.permute.xlu0 0
      %4158 = vperm.xlu0 %4157, %v4120
      %v4159 = vpop.permute.xlu0 %4158
      %4162 = vset.pattern.permute.xlu0 0
      %4163 = vperm.xlu0 %4162, %v4121
      %v4164 = vpop.permute.xlu0 %4163
      %4167 = vset.pattern.permute.xlu0 0
      %4168 = vperm.xlu0 %4167, %v4122
      %v4169 = vpop.permute.xlu0 %4168
      %4172 = vset.pattern.permute.xlu0 0
      %4173 = vperm.xlu0 %4172, %v4123
      %v4174 = vpop.permute.xlu0 %4173
      %4177 = vset.pattern.permute.xlu0 0
      %4178 = vperm.xlu0 %4177, %v4124
      %v4179 = vpop.permute.xlu0 %4178
      %4182 = vset.pattern.permute.xlu0 0
      %4183 = vperm.xlu0 %4182, %v4125
      %v4184 = vpop.permute.xlu0 %4183
      %4187 = vset.pattern.permute.xlu0 0
      %4188 = vperm.xlu0 %4187, %v4126
      %v4189 = vpop.permute.xlu0 %4188
      %4192 = vset.pattern.permute.xlu0 0
      %4193 = vperm.xlu0 %4192, %v4127
      %v4194 = vpop.permute.xlu0 %4193
      %4197 = vset.pattern.permute.xlu0 0
      %4198 = vperm.xlu0 %4197, %v4128
      %v4199 = vpop.permute.xlu0 %4198
      %4202 = vset.pattern.permute.xlu0 0
      %4203 = vperm.xlu0 %4202, %v4129
      %v4204 = vpop.permute.xlu0 %4203
      %4207 = vset.pattern.permute.xlu0 0
      %4208 = vperm.xlu0 %4207, %v4130
      %v4209 = vpop.permute.xlu0 %4208
      %v4227 = vunpack.c.l.b16 %v4066
      %v4228 = vunpack.c.l.b16 %v4067
      %v4229 = vunpack.c.l.b16 %v4068
      %v4230 = vunpack.c.l.b16 %v4069
      %v4231 = vunpack.c.l.b16 %v4070
      %v4232 = vunpack.c.l.b16 %v4071
      %v4233 = vunpack.c.l.b16 %v4072
      %v4234 = vunpack.c.l.b16 %v4073
      %v4235 = vunpack.c.l.b16 %v4074
      %v4236 = vunpack.c.l.b16 %v4075
      %v4237 = vunpack.c.l.b16 %v4076
      %v4238 = vunpack.c.l.b16 %v4077
      %v4239 = vunpack.c.l.b16 %v4078
      %v4240 = vunpack.c.l.b16 %v4079
      %v4241 = vunpack.c.l.b16 %v4080
      %v4242 = vunpack.c.l.b16 %v4081
      %v4243 = vpack.c.b16 %v4228, %v4227
      %v4244 = vpack.c.b16 %v4230, %v4229
      %v4245 = vpack.c.b16 %v4232, %v4231
      %v4246 = vpack.c.b16 %v4234, %v4233
      %v4247 = vpack.c.b16 %v4236, %v4235
      %v4248 = vpack.c.b16 %v4238, %v4237
      %v4249 = vpack.c.b16 %v4240, %v4239
      %v4250 = vpack.c.b16 %v4242, %v4241
      %4259 = vmatprep.subr.bf16.mxu0 %v4083
      %4260 = vmatpush1.bf16.msra.mxu0 %v4082
      %4261 = vmatprep.subr.bf16.mxu0 %v4087
      %4262 = vmatpush1.bf16.msra.mxu0 %v4086
      %4263 = vmatprep.subr.bf16.mxu0 %v4091
      %4264 = vmatpush1.bf16.msra.mxu0 %v4090
      %4265 = vmatprep.subr.bf16.mxu0 %v4095
      %4266 = vmatpush1.bf16.msra.mxu0 %v4094
      %4267 = vmatprep.subr.bf16.mxu0 %v4099
      %4268 = vmatpush1.bf16.msra.mxu0 %v4098
      %4269 = vmatprep.subr.bf16.mxu0 %v4103
      %4270 = vmatpush1.bf16.msra.mxu0 %v4102
      %4271 = vmatprep.subr.bf16.mxu0 %v4107
      %4272 = vmatpush1.bf16.msra.mxu0 %v4106
      %4273 = vmatprep.subr.bf16.mxu0 %v4111
      %4274 = vmatpush1.bf16.msra.mxu0 %v4110
      %4275 = vmatprep.subr.bf16.mxu0 0
      %4276 = vmatpush1.bf16.msra.mxu0 0
      %4277 = vmatprep.subr.bf16.mxu0 0
      %4278 = vmatpush1.bf16.msra.mxu0 0
      %4279 = vmatprep.subr.bf16.mxu0 0
      %4280 = vmatpush1.bf16.msra.mxu0 0
      %4281 = vmatprep.subr.bf16.mxu0 0
      %4282 = vmatpush1.bf16.msra.mxu0 0
      %4283 = vmatprep.subr.bf16.mxu0 0
      %4284 = vmatpush1.bf16.msra.mxu0 0
      %4285 = vmatprep.subr.bf16.mxu0 0
      %4286 = vmatpush1.bf16.msra.mxu0 0
      %4287 = vmatprep.subr.bf16.mxu0 0
      %4288 = vmatpush1.bf16.msra.mxu0 0
      %4289 = vmatprep.subr.bf16.mxu0 0
      %4290 = vmatpush1.bf16.msra.mxu0 0
      %4291 = vmatprep.mubr.bf16.mxu0 0
      %4292 = vmatmul.mubr.bf16.gmra.mrb[0].mxu0 %v4243
      %v4293 = vpop.f32.mrb[0].mxu0
      %v4294 = vadd.f32 %v4134, %v4293
      %v4295 = vpop.f32.mrb[0].mxu0
      %v4296 = vadd.f32 %v4134, %v4295
      %v4297 = vpop.f32.mrb[0].mxu0
      %v4298 = vadd.f32 %v4139, %v4297
      %v4299 = vpop.f32.mrb[0].mxu0
      %v4300 = vadd.f32 %v4139, %v4299
      %4301 = vmatprep.mubr.bf16.mxu0 0
      %4302 = vmatmul.mubr.bf16.gmra.mrb[0].mxu0 %v4244
      %v4303 = vpop.f32.mrb[0].mxu0
      %v4304 = vadd.f32 %v4144, %v4303
      %v4305 = vpop.f32.mrb[0].mxu0
      %v4306 = vadd.f32 %v4144, %v4305
      %v4307 = vpop.f32.mrb[0].mxu0
      %v4308 = vadd.f32 %v4149, %v4307
      %v4309 = vpop.f32.mrb[0].mxu0
      %v4310 = vadd.f32 %v4149, %v4309
      %4311 = vmatprep.mubr.bf16.mxu0 0
      %4312 = vmatmul.mubr.bf16.gmra.mrb[0].mxu0 %v4245
      %v4313 = vpop.f32.mrb[0].mxu0
      %v4314 = vadd.f32 %v4154, %v4313
      %v4315 = vpop.f32.mrb[0].mxu0
      %v4316 = vadd.f32 %v4154, %v4315
      %v4317 = vpop.f32.mrb[0].mxu0
      %v4318 = vadd.f32 %v4159, %v4317
      %v4319 = vpop.f32.mrb[0].mxu0
      %v4320 = vadd.f32 %v4159, %v4319
      %4321 = vmatprep.mubr.bf16.mxu0 0
      %4322 = vmatmul.mubr.bf16.gmra.mrb[0].mxu0 %v4246
      %v4323 = vpop.f32.mrb[0].mxu0
      %v4324 = vadd.f32 %v4164, %v4323
      %v4325 = vpop.f32.mrb[0].mxu0
      %v4326 = vadd.f32 %v4164, %v4325
      %v4327 = vpop.f32.mrb[0].mxu0
      %v4328 = vadd.f32 %v4169, %v4327
      %v4329 = vpop.f32.mrb[0].mxu0
      %v4330 = vadd.f32 %v4169, %v4329
      %4331 = vmatprep.mubr.bf16.mxu0 0
      %4332 = vmatmul.mubr.bf16.gmra.mrb[0].mxu0 %v4247
      %v4333 = vpop.f32.mrb[0].mxu0
      %v4334 = vadd.f32 %v4174, %v4333
      %v4335 = vpop.f32.mrb[0].mxu0
      %v4336 = vadd.f32 %v4174, %v4335
      %v4337 = vpop.f32.mrb[0].mxu0
      %v4338 = vadd.f32 %v4179, %v4337
      %v4339 = vpop.f32.mrb[0].mxu0
      %v4340 = vadd.f32 %v4179, %v4339
      %4341 = vmatprep.mubr.bf16.mxu0 0
      %4342 = vmatmul.mubr.bf16.gmra.mrb[0].mxu0 %v4248
      %v4343 = vpop.f32.mrb[0].mxu0
      %v4344 = vadd.f32 %v4184, %v4343
      %v4345 = vpop.f32.mrb[0].mxu0
      %v4346 = vadd.f32 %v4184, %v4345
      %v4347 = vpop.f32.mrb[0].mxu0
      %v4348 = vadd.f32 %v4189, %v4347
      %v4349 = vpop.f32.mrb[0].mxu0
      %v4350 = vadd.f32 %v4189, %v4349
      %4351 = vmatprep.mubr.bf16.mxu0 0
      %4352 = vmatmul.mubr.bf16.gmra.mrb[0].mxu0 %v4249
      %v4353 = vpop.f32.mrb[0].mxu0
      %v4354 = vadd.f32 %v4194, %v4353
      %v4355 = vpop.f32.mrb[0].mxu0
      %v4356 = vadd.f32 %v4194, %v4355
      %v4357 = vpop.f32.mrb[0].mxu0
      %v4358 = vadd.f32 %v4199, %v4357
      %v4359 = vpop.f32.mrb[0].mxu0
      %v4360 = vadd.f32 %v4199, %v4359
      %4361 = vmatprep.mubr.bf16.mxu0 0
      %4362 = vmatmul.mubr.bf16.gmra.mrb[0].mxu0 %v4250
      %v4363 = vpop.f32.mrb[0].mxu0
      %v4364 = vadd.f32 %v4204, %v4363
      %v4365 = vpop.f32.mrb[0].mxu0
      %v4366 = vadd.f32 %v4204, %v4365
      %v4367 = vpop.f32.mrb[0].mxu0
      %v4368 = vadd.f32 %v4209, %v4367
      %v4369 = vpop.f32.mrb[0].mxu0
      %v4370 = vadd.f32 %v4209, %v4369
      %4371 = vdwg.mxu0
      %4372 = vmatprep.subr.bf16.mxu0 %v4085
      %4373 = vmatpush1.bf16.msra.mxu0 %v4084
      %4374 = vmatprep.subr.bf16.mxu0 %v4089
      %4375 = vmatpush1.bf16.msra.mxu0 %v4088
      %4376 = vmatprep.subr.bf16.mxu0 %v4093
      %4377 = vmatpush1.bf16.msra.mxu0 %v4092
      %4378 = vmatprep.subr.bf16.mxu0 %v4097
      %4379 = vmatpush1.bf16.msra.mxu0 %v4096
      %4380 = vmatprep.subr.bf16.mxu0 %v4101
      %4381 = vmatpush1.bf16.msra.mxu0 %v4100
      %4382 = vmatprep.subr.bf16.mxu0 %v4105
      %4383 = vmatpush1.bf16.msra.mxu0 %v4104
      %4384 = vmatprep.subr.bf16.mxu0 %v4109
      %4385 = vmatpush1.bf16.msra.mxu0 %v4108
      %4386 = vmatprep.subr.bf16.mxu0 %v4113
      %4387 = vmatpush1.bf16.msra.mxu0 %v4112
      %4388 = vmatprep.subr.bf16.mxu0 0
      %4389 = vmatpush1.bf16.msra.mxu0 0
      %4390 = vmatprep.subr.bf16.mxu0 0
      %4391 = vmatpush1.bf16.msra.mxu0 0
      %4392 = vmatprep.subr.bf16.mxu0 0
      %4393 = vmatpush1.bf16.msra.mxu0 0
      %4394 = vmatprep.subr.bf16.mxu0 0
      %4395 = vmatpush1.bf16.msra.mxu0 0
      %4396 = vmatprep.subr.bf16.mxu0 0
      %4397 = vmatpush1.bf16.msra.mxu0 0
      %4398 = vmatprep.subr.bf16.mxu0 0
      %4399 = vmatpush1.bf16.msra.mxu0 0
      %4400 = vmatprep.subr.bf16.mxu0 0
      %4401 = vmatpush1.bf16.msra.mxu0 0
      %4402 = vmatprep.subr.bf16.mxu0 0
      %4403 = vmatpush1.bf16.msra.mxu0 0
      %4404 = vmatprep.mubr.bf16.mxu0 0
      %4405 = vmatmul.mubr.bf16.gmra.mrb[0].mxu0 %v4243
      %v4406 = vpop.f32.mrb[0].mxu0
      %v4407 = vadd.f32 %v4134, %v4406
      %v4408 = vpop.f32.mrb[0].mxu0
      %v4409 = vadd.f32 %v4134, %v4408
      %v4410 = vpop.f32.mrb[0].mxu0
      %v4411 = vadd.f32 %v4139, %v4410
      %v4412 = vpop.f32.mrb[0].mxu0
      %v4413 = vadd.f32 %v4139, %v4412
      %4414 = vmatprep.mubr.bf16.mxu0 0
      %4415 = vmatmul.mubr.bf16.gmra.mrb[0].mxu0 %v4244
      %v4416 = vpop.f32.mrb[0].mxu0
      %v4417 = vadd.f32 %v4144, %v4416
      %v4418 = vpop.f32.mrb[0].mxu0
      %v4419 = vadd.f32 %v4144, %v4418
      %v4420 = vpop.f32.mrb[0].mxu0
      %v4421 = vadd.f32 %v4149, %v4420
      %v4422 = vpop.f32.mrb[0].mxu0
      %v4423 = vadd.f32 %v4149, %v4422
      %4424 = vmatprep.mubr.bf16.mxu0 0
      %4425 = vmatmul.mubr.bf16.gmra.mrb[0].mxu0 %v4245
      %v4426 = vpop.f32.mrb[0].mxu0
      %v4427 = vadd.f32 %v4154, %v4426
      %v4428 = vpop.f32.mrb[0].mxu0
      %v4429 = vadd.f32 %v4154, %v4428
      %v4430 = vpop.f32.mrb[0].mxu0
      %v4431 = vadd.f32 %v4159, %v4430
      %v4432 = vpop.f32.mrb[0].mxu0
      %v4433 = vadd.f32 %v4159, %v4432
      %4434 = vmatprep.mubr.bf16.mxu0 0
      %4435 = vmatmul.mubr.bf16.gmra.mrb[0].mxu0 %v4246
      %v4436 = vpop.f32.mrb[0].mxu0
      %v4437 = vadd.f32 %v4164, %v4436
      %v4438 = vpop.f32.mrb[0].mxu0
      %v4439 = vadd.f32 %v4164, %v4438
      %v4440 = vpop.f32.mrb[0].mxu0
      %v4441 = vadd.f32 %v4169, %v4440
      %v4442 = vpop.f32.mrb[0].mxu0
      %v4443 = vadd.f32 %v4169, %v4442
      %4444 = vmatprep.mubr.bf16.mxu0 0
      %4445 = vmatmul.mubr.bf16.gmra.mrb[0].mxu0 %v4247
      %v4446 = vpop.f32.mrb[0].mxu0
      %v4447 = vadd.f32 %v4174, %v4446
      %v4448 = vpop.f32.mrb[0].mxu0
      %v4449 = vadd.f32 %v4174, %v4448
      %v4450 = vpop.f32.mrb[0].mxu0
      %v4451 = vadd.f32 %v4179, %v4450
      %v4452 = vpop.f32.mrb[0].mxu0
      %v4453 = vadd.f32 %v4179, %v4452
      %4454 = vmatprep.mubr.bf16.mxu0 0
      %4455 = vmatmul.mubr.bf16.gmra.mrb[0].mxu0 %v4248
      %v4456 = vpop.f32.mrb[0].mxu0
      %v4457 = vadd.f32 %v4184, %v4456
      %v4458 = vpop.f32.mrb[0].mxu0
      %v4459 = vadd.f32 %v4184, %v4458
      %v4460 = vpop.f32.mrb[0].mxu0
      %v4461 = vadd.f32 %v4189, %v4460
      %v4462 = vpop.f32.mrb[0].mxu0
      %v4463 = vadd.f32 %v4189, %v4462
      %4464 = vmatprep.mubr.bf16.mxu0 0
      %4465 = vmatmul.mubr.bf16.gmra.mrb[0].mxu0 %v4249
      %v4466 = vpop.f32.mrb[0].mxu0
      %v4467 = vadd.f32 %v4194, %v4466
      %v4468 = vpop.f32.mrb[0].mxu0
      %v4469 = vadd.f32 %v4194, %v4468
      %v4470 = vpop.f32.mrb[0].mxu0
      %v4471 = vadd.f32 %v4199, %v4470
      %v4472 = vpop.f32.mrb[0].mxu0
      %v4473 = vadd.f32 %v4199, %v4472
      %4474 = vmatprep.mubr.bf16.mxu0 0
      %4475 = vmatmul.mubr.bf16.gmra.mrb[0].mxu0 %v4250
      %v4476 = vpop.f32.mrb[0].mxu0
      %v4477 = vadd.f32 %v4204, %v4476
      %v4478 = vpop.f32.mrb[0].mxu0
      %v4479 = vadd.f32 %v4204, %v4478
      %v4480 = vpop.f32.mrb[0].mxu0
      %v4481 = vadd.f32 %v4209, %v4480
      %v4482 = vpop.f32.mrb[0].mxu0
      %v4483 = vadd.f32 %v4209, %v4482
      %4484 = vdwg.mxu0
      %v4485 = vmax.f32 %v4294, 0.0
      %v4486 = vmax.f32 %v4296, 0.0
      %v4487 = vmax.f32 %v4407, 0.0
      %v4488 = vmax.f32 %v4409, 0.0
      %v4489 = vmax.f32 %v4298, 0.0
      %v4490 = vmax.f32 %v4300, 0.0
      %v4491 = vmax.f32 %v4411, 0.0
      %v4492 = vmax.f32 %v4413, 0.0
      %v4493 = vmax.f32 %v4304, 0.0
      %v4494 = vmax.f32 %v4306, 0.0
      %v4495 = vmax.f32 %v4417, 0.0
      %v4496 = vmax.f32 %v4419, 0.0
      %v4497 = vmax.f32 %v4308, 0.0
      %v4498 = vmax.f32 %v4310, 0.0
      %v4499 = vmax.f32 %v4421, 0.0
      %v4500 = vmax.f32 %v4423, 0.0
      %v4501 = vmax.f32 %v4314, 0.0
      %v4502 = vmax.f32 %v4316, 0.0
      %v4503 = vmax.f32 %v4427, 0.0
      %v4504 = vmax.f32 %v4429, 0.0
      %v4505 = vmax.f32 %v4318, 0.0
      %v4506 = vmax.f32 %v4320, 0.0
      %v4507 = vmax.f32 %v4431, 0.0
      %v4508 = vmax.f32 %v4433, 0.0
      %v4509 = vmax.f32 %v4324, 0.0
      %v4510 = vmax.f32 %v4326, 0.0
      %v4511 = vmax.f32 %v4437, 0.0
      %v4512 = vmax.f32 %v4439, 0.0
      %v4513 = vmax.f32 %v4328, 0.0
      %v4514 = vmax.f32 %v4330, 0.0
      %v4515 = vmax.f32 %v4441, 0.0
      %v4516 = vmax.f32 %v4443, 0.0
      %v4517 = vmax.f32 %v4334, 0.0
      %v4518 = vmax.f32 %v4336, 0.0
      %v4519 = vmax.f32 %v4447, 0.0
      %v4520 = vmax.f32 %v4449, 0.0
      %v4521 = vmax.f32 %v4338, 0.0
      %v4522 = vmax.f32 %v4340, 0.0
      %v4523 = vmax.f32 %v4451, 0.0
      %v4524 = vmax.f32 %v4453, 0.0
      %v4525 = vmax.f32 %v4344, 0.0
      %v4526 = vmax.f32 %v4346, 0.0
      %v4527 = vmax.f32 %v4457, 0.0
      %v4528 = vmax.f32 %v4459, 0.0
      %v4529 = vmax.f32 %v4348, 0.0
      %v4530 = vmax.f32 %v4350, 0.0
      %v4531 = vmax.f32 %v4461, 0.0
      %v4532 = vmax.f32 %v4463, 0.0
      %v4533 = vmax.f32 %v4354, 0.0
      %v4534 = vmax.f32 %v4356, 0.0
      %v4535 = vmax.f32 %v4467, 0.0
      %v4536 = vmax.f32 %v4469, 0.0
      %v4537 = vmax.f32 %v4358, 0.0
      %v4538 = vmax.f32 %v4360, 0.0
      %v4539 = vmax.f32 %v4471, 0.0
      %v4540 = vmax.f32 %v4473, 0.0
      %v4541 = vmax.f32 %v4364, 0.0
      %v4542 = vmax.f32 %v4366, 0.0
      %v4543 = vmax.f32 %v4477, 0.0
      %v4544 = vmax.f32 %v4479, 0.0
      %v4545 = vmax.f32 %v4368, 0.0
      %v4546 = vmax.f32 %v4370, 0.0
      %v4547 = vmax.f32 %v4481, 0.0
      %v4548 = vmax.f32 %v4483, 0.0
      %v4549 = vld [vmem:[%s5] sm:$0xff]
      %v4550 = vld [vmem:[%s5 + $0x8] sm:$0xff]
      %v4551 = vld [vmem:[%s5 + $0x10] sm:$0xff]
      %v4552 = vld [vmem:[%s5 + $0x18] sm:$0xff]
      %v4553 = vld [vmem:[%s5 + $0x20] sm:$0xff]
      %v4554 = vld [vmem:[%s5 + $0x28] sm:$0xff]
      %v4555 = vld [vmem:[%s5 + $0x30] sm:$0xff]
      %v4556 = vld [vmem:[%s5 + $0x38] sm:$0xff]
      %v4557 = vld [vmem:[%s5 + $0x40] sm:$0xff]
      %v4558 = vld [vmem:[%s5 + $0x48] sm:$0xff]
      %v4559 = vld [vmem:[%s5 + $0x50] sm:$0xff]
      %v4560 = vld [vmem:[%s5 + $0x58] sm:$0xff]
      %v4561 = vld [vmem:[%s5 + $0x60] sm:$0xff]
      %v4562 = vld [vmem:[%s5 + $0x68] sm:$0xff]
      %v4563 = vld [vmem:[%s5 + $0x70] sm:$0xff]
      %v4564 = vld [vmem:[%s5 + $0x78] sm:$0xff]
      %4566 = vset.pattern.permute.xlu0 0
      %4567 = vperm.xlu0 %4566, %v4549
      %v4568 = vpop.permute.xlu0 %4567
      %4571 = vset.pattern.permute.xlu0 0
      %4572 = vperm.xlu0 %4571, %v4550
      %v4573 = vpop.permute.xlu0 %4572
      %4576 = vset.pattern.permute.xlu0 0
      %4577 = vperm.xlu0 %4576, %v4551
      %v4578 = vpop.permute.xlu0 %4577
      %4581 = vset.pattern.permute.xlu0 0
      %4582 = vperm.xlu0 %4581, %v4552
      %v4583 = vpop.permute.xlu0 %4582
      %4586 = vset.pattern.permute.xlu0 0
      %4587 = vperm.xlu0 %4586, %v4553
      %v4588 = vpop.permute.xlu0 %4587
      %4591 = vset.pattern.permute.xlu0 0
      %4592 = vperm.xlu0 %4591, %v4554
      %v4593 = vpop.permute.xlu0 %4592
      %4596 = vset.pattern.permute.xlu0 0
      %4597 = vperm.xlu0 %4596, %v4555
      %v4598 = vpop.permute.xlu0 %4597
      %4601 = vset.pattern.permute.xlu0 0
      %4602 = vperm.xlu0 %4601, %v4556
      %v4603 = vpop.permute.xlu0 %4602
      %4606 = vset.pattern.permute.xlu0 0
      %4607 = vperm.xlu0 %4606, %v4557
      %v4608 = vpop.permute.xlu0 %4607
      %4611 = vset.pattern.permute.xlu0 0
      %4612 = vperm.xlu0 %4611, %v4558
      %v4613 = vpop.permute.xlu0 %4612
      %4616 = vset.pattern.permute.xlu0 0
      %4617 = vperm.xlu0 %4616, %v4559
      %v4618 = vpop.permute.xlu0 %4617
      %4621 = vset.pattern.permute.xlu0 0
      %4622 = vperm.xlu0 %4621, %v4560
      %v4623 = vpop.permute.xlu0 %4622
      %4626 = vset.pattern.permute.xlu0 0
      %4627 = vperm.xlu0 %4626, %v4561
      %v4628 = vpop.permute.xlu0 %4627
      %4631 = vset.pattern.permute.xlu0 0
      %4632 = vperm.xlu0 %4631, %v4562
      %v4633 = vpop.permute.xlu0 %4632
      %4636 = vset.pattern.permute.xlu0 0
      %4637 = vperm.xlu0 %4636, %v4563
      %v4638 = vpop.permute.xlu0 %4637
      %4641 = vset.pattern.permute.xlu0 0
      %4642 = vperm.xlu0 %4641, %v4564
      %v4643 = vpop.permute.xlu0 %4642
      %v4645 = vmul.f32 %v4568, %v4485
      %v4646 = vmul.f32 %v4568, %v4486
      %v4647 = vmul.f32 %v4568, %v4487
      %v4648 = vmul.f32 %v4568, %v4488
      %v4649 = vmul.f32 %v4573, %v4489
      %v4650 = vmul.f32 %v4573, %v4490
      %v4651 = vmul.f32 %v4573, %v4491
      %v4652 = vmul.f32 %v4573, %v4492
      %v4653 = vmul.f32 %v4578, %v4493
      %v4654 = vmul.f32 %v4578, %v4494
      %v4655 = vmul.f32 %v4578, %v4495
      %v4656 = vmul.f32 %v4578, %v4496
      %v4657 = vmul.f32 %v4583, %v4497
      %v4658 = vmul.f32 %v4583, %v4498
      %v4659 = vmul.f32 %v4583, %v4499
      %v4660 = vmul.f32 %v4583, %v4500
      %v4661 = vmul.f32 %v4588, %v4501
      %v4662 = vmul.f32 %v4588, %v4502
      %v4663 = vmul.f32 %v4588, %v4503
      %v4664 = vmul.f32 %v4588, %v4504
      %v4665 = vmul.f32 %v4593, %v4505
      %v4666 = vmul.f32 %v4593, %v4506
      %v4667 = vmul.f32 %v4593, %v4507
      %v4668 = vmul.f32 %v4593, %v4508
      %v4669 = vmul.f32 %v4598, %v4509
      %v4670 = vmul.f32 %v4598, %v4510
      %v4671 = vmul.f32 %v4598, %v4511
      %v4672 = vmul.f32 %v4598, %v4512
      %v4673 = vmul.f32 %v4603, %v4513
      %v4674 = vmul.f32 %v4603, %v4514
      %v4675 = vmul.f32 %v4603, %v4515
      %v4676 = vmul.f32 %v4603, %v4516
      %v4677 = vmul.f32 %v4608, %v4517
      %v4678 = vmul.f32 %v4608, %v4518
      %v4679 = vmul.f32 %v4608, %v4519
      %v4680 = vmul.f32 %v4608, %v4520
      %v4681 = vmul.f32 %v4613, %v4521
      %v4682 = vmul.f32 %v4613, %v4522
      %v4683 = vmul.f32 %v4613, %v4523
      %v4684 = vmul.f32 %v4613, %v4524
      %v4685 = vmul.f32 %v4618, %v4525
      %v4686 = vmul.f32 %v4618, %v4526
      %v4687 = vmul.f32 %v4618, %v4527
      %v4688 = vmul.f32 %v4618, %v4528
      %v4689 = vmul.f32 %v4623, %v4529
      %v4690 = vmul.f32 %v4623, %v4530
      %v4691 = vmul.f32 %v4623, %v4531
      %v4692 = vmul.f32 %v4623, %v4532
      %v4693 = vmul.f32 %v4628, %v4533
      %v4694 = vmul.f32 %v4628, %v4534
      %v4695 = vmul.f32 %v4628, %v4535
      %v4696 = vmul.f32 %v4628, %v4536
      %v4697 = vmul.f32 %v4633, %v4537
      %v4698 = vmul.f32 %v4633, %v4538
      %v4699 = vmul.f32 %v4633, %v4539
      %v4700 = vmul.f32 %v4633, %v4540
      %v4701 = vmul.f32 %v4638, %v4541
      %v4702 = vmul.f32 %v4638, %v4542
      %v4703 = vmul.f32 %v4638, %v4543
      %v4704 = vmul.f32 %v4638, %v4544
      %v4705 = vmul.f32 %v4643, %v4545
      %v4706 = vmul.f32 %v4643, %v4546
      %v4707 = vmul.f32 %v4643, %v4547
      %v4708 = vmul.f32 %v4643, %v4548
      %v4709 = vadd.f32 %v4645, %v4649
      %v4710 = vadd.f32 %v4709, %v4653
      %v4711 = vadd.f32 %v4710, %v4657
      %v4712 = vadd.f32 %v4711, %v4661
      %v4713 = vadd.f32 %v4712, %v4665
      %v4714 = vadd.f32 %v4713, %v4669
      %v4715 = vadd.f32 %v4714, %v4673
      %v4716 = vadd.f32 %v4715, %v4677
      %v4717 = vadd.f32 %v4716, %v4681
      %v4718 = vadd.f32 %v4717, %v4685
      %v4719 = vadd.f32 %v4718, %v4689
      %v4720 = vadd.f32 %v4719, %v4693
      %v4721 = vadd.f32 %v4720, %v4697
      %v4722 = vadd.f32 %v4721, %v4701
      %v4723 = vadd.f32 %v4722, %v4705
      %v4724 = vrot.slane %v4723, 4
      %v4725 = vadd.f32 %v4723, %v4724
      %v4726 = vrot.slane %v4725, 2
      %v4727 = vadd.f32 %v4725, %v4726
      %v4728 = vrot.slane %v4727, 1
      %v4729 = vadd.f32 %v4727, %v4728
      %v4730 = vadd.f32 %v4646, %v4650
      %v4731 = vadd.f32 %v4730, %v4654
      %v4732 = vadd.f32 %v4731, %v4658
      %v4733 = vadd.f32 %v4732, %v4662
      %v4734 = vadd.f32 %v4733, %v4666
      %v4735 = vadd.f32 %v4734, %v4670
      %v4736 = vadd.f32 %v4735, %v4674
      %v4737 = vadd.f32 %v4736, %v4678
      %v4738 = vadd.f32 %v4737, %v4682
      %v4739 = vadd.f32 %v4738, %v4686
      %v4740 = vadd.f32 %v4739, %v4690
      %v4741 = vadd.f32 %v4740, %v4694
      %v4742 = vadd.f32 %v4741, %v4698
      %v4743 = vadd.f32 %v4742, %v4702
      %v4744 = vadd.f32 %v4743, %v4706
      %v4745 = vrot.slane %v4744, 4
      %v4746 = vadd.f32 %v4744, %v4745
      %v4747 = vrot.slane %v4746, 2
      %v4748 = vadd.f32 %v4746, %v4747
      %v4749 = vrot.slane %v4748, 1
      %v4750 = vadd.f32 %v4748, %v4749
      %v4751 = vadd.f32 %v4647, %v4651
      %v4752 = vadd.f32 %v4751, %v4655
      %v4753 = vadd.f32 %v4752, %v4659
      %v4754 = vadd.f32 %v4753, %v4663
      %v4755 = vadd.f32 %v4754, %v4667
      %v4756 = vadd.f32 %v4755, %v4671
      %v4757 = vadd.f32 %v4756, %v4675
      %v4758 = vadd.f32 %v4757, %v4679
      %v4759 = vadd.f32 %v4758, %v4683
      %v4760 = vadd.f32 %v4759, %v4687
      %v4761 = vadd.f32 %v4760, %v4691
      %v4762 = vadd.f32 %v4761, %v4695
      %v4763 = vadd.f32 %v4762, %v4699
      %v4764 = vadd.f32 %v4763, %v4703
      %v4765 = vadd.f32 %v4764, %v4707
      %v4766 = vrot.slane %v4765, 4
      %v4767 = vadd.f32 %v4765, %v4766
      %v4768 = vrot.slane %v4767, 2
      %v4769 = vadd.f32 %v4767, %v4768
      %v4770 = vrot.slane %v4769, 1
      %v4771 = vadd.f32 %v4769, %v4770
      %v4772 = vadd.f32 %v4648, %v4652
      %v4773 = vadd.f32 %v4772, %v4656
      %v4774 = vadd.f32 %v4773, %v4660
      %v4775 = vadd.f32 %v4774, %v4664
      %v4776 = vadd.f32 %v4775, %v4668
      %v4777 = vadd.f32 %v4776, %v4672
      %v4778 = vadd.f32 %v4777, %v4676
      %v4779 = vadd.f32 %v4778, %v4680
      %v4780 = vadd.f32 %v4779, %v4684
      %v4781 = vadd.f32 %v4780, %v4688
      %v4782 = vadd.f32 %v4781, %v4692
      %v4783 = vadd.f32 %v4782, %v4696
      %v4784 = vadd.f32 %v4783, %v4700
      %v4785 = vadd.f32 %v4784, %v4704
      %v4786 = vadd.f32 %v4785, %v4708
      %v4787 = vrot.slane %v4786, 4
      %v4788 = vadd.f32 %v4786, %v4787
      %v4789 = vrot.slane %v4788, 2
      %v4790 = vadd.f32 %v4788, %v4789
      %v4791 = vrot.slane %v4790, 1
      %v4792 = vadd.f32 %v4790, %v4791
      %4793 = vset.pattern.permute.xlu0 1
      %4794 = vperm.xlu0 %4793, %v4549
      %v4795 = vpop.permute.xlu0 %4794
      %4797 = vset.pattern.permute.xlu0 1
      %4798 = vperm.xlu0 %4797, %v4550
      %v4799 = vpop.permute.xlu0 %4798
      %4801 = vset.pattern.permute.xlu0 1
      %4802 = vperm.xlu0 %4801, %v4551
      %v4803 = vpop.permute.xlu0 %4802
      %4805 = vset.pattern.permute.xlu0 1
      %4806 = vperm.xlu0 %4805, %v4552
      %v4807 = vpop.permute.xlu0 %4806
      %4809 = vset.pattern.permute.xlu0 1
      %4810 = vperm.xlu0 %4809, %v4553
      %v4811 = vpop.permute.xlu0 %4810
      %4813 = vset.pattern.permute.xlu0 1
      %4814 = vperm.xlu0 %4813, %v4554
      %v4815 = vpop.permute.xlu0 %4814
      %4817 = vset.pattern.permute.xlu0 1
      %4818 = vperm.xlu0 %4817, %v4555
      %v4819 = vpop.permute.xlu0 %4818
      %4821 = vset.pattern.permute.xlu0 1
      %4822 = vperm.xlu0 %4821, %v4556
      %v4823 = vpop.permute.xlu0 %4822
      %4825 = vset.pattern.permute.xlu0 1
      %4826 = vperm.xlu0 %4825, %v4557
      %v4827 = vpop.permute.xlu0 %4826
      %4829 = vset.pattern.permute.xlu0 1
      %4830 = vperm.xlu0 %4829, %v4558
      %v4831 = vpop.permute.xlu0 %4830
      %4833 = vset.pattern.permute.xlu0 1
      %4834 = vperm.xlu0 %4833, %v4559
      %v4835 = vpop.permute.xlu0 %4834
      %4837 = vset.pattern.permute.xlu0 1
      %4838 = vperm.xlu0 %4837, %v4560
      %v4839 = vpop.permute.xlu0 %4838
      %4841 = vset.pattern.permute.xlu0 1
      %4842 = vperm.xlu0 %4841, %v4561
      %v4843 = vpop.permute.xlu0 %4842
      %4845 = vset.pattern.permute.xlu0 1
      %4846 = vperm.xlu0 %4845, %v4562
      %v4847 = vpop.permute.xlu0 %4846
      %4849 = vset.pattern.permute.xlu0 1
      %4850 = vperm.xlu0 %4849, %v4563
      %v4851 = vpop.permute.xlu0 %4850
      %4853 = vset.pattern.permute.xlu0 1
      %4854 = vperm.xlu0 %4853, %v4564
      %v4855 = vpop.permute.xlu0 %4854
      %v4857 = vmul.f32 %v4795, %v4485
      %v4858 = vmul.f32 %v4795, %v4486
      %v4859 = vmul.f32 %v4795, %v4487
      %v4860 = vmul.f32 %v4795, %v4488
      %v4861 = vmul.f32 %v4799, %v4489
      %v4862 = vmul.f32 %v4799, %v4490
      %v4863 = vmul.f32 %v4799, %v4491
      %v4864 = vmul.f32 %v4799, %v4492
      %v4865 = vmul.f32 %v4803, %v4493
      %v4866 = vmul.f32 %v4803, %v4494
      %v4867 = vmul.f32 %v4803, %v4495
      %v4868 = vmul.f32 %v4803, %v4496
      %v4869 = vmul.f32 %v4807, %v4497
      %v4870 = vmul.f32 %v4807, %v4498
      %v4871 = vmul.f32 %v4807, %v4499
      %v4872 = vmul.f32 %v4807, %v4500
      %v4873 = vmul.f32 %v4811, %v4501
      %v4874 = vmul.f32 %v4811, %v4502
      %v4875 = vmul.f32 %v4811, %v4503
      %v4876 = vmul.f32 %v4811, %v4504
      %v4877 = vmul.f32 %v4815, %v4505
      %v4878 = vmul.f32 %v4815, %v4506
      %v4879 = vmul.f32 %v4815, %v4507
      %v4880 = vmul.f32 %v4815, %v4508
      %v4881 = vmul.f32 %v4819, %v4509
      %v4882 = vmul.f32 %v4819, %v4510
      %v4883 = vmul.f32 %v4819, %v4511
      %v4884 = vmul.f32 %v4819, %v4512
      %v4885 = vmul.f32 %v4823, %v4513
      %v4886 = vmul.f32 %v4823, %v4514
      %v4887 = vmul.f32 %v4823, %v4515
      %v4888 = vmul.f32 %v4823, %v4516
      %v4889 = vmul.f32 %v4827, %v4517
      %v4890 = vmul.f32 %v4827, %v4518
      %v4891 = vmul.f32 %v4827, %v4519
      %v4892 = vmul.f32 %v4827, %v4520
      %v4893 = vmul.f32 %v4831, %v4521
      %v4894 = vmul.f32 %v4831, %v4522
      %v4895 = vmul.f32 %v4831, %v4523
      %v4896 = vmul.f32 %v4831, %v4524
      %v4897 = vmul.f32 %v4835, %v4525
      %v4898 = vmul.f32 %v4835, %v4526
      %v4899 = vmul.f32 %v4835, %v4527
      %v4900 = vmul.f32 %v4835, %v4528
      %v4901 = vmul.f32 %v4839, %v4529
      %v4902 = vmul.f32 %v4839, %v4530
      %v4903 = vmul.f32 %v4839, %v4531
      %v4904 = vmul.f32 %v4839, %v4532
      %v4905 = vmul.f32 %v4843, %v4533
      %v4906 = vmul.f32 %v4843, %v4534
      %v4907 = vmul.f32 %v4843, %v4535
      %v4908 = vmul.f32 %v4843, %v4536
      %v4909 = vmul.f32 %v4847, %v4537
      %v4910 = vmul.f32 %v4847, %v4538
      %v4911 = vmul.f32 %v4847, %v4539
      %v4912 = vmul.f32 %v4847, %v4540
      %v4913 = vmul.f32 %v4851, %v4541
      %v4914 = vmul.f32 %v4851, %v4542
      %v4915 = vmul.f32 %v4851, %v4543
      %v4916 = vmul.f32 %v4851, %v4544
      %v4917 = vmul.f32 %v4855, %v4545
      %v4918 = vmul.f32 %v4855, %v4546
      %v4919 = vmul.f32 %v4855, %v4547
      %v4920 = vmul.f32 %v4855, %v4548
      %v4921 = vadd.f32 %v4857, %v4861
      %v4922 = vadd.f32 %v4921, %v4865
      %v4923 = vadd.f32 %v4922, %v4869
      %v4924 = vadd.f32 %v4923, %v4873
      %v4925 = vadd.f32 %v4924, %v4877
      %v4926 = vadd.f32 %v4925, %v4881
      %v4927 = vadd.f32 %v4926, %v4885
      %v4928 = vadd.f32 %v4927, %v4889
      %v4929 = vadd.f32 %v4928, %v4893
      %v4930 = vadd.f32 %v4929, %v4897
      %v4931 = vadd.f32 %v4930, %v4901
      %v4932 = vadd.f32 %v4931, %v4905
      %v4933 = vadd.f32 %v4932, %v4909
      %v4934 = vadd.f32 %v4933, %v4913
      %v4935 = vadd.f32 %v4934, %v4917
      %v4936 = vrot.slane %v4935, 4
      %v4937 = vadd.f32 %v4935, %v4936
      %v4938 = vrot.slane %v4937, 2
      %v4939 = vadd.f32 %v4937, %v4938
      %v4940 = vrot.slane %v4939, 1
      %v4941 = vadd.f32 %v4939, %v4940
      %v4942 = vadd.f32 %v4858, %v4862
      %v4943 = vadd.f32 %v4942, %v4866
      %v4944 = vadd.f32 %v4943, %v4870
      %v4945 = vadd.f32 %v4944, %v4874
      %v4946 = vadd.f32 %v4945, %v4878
      %v4947 = vadd.f32 %v4946, %v4882
      %v4948 = vadd.f32 %v4947, %v4886
      %v4949 = vadd.f32 %v4948, %v4890
      %v4950 = vadd.f32 %v4949, %v4894
      %v4951 = vadd.f32 %v4950, %v4898
      %v4952 = vadd.f32 %v4951, %v4902
      %v4953 = vadd.f32 %v4952, %v4906
      %v4954 = vadd.f32 %v4953, %v4910
      %v4955 = vadd.f32 %v4954, %v4914
      %v4956 = vadd.f32 %v4955, %v4918
      %v4957 = vrot.slane %v4956, 4
      %v4958 = vadd.f32 %v4956, %v4957
      %v4959 = vrot.slane %v4958, 2
      %v4960 = vadd.f32 %v4958, %v4959
      %v4961 = vrot.slane %v4960, 1
      %v4962 = vadd.f32 %v4960, %v4961
      %v4963 = vadd.f32 %v4859, %v4863
      %v4964 = vadd.f32 %v4963, %v4867
      %v4965 = vadd.f32 %v4964, %v4871
      %v4966 = vadd.f32 %v4965, %v4875
      %v4967 = vadd.f32 %v4966, %v4879
      %v4968 = vadd.f32 %v4967, %v4883
      %v4969 = vadd.f32 %v4968, %v4887
      %v4970 = vadd.f32 %v4969, %v4891
      %v4971 = vadd.f32 %v4970, %v4895
      %v4972 = vadd.f32 %v4971, %v4899
      %v4973 = vadd.f32 %v4972, %v4903
      %v4974 = vadd.f32 %v4973, %v4907
      %v4975 = vadd.f32 %v4974, %v4911
      %v4976 = vadd.f32 %v4975, %v4915
      %v4977 = vadd.f32 %v4976, %v4919
      %v4978 = vrot.slane %v4977, 4
      %v4979 = vadd.f32 %v4977, %v4978
      %v4980 = vrot.slane %v4979, 2
      %v4981 = vadd.f32 %v4979, %v4980
      %v4982 = vrot.slane %v4981, 1
      %v4983 = vadd.f32 %v4981, %v4982
      %v4984 = vadd.f32 %v4860, %v4864
      %v4985 = vadd.f32 %v4984, %v4868
      %v4986 = vadd.f32 %v4985, %v4872
      %v4987 = vadd.f32 %v4986, %v4876
      %v4988 = vadd.f32 %v4987, %v4880
      %v4989 = vadd.f32 %v4988, %v4884
      %v4990 = vadd.f32 %v4989, %v4888
      %v4991 = vadd.f32 %v4990, %v4892
      %v4992 = vadd.f32 %v4991, %v4896
      %v4993 = vadd.f32 %v4992, %v4900
      %v4994 = vadd.f32 %v4993, %v4904
      %v4995 = vadd.f32 %v4994, %v4908
      %v4996 = vadd.f32 %v4995, %v4912
      %v4997 = vadd.f32 %v4996, %v4916
      %v4998 = vadd.f32 %v4997, %v4920
      %v4999 = vrot.slane %v4998, 4
      %v5000 = vadd.f32 %v4998, %v4999
      %v5001 = vrot.slane %v5000, 2
      %v5002 = vadd.f32 %v5000, %v5001
      %v5003 = vrot.slane %v5002, 1
      %v5004 = vadd.f32 %v5002, %v5003
      %5005 = vset.pattern.permute.xlu0 2
      %5006 = vperm.xlu0 %5005, %v4549
      %v5007 = vpop.permute.xlu0 %5006
      %5009 = vset.pattern.permute.xlu0 2
      %5010 = vperm.xlu0 %5009, %v4550
      %v5011 = vpop.permute.xlu0 %5010
      %5013 = vset.pattern.permute.xlu0 2
      %5014 = vperm.xlu0 %5013, %v4551
      %v5015 = vpop.permute.xlu0 %5014
      %5017 = vset.pattern.permute.xlu0 2
      %5018 = vperm.xlu0 %5017, %v4552
      %v5019 = vpop.permute.xlu0 %5018
      %5021 = vset.pattern.permute.xlu0 2
      %5022 = vperm.xlu0 %5021, %v4553
      %v5023 = vpop.permute.xlu0 %5022
      %5025 = vset.pattern.permute.xlu0 2
      %5026 = vperm.xlu0 %5025, %v4554
      %v5027 = vpop.permute.xlu0 %5026
      %5029 = vset.pattern.permute.xlu0 2
      %5030 = vperm.xlu0 %5029, %v4555
      %v5031 = vpop.permute.xlu0 %5030
      %5033 = vset.pattern.permute.xlu0 2
      %5034 = vperm.xlu0 %5033, %v4556
      %v5035 = vpop.permute.xlu0 %5034
      %5037 = vset.pattern.permute.xlu0 2
      %5038 = vperm.xlu0 %5037, %v4557
      %v5039 = vpop.permute.xlu0 %5038
      %5041 = vset.pattern.permute.xlu0 2
      %5042 = vperm.xlu0 %5041, %v4558
      %v5043 = vpop.permute.xlu0 %5042
      %5045 = vset.pattern.permute.xlu0 2
      %5046 = vperm.xlu0 %5045, %v4559
      %v5047 = vpop.permute.xlu0 %5046
      %5049 = vset.pattern.permute.xlu0 2
      %5050 = vperm.xlu0 %5049, %v4560
      %v5051 = vpop.permute.xlu0 %5050
      %5053 = vset.pattern.permute.xlu0 2
      %5054 = vperm.xlu0 %5053, %v4561
      %v5055 = vpop.permute.xlu0 %5054
      %5057 = vset.pattern.permute.xlu0 2
      %5058 = vperm.xlu0 %5057, %v4562
      %v5059 = vpop.permute.xlu0 %5058
      %5061 = vset.pattern.permute.xlu0 2
      %5062 = vperm.xlu0 %5061, %v4563
      %v5063 = vpop.permute.xlu0 %5062
      %5065 = vset.pattern.permute.xlu0 2
      %5066 = vperm.xlu0 %5065, %v4564
      %v5067 = vpop.permute.xlu0 %5066
      %v5069 = vmul.f32 %v5007, %v4485
      %v5070 = vmul.f32 %v5007, %v4486
      %v5071 = vmul.f32 %v5007, %v4487
      %v5072 = vmul.f32 %v5007, %v4488
      %v5073 = vmul.f32 %v5011, %v4489
      %v5074 = vmul.f32 %v5011, %v4490
      %v5075 = vmul.f32 %v5011, %v4491
      %v5076 = vmul.f32 %v5011, %v4492
      %v5077 = vmul.f32 %v5015, %v4493
      %v5078 = vmul.f32 %v5015, %v4494
      %v5079 = vmul.f32 %v5015, %v4495
      %v5080 = vmul.f32 %v5015, %v4496
      %v5081 = vmul.f32 %v5019, %v4497
      %v5082 = vmul.f32 %v5019, %v4498
      %v5083 = vmul.f32 %v5019, %v4499
      %v5084 = vmul.f32 %v5019, %v4500
      %v5085 = vmul.f32 %v5023, %v4501
      %v5086 = vmul.f32 %v5023, %v4502
      %v5087 = vmul.f32 %v5023, %v4503
      %v5088 = vmul.f32 %v5023, %v4504
      %v5089 = vmul.f32 %v5027, %v4505
      %v5090 = vmul.f32 %v5027, %v4506
      %v5091 = vmul.f32 %v5027, %v4507
      %v5092 = vmul.f32 %v5027, %v4508
      %v5093 = vmul.f32 %v5031, %v4509
      %v5094 = vmul.f32 %v5031, %v4510
      %v5095 = vmul.f32 %v5031, %v4511
      %v5096 = vmul.f32 %v5031, %v4512
      %v5097 = vmul.f32 %v5035, %v4513
      %v5098 = vmul.f32 %v5035, %v4514
      %v5099 = vmul.f32 %v5035, %v4515
      %v5100 = vmul.f32 %v5035, %v4516
      %v5101 = vmul.f32 %v5039, %v4517
      %v5102 = vmul.f32 %v5039, %v4518
      %v5103 = vmul.f32 %v5039, %v4519
      %v5104 = vmul.f32 %v5039, %v4520
      %v5105 = vmul.f32 %v5043, %v4521
      %v5106 = vmul.f32 %v5043, %v4522
      %v5107 = vmul.f32 %v5043, %v4523
      %v5108 = vmul.f32 %v5043, %v4524
      %v5109 = vmul.f32 %v5047, %v4525
      %v5110 = vmul.f32 %v5047, %v4526
      %v5111 = vmul.f32 %v5047, %v4527
      %v5112 = vmul.f32 %v5047, %v4528
      %v5113 = vmul.f32 %v5051, %v4529
      %v5114 = vmul.f32 %v5051, %v4530
      %v5115 = vmul.f32 %v5051, %v4531
      %v5116 = vmul.f32 %v5051, %v4532
      %v5117 = vmul.f32 %v5055, %v4533
      %v5118 = vmul.f32 %v5055, %v4534
      %v5119 = vmul.f32 %v5055, %v4535
      %v5120 = vmul.f32 %v5055, %v4536
      %v5121 = vmul.f32 %v5059, %v4537
      %v5122 = vmul.f32 %v5059, %v4538
      %v5123 = vmul.f32 %v5059, %v4539
      %v5124 = vmul.f32 %v5059, %v4540
      %v5125 = vmul.f32 %v5063, %v4541
      %v5126 = vmul.f32 %v5063, %v4542
      %v5127 = vmul.f32 %v5063, %v4543
      %v5128 = vmul.f32 %v5063, %v4544
      %v5129 = vmul.f32 %v5067, %v4545
      %v5130 = vmul.f32 %v5067, %v4546
      %v5131 = vmul.f32 %v5067, %v4547
      %v5132 = vmul.f32 %v5067, %v4548
      %v5133 = vadd.f32 %v5069, %v5073
      %v5134 = vadd.f32 %v5133, %v5077
      %v5135 = vadd.f32 %v5134, %v5081
      %v5136 = vadd.f32 %v5135, %v5085
      %v5137 = vadd.f32 %v5136, %v5089
      %v5138 = vadd.f32 %v5137, %v5093
      %v5139 = vadd.f32 %v5138, %v5097
      %v5140 = vadd.f32 %v5139, %v5101
      %v5141 = vadd.f32 %v5140, %v5105
      %v5142 = vadd.f32 %v5141, %v5109
      %v5143 = vadd.f32 %v5142, %v5113
      %v5144 = vadd.f32 %v5143, %v5117
      %v5145 = vadd.f32 %v5144, %v5121
      %v5146 = vadd.f32 %v5145, %v5125
      %v5147 = vadd.f32 %v5146, %v5129
      %v5148 = vrot.slane %v5147, 4
      %v5149 = vadd.f32 %v5147, %v5148
      %v5150 = vrot.slane %v5149, 2
      %v5151 = vadd.f32 %v5149, %v5150
      %v5152 = vrot.slane %v5151, 1
      %v5153 = vadd.f32 %v5151, %v5152
      %v5154 = vadd.f32 %v5070, %v5074
      %v5155 = vadd.f32 %v5154, %v5078
      %v5156 = vadd.f32 %v5155, %v5082
      %v5157 = vadd.f32 %v5156, %v5086
      %v5158 = vadd.f32 %v5157, %v5090
      %v5159 = vadd.f32 %v5158, %v5094
      %v5160 = vadd.f32 %v5159, %v5098
      %v5161 = vadd.f32 %v5160, %v5102
      %v5162 = vadd.f32 %v5161, %v5106
      %v5163 = vadd.f32 %v5162, %v5110
      %v5164 = vadd.f32 %v5163, %v5114
      %v5165 = vadd.f32 %v5164, %v5118
      %v5166 = vadd.f32 %v5165, %v5122
      %v5167 = vadd.f32 %v5166, %v5126
      %v5168 = vadd.f32 %v5167, %v5130
      %v5169 = vrot.slane %v5168, 4
      %v5170 = vadd.f32 %v5168, %v5169
      %v5171 = vrot.slane %v5170, 2
      %v5172 = vadd.f32 %v5170, %v5171
      %v5173 = vrot.slane %v5172, 1
      %v5174 = vadd.f32 %v5172, %v5173
      %v5175 = vadd.f32 %v5071, %v5075
      %v5176 = vadd.f32 %v5175, %v5079
      %v5177 = vadd.f32 %v5176, %v5083
      %v5178 = vadd.f32 %v5177, %v5087
      %v5179 = vadd.f32 %v5178, %v5091
      %v5180 = vadd.f32 %v5179, %v5095
      %v5181 = vadd.f32 %v5180, %v5099
      %v5182 = vadd.f32 %v5181, %v5103
      %v5183 = vadd.f32 %v5182, %v5107
      %v5184 = vadd.f32 %v5183, %v5111
      %v5185 = vadd.f32 %v5184, %v5115
      %v5186 = vadd.f32 %v5185, %v5119
      %v5187 = vadd.f32 %v5186, %v5123
      %v5188 = vadd.f32 %v5187, %v5127
      %v5189 = vadd.f32 %v5188, %v5131
      %v5190 = vrot.slane %v5189, 4
      %v5191 = vadd.f32 %v5189, %v5190
      %v5192 = vrot.slane %v5191, 2
      %v5193 = vadd.f32 %v5191, %v5192
      %v5194 = vrot.slane %v5193, 1
      %v5195 = vadd.f32 %v5193, %v5194
      %v5196 = vadd.f32 %v5072, %v5076
      %v5197 = vadd.f32 %v5196, %v5080
      %v5198 = vadd.f32 %v5197, %v5084
      %v5199 = vadd.f32 %v5198, %v5088
      %v5200 = vadd.f32 %v5199, %v5092
      %v5201 = vadd.f32 %v5200, %v5096
      %v5202 = vadd.f32 %v5201, %v5100
      %v5203 = vadd.f32 %v5202, %v5104
      %v5204 = vadd.f32 %v5203, %v5108
      %v5205 = vadd.f32 %v5204, %v5112
      %v5206 = vadd.f32 %v5205, %v5116
      %v5207 = vadd.f32 %v5206, %v5120
      %v5208 = vadd.f32 %v5207, %v5124
      %v5209 = vadd.f32 %v5208, %v5128
      %v5210 = vadd.f32 %v5209, %v5132
      %v5211 = vrot.slane %v5210, 4
      %v5212 = vadd.f32 %v5210, %v5211
      %v5213 = vrot.slane %v5212, 2
      %v5214 = vadd.f32 %v5212, %v5213
      %v5215 = vrot.slane %v5214, 1
      %v5216 = vadd.f32 %v5214, %v5215
      %vm5217 = vcmask 1040384
      %v5218 = vsel %vm5217, %v4729, %v4941
      %v5219 = vsel %vm5217, %v4750, %v4962
      %v5220 = vsel %vm5217, %v4771, %v4983
      %v5221 = vsel %vm5217, %v4792, %v5004
      %vm5222 = vcmask 1041408
      %v5223 = vsel %vm5222, %v5218, %v5153
      %v5224 = vsel %vm5222, %v5219, %v5174
      %v5225 = vsel %vm5222, %v5220, %v5195
      %v5226 = vsel %vm5222, %v5221, %v5216
      %v5227 = vld [vmem:[%s6] sm:$0x7]
      %5229 = vset.pattern.permute.xlu0 0
      %5230 = vperm.xlu0 %5229, %v5227
      %v5231 = vpop.permute.xlu0 %5230
      %v5233 = vadd.f32 %v5223, %v5231
      %v5234 = vadd.f32 %v5224, %v5231
      %v5235 = vadd.f32 %v5225, %v5231
      %v5236 = vadd.f32 %v5226, %v5231
      %v5241 = vcombine.low %v5233, %v5234
      %v5242 = vcombine.low %v5235, %v5236
      %5245 = vst [vmem:[%s280] sm:$0x77] %v5241
      %5246 = vst [vmem:[%s280 + $0x8] sm:$0x77] %v5242
      %s5247 = smul.u32 4, %s18
      %p5248 = scmp.lt.s32.totalorder %s5247, 7
      %s5249 = scalar_select %p5248, %s5247, 7
      %s5250 = smul.addr %s5249, 4
      %s5251 = scalar_lea.vmem %s7, %s5250
      // Predicated region
      $region49: #{mlp_forward.1} parent=47 // pred_check
        %p5252 = pneg %p188
      $region50: #{mlp_forward.1} parent=47 // pred_check_branch
        %5254 = sbr.rel (%p5252) target = $region52
      $region51: #{mlp_forward.1} parent=47 // pred_region
        %s5255 = smul.u32 4, %s18
      $region52: #{mlp_forward.1} parent=47 // pred_fallthru
        _
    $region48: #{mlp_forward.1} parent=5 // pred_fallthru
      _
    %p5256 = scmp.le.s32.totalorder 2, %s13
    // Predicated region
    $region53: #{mlp_forward.1} parent=5 // pred_check
      %p5257 = pneg %p5256
    $region54: #{mlp_forward.1} parent=5 // pred_check_branch
      %5259 = sbr.rel (%p5257) target = $region56
    $region55: #{mlp_forward.1} parent=5 // pred_region
      %s5260 = ssub.s32 %s13, 2
      // Predicated region
      $region57: #{mlp_forward.1} parent=55 // pred_check
        %p5261 = pneg %p194
      $region58: #{mlp_forward.1} parent=55 // pred_check_branch
        %5263 = sbr.rel (%p5261) target = $region60
      $region59: #{mlp_forward.1} parent=55 // pred_region
        %s5264 = smul.u32 4, %s19
        %p5265 = scmp.lt.s32.totalorder %s5264, 7
        %s5266 = scalar_select %p5265, %s5264, 7
        %s5267 = smul.addr %s5266, 4
        %s5268 = scalar_lea.vmem %s7, %s5267
      $region60: #{mlp_forward.1} parent=55 // pred_fallthru
        _
    $region56: #{mlp_forward.1} parent=5 // pred_fallthru
      _
  $region6: #{mlp_forward.1} parent=0 // loop_footer
    %s17 = sadd.s32 1, %s13
  $region7: #{mlp_forward.1} parent=0 // loop_footer_branch
    %12 = sbr.rel target = $region3
  $region8: #{mlp_forward.1} parent=0 // loop_exit
    _

</llo_original>
